<compile_context>
chip_gen: v7x
topology: tpu7x:2x2x1
jax: 0.10.0
libtpu: 0.0.40
codegen_flags: <defaults>
</compile_context>

<pallas_src>
import functools
import math

import jax
import jax.numpy as jnp
from jax.experimental import pallas as pl
from jax.experimental.pallas import tpu as pltpu


def _round_up(x, m):
    return (x + m - 1) // m * m


# ----------------------------------------------------------------------------
# Fused kernel: conv1(1x1)+BN1+ReLU -> VMEM scratch -> conv2(3x3)+BN2+ReLU
# Grid = (batch, output-row block).  The scratch holds the (row-padded) y1
# image in "column parity plane" form: P=1 plane for stride 1, P=2 planes
# (padded-even / padded-odd columns) for the downsample path, so all stage-2
# column accesses are contiguous slices.
# ----------------------------------------------------------------------------
def _fused_head_block_kernel(
    x_ref, w1_ref, s1_ref, b1_ref, w2_ref, s2_ref, b2_ref,   # inputs
    o_ref,                                                    # output
    y1_ref,                                                   # VMEM scratch
    *, H, Wp, P, pad, stride, hp, RB, Wout, Wcomp, cout_tile, tap_map):
    j = pl.program_id(1)
    cin = x_ref.shape[-1]
    chid = w1_ref.shape[1]
    cout = w2_ref.shape[2]
    Ws = y1_ref.shape[1]                       # scratch column extent

    # ---- stage 1 (once per image): 1x1 conv + BN1 + ReLU into bf16 scratch --
    @pl.when(j == 0)
    def _():
        # zero only the row padding ring + bottom slack rows of each plane
        for p in range(P):
            base = p * hp
            if pad > 0:
                y1_ref[base:base + pad] = jnp.zeros((pad, Ws, chid),
                                                    y1_ref.dtype)
            if hp > pad + H:
                y1_ref[base + pad + H:base + hp] = jnp.zeros(
                    (hp - pad - H, Ws, chid), y1_ref.dtype)
        # one MXU matmul over all planes/rows/cols of this image.
        # TODO(synk): Wp is padded to a multiple of 8 in the wrapper so this
        # reshape is a free re-tiling, not a relayout copy.
        xm = x_ref[0].reshape(P * H * Wp, cin)
        a1 = jnp.dot(xm, w1_ref[...], preferred_element_type=jnp.float32)
        y1 = jnp.maximum(a1 * s1_ref[...] + b1_ref[...], 0.0)   # f32 BN1 fold
        y1 = y1.reshape(P * H, Wp, chid).astype(y1_ref.dtype)
        for p in range(P):
            y1_ref[p * hp + pad:p * hp + pad + H, 0:Wp, :] = (
                y1[p * H:(p + 1) * H])

    # ---- stage 2: 3x3 conv + BN2 + ReLU for RB output rows -------------------
    # per-kh im2col: one (RB*Wcomp, 3*chid) x (3*chid, cout) matmul per kh.
    r0 = j * RB
    M = RB * Wcomp
    planes_needed = sorted({t[0] for t in tap_map})
    patches = []
    for kh in range(3):
        rows = {}
        for pn in planes_needed:
            base = pn * hp
            if stride == 1:
                rows[pn] = y1_ref[pl.ds(base + r0 + kh, RB), :, :]
            else:
                # strided output rows: contiguous band + leading-dim parity
                # select (layout-free).
                band = y1_ref[pl.ds(base + stride * r0 + kh, stride * RB), :, :]
                rows[pn] = band.reshape(RB, stride, Ws, chid)[:, 0]
        pieces = [rows[pn][:, co0:co0 + Wcomp, :] for pn, co0 in tap_map]
        patch = jnp.concatenate(pieces, axis=-1)          # (RB, Wcomp, 3*chid)
        patches.append(patch.reshape(M, 3 * chid))        # Wcomp is 8-aligned

    for c0 in range(0, cout, cout_tile):                  # static cout tiling
        ct = min(cout_tile, cout - c0)
        acc = jnp.zeros((M, ct), jnp.float32)
        for kh in range(3):
            acc = acc + jnp.dot(patches[kh], w2_ref[kh, :, c0:c0 + ct],
                                preferred_element_type=jnp.float32)
        y2 = jnp.maximum(acc * s2_ref[:, c0:c0 + ct] + b2_ref[:, c0:c0 + ct],
                         0.0)                              # f32 BN2 + ReLU
        y2 = y2.reshape(RB, Wcomp, ct)[:, :Wout, :]
        o_ref[0, :, :, c0:c0 + ct] = y2.astype(o_ref.dtype)


def ssd_head_block_forward_nhwc(x_nhwc, params, *, downsample,
                                compute_dtype=jnp.bfloat16, row_block=None,
                                cout_tile=128, out_dtype=None):
    """Fused _SSDHeadBlock forward in NHWC layout -> (N, Hc, Wout, Cout)."""
    n, H, W, cin = x_nhwc.shape
    chid = params["w1"].shape[1]
    cout = params["w2_kh"].shape[-1]
    stride = 2 if downsample else 1
    pad = 1 if downsample else 0
    Hc = (H + 2 * pad - 3) // stride + 1
    Wout = (W + 2 * pad - 3) // stride + 1
    out_dtype = x_nhwc.dtype if out_dtype is None else out_dtype

    x = x_nhwc.astype(compute_dtype)

    def pad_cols(a, target):
        if a.shape[2] < target:
            a = jnp.concatenate(
                [a, jnp.zeros((n, H, target - a.shape[2], cin), compute_dtype)],
                axis=2)
        return a

    if downsample:
        # Pre-split x into padded-column parity planes (wrapper XLA strided
        # slices) so conv2's width stride is contiguous slicing in-kernel.
        #   plane0[k] = padded col 2k   (left zero pad, then odd original cols)
        #   plane1[k] = padded col 2k+1 (even original cols)
        P = 2
        Wp_data = Wout + 1
        Wp = _round_up(Wp_data, 8)
        zcol = jnp.zeros((n, H, 1, cin), compute_dtype)
        even = pad_cols(jnp.concatenate([zcol, x[:, :, 1::2, :]], axis=2), Wp)
        odd = pad_cols(x[:, :, 0::2, :][:, :, :Wout, :], Wp)
        x_planes = jnp.concatenate([even, odd], axis=1)    # (n, 2H, Wp, cin)
        tap_map = ((0, 0), (1, 0), (0, 1))                 # kw -> (plane, col)
        max_c0 = 1
    else:
        P = 1
        Wp = _round_up(W, 8)
        x_planes = pad_cols(x, Wp)
        tap_map = ((0, 0), (0, 1), (0, 2))
        max_c0 = 2

    Wcomp = _round_up(Wout, 8)                 # 8-aligned columns per matmul
    Ws = max(Wp, max_c0 + Wcomp)               # scratch column extent (slack)

    if row_block is None:                      # target M = RB*Wcomp >= ~256
        RB = max(1, min(Hc, 32, -(-256 // max(1, Wcomp))))
    else:
        RB = max(1, min(row_block, Hc))
    NB = pl.cdiv(Hc, RB)
    hp = max(stride * NB * RB + 2, H + 2 * pad)            # rows per plane
    ctile = max(1, min(cout_tile, cout))

    w1 = params["w1"].astype(compute_dtype)
    w2 = params["w2_kh"].astype(compute_dtype)
    s1 = params["scale1"].astype(jnp.float32)
    b1 = params["bias1"].astype(jnp.float32)
    s2 = params["scale2"].astype(jnp.float32)
    b2 = params["bias2"].astype(jnp.float32)

    kernel = functools.partial(
        _fused_head_block_kernel, H=H, Wp=Wp, P=P, pad=pad, stride=stride,
        hp=hp, RB=RB, Wout=Wout, Wcomp=Wcomp, cout_tile=ctile, tap_map=tap_map)

    flops = 2 * n * (P * H * Wp * cin * chid + Hc * Wcomp * 9 * chid * cout)
    bytes_accessed = (x_planes.size * x_planes.dtype.itemsize
                      + w1.size * w1.dtype.itemsize
                      + w2.size * w2.dtype.itemsize
                      + n * Hc * Wout * cout * jnp.dtype(out_dtype).itemsize)

    out = pl.pallas_call(
        kernel,
        out_shape=jax.ShapeDtypeStruct((n, Hc, Wout, cout), out_dtype),
        grid_spec=pltpu.PrefetchScalarGridSpec(
            num_scalar_prefetch=0,
            grid=(n, NB),
            in_specs=[
                pl.BlockSpec((1, P * H, Wp, cin), lambda b, j: (b, 0, 0, 0)),
                pl.BlockSpec((cin, chid), lambda b, j: (0, 0)),
                pl.BlockSpec((1, chid), lambda b, j: (0, 0)),
                pl.BlockSpec((1, chid), lambda b, j: (0, 0)),
                pl.BlockSpec((3, 3 * chid, cout), lambda b, j: (0, 0, 0)),
                pl.BlockSpec((1, cout), lambda b, j: (0, 0)),
                pl.BlockSpec((1, cout), lambda b, j: (0, 0)),
            ],
            out_specs=pl.BlockSpec((1, RB, Wout, cout),
                                   lambda b, j: (b, j, 0, 0)),
            scratch_shapes=[pltpu.VMEM((P * hp, Ws, chid), compute_dtype)],
        ),
        compiler_params=pltpu.CompilerParams(
            dimension_semantics=("parallel", "arbitrary")),
        cost_estimate=pl.CostEstimate(flops=int(flops), transcendentals=0,
                                      bytes_accessed=int(bytes_accessed)),
    )(x_planes, w1, s1, b1, w2, s2, b2)
    return out


def ssd_head_block_forward(x_nchw, params, *, downsample,
                           compute_dtype=jnp.bfloat16):
    """PyTorch-layout wrapper: x (N, Cin, H, W) -> (N, Cout, Ho, Wo)."""
    x = jnp.transpose(x_nchw, (0, 2, 3, 1))       # NCHW -> NHWC
    y = ssd_head_block_forward_nhwc(x, params, downsample=downsample,
                                    compute_dtype=compute_dtype)
    return jnp.transpose(y, (0, 3, 1, 2))         # NHWC -> NCHW


# ----------------------------------------------------------------------------
# Parameter init matching _SSDHeadBlock.initialize() + eval-mode BN fold
# ----------------------------------------------------------------------------
def init_params(key, cin, chid, cout, eps=1e-5):
    k1, k2 = jax.random.split(key)
    # kaiming_normal_(mode='fan_out', nonlinearity='relu'): std = sqrt(2/fan_out)
    w1_oihw = jax.random.normal(k1, (chid, cin, 1, 1), jnp.float32) * math.sqrt(
        2.0 / (chid * 1 * 1))
    w2_oihw = jax.random.normal(k2, (cout, chid, 3, 3), jnp.float32) * math.sqrt(
        2.0 / (cout * 3 * 3))

    def bn_fold(c):
        gamma = jnp.ones((c,), jnp.float32)
        beta = jnp.zeros((c,), jnp.float32)
        mean = jnp.zeros((c,), jnp.float32)
        var = jnp.ones((c,), jnp.float32)
        s = gamma / jnp.sqrt(var + eps)
        b = beta - mean * s
        return s.reshape(1, c), b.reshape(1, c)

    scale1, bias1 = bn_fold(chid)
    scale2, bias2 = bn_fold(cout)
    w1 = jnp.transpose(w1_oihw[:, :, 0, 0], (1, 0))                    # (Cin, Chid)
    # per-kh im2col packing: w2_kh[kh, kw*chid + c, co] = w2_oihw[co, c, kh, kw]
    w2_kh = jnp.transpose(w2_oihw, (2, 3, 1, 0)).reshape(3, 3 * chid, cout)
    return dict(w1=w1, w2_kh=w2_kh, scale1=scale1, bias1=bias1,
                scale2=scale2, bias2=bias2, w1_oihw=w1_oihw, w2_oihw=w2_oihw)


# Pure-JAX reference (same eval-mode BN fold, f32 HIGHEST precision).
def reference_forward(x_nchw, params, *, downsample):
    x = jnp.transpose(x_nchw, (0, 2, 3, 1))
    dn = ("NHWC", "HWIO", "NHWC")
    w1 = jnp.transpose(params["w1_oihw"], (2, 3, 1, 0))
    w2 = jnp.transpose(params["w2_oihw"], (2, 3, 1, 0))
    y = jax.lax.conv_general_dilated(x, w1, (1, 1), "VALID",
                                     dimension_numbers=dn,
                                     precision=jax.lax.Precision.HIGHEST)
    y = jnp.maximum(y * params["scale1"][0] + params["bias1"][0], 0.0)
    s = 2 if downsample else 1
    p = 1 if downsample else 0
    y = jax.lax.conv_general_dilated(y, w2, (s, s), [(p, p), (p, p)],
                                     dimension_numbers=dn,
                                     precision=jax.lax.Precision.HIGHEST)
    y = jnp.maximum(y * params["scale2"][0] + params["bias2"][0], 0.0)
    return jnp.transpose(y, (0, 3, 1, 2))


if __name__ == "__main__":
    key = jax.random.PRNGKey(0)
    kp, kx = jax.random.split(key)
    N, CIN, CHID, COUT, H, W = 2, 16, 32, 64, 16, 16

    params = init_params(kp, CIN, CHID, COUT)
    x = jax.random.normal(kx, (N, CIN, H, W), jnp.float32)

    ok = True
    for compute_dtype, tol in ((jnp.float32, 2e-2), (jnp.bfloat16, 5e-2)):
        for downsample in (False, True):
            out = jax.block_until_ready(
                ssd_head_block_forward(x, params, downsample=downsample,
                                       compute_dtype=compute_dtype))
            ref = jax.block_until_ready(
                reference_forward(x, params, downsample=downsample))
            ok = ok and (out.shape == ref.shape)
            ok = ok and bool(jnp.allclose(out.astype(jnp.float32), ref,
                                          atol=tol, rtol=tol))

    if ok:
        print("KERNEL_OK")
    else:
        print("KERNEL_MISMATCH")
</pallas_src>

<mosaic_0001>
module attributes {stable_mosaic.version = 11 : i64} {
  func.func @_fused_head_block_kernel(%arg0: i32, %arg1: i32, %arg2: memref<1x16x16x16xf32, #tpu.memory_space<vmem>>, %arg3: memref<16x32xf32, #tpu.memory_space<vmem>>, %arg4: memref<1x32xf32, #tpu.memory_space<vmem>>, %arg5: memref<1x32xf32, #tpu.memory_space<vmem>>, %arg6: memref<3x96x64xf32, #tpu.memory_space<vmem>>, %arg7: memref<1x64xf32, #tpu.memory_space<vmem>>, %arg8: memref<1x64xf32, #tpu.memory_space<vmem>>, %arg9: memref<1x14x14x64xf32, #tpu.memory_space<vmem>>, %arg10: memref<16x18x32xf32, #tpu.memory_space<vmem>>) attributes {dimension_semantics = [#tpu.dimension_semantics<parallel>, #tpu.dimension_semantics<arbitrary>], iteration_bounds = array<i64: 2, 1>, scalar_prefetch = 0 : i64, scratch_operands = 1 : i64, tpu.core_type = #tpu.core_type<tc>, window_params = [{transform_indices = @transform_0, window_bounds = array<i64: 1, 16, 16, 16>}, {pipeline_mode = #tpu.pipeline_mode<synchronous>, transform_indices = @transform_1, window_bounds = array<i64: 16, 32>}, {pipeline_mode = #tpu.pipeline_mode<synchronous>, transform_indices = @transform_2, window_bounds = array<i64: 1, 32>}, {pipeline_mode = #tpu.pipeline_mode<synchronous>, transform_indices = @transform_3, window_bounds = array<i64: 1, 32>}, {pipeline_mode = #tpu.pipeline_mode<synchronous>, transform_indices = @transform_4, window_bounds = array<i64: 3, 96, 64>}, {pipeline_mode = #tpu.pipeline_mode<synchronous>, transform_indices = @transform_5, window_bounds = array<i64: 1, 64>}, {pipeline_mode = #tpu.pipeline_mode<synchronous>, transform_indices = @transform_6, window_bounds = array<i64: 1, 64>}, {transform_indices = @transform_7, window_bounds = array<i64: 1, 14, 14, 64>}]} {
    %c0_i32 = arith.constant 0 : i32
    %0 = arith.cmpi eq, %arg1, %c0_i32 : i32
    %1 = arith.extui %0 : i1 to i32
    %c0_i32_0 = arith.constant 0 : i32
    %2 = arith.cmpi ne, %1, %c0_i32_0 : i32
    scf.if %2 {
      %c0_29 = arith.constant 0 : index
      %c0_30 = arith.constant 0 : index
      %c0_31 = arith.constant 0 : index
      %c0_32 = arith.constant 0 : index
      %57 = vector.load %arg2[%c0_29, %c0_30, %c0_31, %c0_32] : memref<1x16x16x16xf32, #tpu.memory_space<vmem>>, vector<1x16x16x16xf32>
      %58 = vector.shape_cast %57 : vector<1x16x16x16xf32> to vector<16x16x16xf32>
      %59 = vector.shape_cast %58 : vector<16x16x16xf32> to vector<256x16xf32>
      %c0_33 = arith.constant 0 : index
      %c0_34 = arith.constant 0 : index
      %60 = vector.load %arg3[%c0_33, %c0_34] : memref<16x32xf32, #tpu.memory_space<vmem>>, vector<16x32xf32>
      %cst_35 = arith.constant dense<0.000000e+00> : vector<256x32xf32>
      %61 = tpu.matmul %59, %60, %cst_35 {dimension_numbers = #tpu.dot_dimension_numbers<[1], [0], [0], [1], [0, 0, 1, 1], [], []>} : vector<256x16xf32>, vector<16x32xf32>, vector<256x32xf32> -> vector<256x32xf32>
      %c0_36 = arith.constant 0 : index
      %c0_37 = arith.constant 0 : index
      %62 = vector.load %arg4[%c0_36, %c0_37] : memref<1x32xf32, #tpu.memory_space<vmem>>, vector<1x32xf32>
      %63 = vector.broadcast %62 : vector<1x32xf32> to vector<256x32xf32>
      %64 = arith.mulf %61, %63 : vector<256x32xf32>
      %c0_38 = arith.constant 0 : index
      %c0_39 = arith.constant 0 : index
      %65 = vector.load %arg5[%c0_38, %c0_39] : memref<1x32xf32, #tpu.memory_space<vmem>>, vector<1x32xf32>
      %66 = vector.broadcast %65 : vector<1x32xf32> to vector<256x32xf32>
      %67 = arith.addf %64, %66 : vector<256x32xf32>
      %cst_40 = arith.constant 0.000000e+00 : f32
      %68 = vector.broadcast %cst_40 : f32 to vector<256x32xf32>
      %69 = arith.maximumf %67, %68 : vector<256x32xf32>
      %70 = vector.shape_cast %69 : vector<256x32xf32> to vector<16x16x32xf32>
      %c0_41 = arith.constant 0 : index
      %c0_42 = arith.constant 0 : index
      %c0_43 = arith.constant 0 : index
      %71 = vector.load %arg10[%c0_41, %c0_42, %c0_43] : memref<16x18x32xf32, #tpu.memory_space<vmem>>, vector<16x16x32xf32>
      tpu.vector_store %arg10[%c0_41, %c0_42, %c0_43], %70 {strides = array<i32>} : memref<16x18x32xf32, #tpu.memory_space<vmem>>, vector<16x16x32xf32>,
    } else {
    }
    %c14_i32 = arith.constant 14 : i32
    %3 = arith.muli %arg1, %c14_i32 : i32
    %c0_i32_1 = arith.constant 0 : i32
    %4 = arith.addi %c0_i32_1, %3 : i32
    %c0_i32_2 = arith.constant 0 : i32
    %5 = arith.addi %4, %c0_i32_2 : i32
    %6 = arith.index_cast %5 : i32 to index
    %c0 = arith.constant 0 : index
    %c0_3 = arith.constant 0 : index
    %7 = vector.load %arg10[%6, %c0, %c0_3] : memref<16x18x32xf32, #tpu.memory_space<vmem>>, vector<14x18x32xf32>
    %8 = vector.extract_strided_slice %7 {offsets = [0, 0, 0], sizes = [14, 16, 32], strides = [1, 1, 1]} : vector<14x18x32xf32> to vector<14x16x32xf32>
    %9 = vector.extract_strided_slice %7 {offsets = [0, 1, 0], sizes = [14, 16, 32], strides = [1, 1, 1]} : vector<14x18x32xf32> to vector<14x16x32xf32>
    %10 = vector.extract_strided_slice %7 {offsets = [0, 2, 0], sizes = [14, 16, 32], strides = [1, 1, 1]} : vector<14x18x32xf32> to vector<14x16x32xf32>
    %11 = tpu.concatenate %8, %9, %10 in 2 : vector<14x16x32xf32>, vector<14x16x32xf32>, vector<14x16x32xf32> -> vector<14x16x96xf32>
    %12 = vector.shape_cast %11 : vector<14x16x96xf32> to vector<224x96xf32>
    %c0_i32_4 = arith.constant 0 : i32
    %13 = arith.addi %c0_i32_4, %3 : i32
    %c1_i32 = arith.constant 1 : i32
    %14 = arith.addi %13, %c1_i32 : i32
    %15 = arith.index_cast %14 : i32 to index
    %c0_5 = arith.constant 0 : index
    %c0_6 = arith.constant 0 : index
    %16 = vector.load %arg10[%15, %c0_5, %c0_6] : memref<16x18x32xf32, #tpu.memory_space<vmem>>, vector<14x18x32xf32>
    %17 = vector.extract_strided_slice %16 {offsets = [0, 0, 0], sizes = [14, 16, 32], strides = [1, 1, 1]} : vector<14x18x32xf32> to vector<14x16x32xf32>
    %18 = vector.extract_strided_slice %16 {offsets = [0, 1, 0], sizes = [14, 16, 32], strides = [1, 1, 1]} : vector<14x18x32xf32> to vector<14x16x32xf32>
    %19 = vector.extract_strided_slice %16 {offsets = [0, 2, 0], sizes = [14, 16, 32], strides = [1, 1, 1]} : vector<14x18x32xf32> to vector<14x16x32xf32>
    %20 = tpu.concatenate %17, %18, %19 in 2 : vector<14x16x32xf32>, vector<14x16x32xf32>, vector<14x16x32xf32> -> vector<14x16x96xf32>
    %21 = vector.shape_cast %20 : vector<14x16x96xf32> to vector<224x96xf32>
    %c0_i32_7 = arith.constant 0 : i32
    %22 = arith.addi %c0_i32_7, %3 : i32
    %c2_i32 = arith.constant 2 : i32
    %23 = arith.addi %22, %c2_i32 : i32
    %24 = arith.index_cast %23 : i32 to index
    %c0_8 = arith.constant 0 : index
    %c0_9 = arith.constant 0 : index
    %25 = vector.load %arg10[%24, %c0_8, %c0_9] : memref<16x18x32xf32, #tpu.memory_space<vmem>>, vector<14x18x32xf32>
    %26 = vector.extract_strided_slice %25 {offsets = [0, 0, 0], sizes = [14, 16, 32], strides = [1, 1, 1]} : vector<14x18x32xf32> to vector<14x16x32xf32>
    %27 = vector.extract_strided_slice %25 {offsets = [0, 1, 0], sizes = [14, 16, 32], strides = [1, 1, 1]} : vector<14x18x32xf32> to vector<14x16x32xf32>
    %28 = vector.extract_strided_slice %25 {offsets = [0, 2, 0], sizes = [14, 16, 32], strides = [1, 1, 1]} : vector<14x18x32xf32> to vector<14x16x32xf32>
    %29 = tpu.concatenate %26, %27, %28 in 2 : vector<14x16x32xf32>, vector<14x16x32xf32>, vector<14x16x32xf32> -> vector<14x16x96xf32>
    %30 = vector.shape_cast %29 : vector<14x16x96xf32> to vector<224x96xf32>
    %cst = arith.constant 0.000000e+00 : f32
    %31 = vector.broadcast %cst : f32 to vector<224x64xf32>
    %c0_10 = arith.constant 0 : index
    %c0_11 = arith.constant 0 : index
    %c0_12 = arith.constant 0 : index
    %32 = vector.load %arg6[%c0_10, %c0_11, %c0_12] : memref<3x96x64xf32, #tpu.memory_space<vmem>>, vector<1x96x64xf32>
    %33 = vector.shape_cast %32 : vector<1x96x64xf32> to vector<96x64xf32>
    %cst_13 = arith.constant dense<0.000000e+00> : vector<224x64xf32>
    %34 = tpu.matmul %12, %33, %cst_13 {dimension_numbers = #tpu.dot_dimension_numbers<[1], [0], [0], [1], [0, 0, 1, 1], [], []>} : vector<224x96xf32>, vector<96x64xf32>, vector<224x64xf32> -> vector<224x64xf32>
    %35 = arith.addf %31, %34 : vector<224x64xf32>
    %c1 = arith.constant 1 : index
    %c0_14 = arith.constant 0 : index
    %c0_15 = arith.constant 0 : index
    %36 = vector.load %arg6[%c1, %c0_14, %c0_15] : memref<3x96x64xf32, #tpu.memory_space<vmem>>, vector<1x96x64xf32>
    %37 = vector.shape_cast %36 : vector<1x96x64xf32> to vector<96x64xf32>
    %cst_16 = arith.constant dense<0.000000e+00> : vector<224x64xf32>
    %38 = tpu.matmul %21, %37, %cst_16 {dimension_numbers = #tpu.dot_dimension_numbers<[1], [0], [0], [1], [0, 0, 1, 1], [], []>} : vector<224x96xf32>, vector<96x64xf32>, vector<224x64xf32> -> vector<224x64xf32>
    %39 = arith.addf %35, %38 : vector<224x64xf32>
    %c2 = arith.constant 2 : index
    %c0_17 = arith.constant 0 : index
    %c0_18 = arith.constant 0 : index
    %40 = vector.load %arg6[%c2, %c0_17, %c0_18] : memref<3x96x64xf32, #tpu.memory_space<vmem>>, vector<1x96x64xf32>
    %41 = vector.shape_cast %40 : vector<1x96x64xf32> to vector<96x64xf32>
    %cst_19 = arith.constant dense<0.000000e+00> : vector<224x64xf32>
    %42 = tpu.matmul %30, %41, %cst_19 {dimension_numbers = #tpu.dot_dimension_numbers<[1], [0], [0], [1], [0, 0, 1, 1], [], []>} : vector<224x96xf32>, vector<96x64xf32>, vector<224x64xf32> -> vector<224x64xf32>
    %43 = arith.addf %39, %42 : vector<224x64xf32>
    %c0_20 = arith.constant 0 : index
    %c0_21 = arith.constant 0 : index
    %44 = vector.load %arg7[%c0_20, %c0_21] : memref<1x64xf32, #tpu.memory_space<vmem>>, vector<1x64xf32>
    %45 = vector.broadcast %44 : vector<1x64xf32> to vector<224x64xf32>
    %46 = arith.mulf %43, %45 : vector<224x64xf32>
    %c0_22 = arith.constant 0 : index
    %c0_23 = arith.constant 0 : index
    %47 = vector.load %arg8[%c0_22, %c0_23] : memref<1x64xf32, #tpu.memory_space<vmem>>, vector<1x64xf32>
    %48 = vector.broadcast %47 : vector<1x64xf32> to vector<224x64xf32>
    %49 = arith.addf %46, %48 : vector<224x64xf32>
    %cst_24 = arith.constant 0.000000e+00 : f32
    %50 = vector.broadcast %cst_24 : f32 to vector<224x64xf32>
    %51 = arith.maximumf %49, %50 : vector<224x64xf32>
    %52 = vector.shape_cast %51 : vector<224x64xf32> to vector<14x16x64xf32>
    %53 = vector.extract_strided_slice %52 {offsets = [0, 0, 0], sizes = [14, 14, 64], strides = [1, 1, 1]} : vector<14x16x64xf32> to vector<14x14x64xf32>
    %c0_25 = arith.constant 0 : index
    %c0_26 = arith.constant 0 : index
    %c0_27 = arith.constant 0 : index
    %c0_28 = arith.constant 0 : index
    %54 = vector.load %arg9[%c0_25, %c0_26, %c0_27, %c0_28] : memref<1x14x14x64xf32, #tpu.memory_space<vmem>>, vector<1x14x14x64xf32>
    %55 = vector.shape_cast %54 : vector<1x14x14x64xf32> to vector<14x14x64xf32>
    %56 = vector.shape_cast %53 : vector<14x14x64xf32> to vector<1x14x14x64xf32>
    tpu.vector_store %arg9[%c0_25, %c0_26, %c0_27, %c0_28], %56 {strides = array<i32>} : memref<1x14x14x64xf32, #tpu.memory_space<vmem>>, vector<1x14x14x64xf32>,
    return
  }
  func.func @transform_0(%arg0: i32, %arg1: i32) -> (i32, i32, i32, i32) {
    %c0_i32 = arith.constant 0 : i32
    %c0_i32_0 = arith.constant 0 : i32
    %c0_i32_1 = arith.constant 0 : i32
    %c0_i32_2 = arith.constant 0 : i32
    return %arg0, %c0_i32, %c0_i32_0, %c0_i32_1 : i32, i32, i32, i32
  }
  func.func @transform_1(%arg0: i32, %arg1: i32) -> (i32, i32) {
    %c0_i32 = arith.constant 0 : i32
    %c0_i32_0 = arith.constant 0 : i32
    %c0_i32_1 = arith.constant 0 : i32
    return %c0_i32, %c0_i32_0 : i32, i32
  }
  func.func @transform_2(%arg0: i32, %arg1: i32) -> (i32, i32) {
    %c0_i32 = arith.constant 0 : i32
    %c0_i32_0 = arith.constant 0 : i32
    %c0_i32_1 = arith.constant 0 : i32
    return %c0_i32, %c0_i32_0 : i32, i32
  }
  func.func @transform_3(%arg0: i32, %arg1: i32) -> (i32, i32) {
    %c0_i32 = arith.constant 0 : i32
    %c0_i32_0 = arith.constant 0 : i32
    %c0_i32_1 = arith.constant 0 : i32
    return %c0_i32, %c0_i32_0 : i32, i32
  }
  func.func @transform_4(%arg0: i32, %arg1: i32) -> (i32, i32, i32) {
    %c0_i32 = arith.constant 0 : i32
    %c0_i32_0 = arith.constant 0 : i32
    %c0_i32_1 = arith.constant 0 : i32
    %c0_i32_2 = arith.constant 0 : i32
    return %c0_i32, %c0_i32_0, %c0_i32_1 : i32, i32, i32
  }
  func.func @transform_5(%arg0: i32, %arg1: i32) -> (i32, i32) {
    %c0_i32 = arith.constant 0 : i32
    %c0_i32_0 = arith.constant 0 : i32
    %c0_i32_1 = arith.constant 0 : i32
    return %c0_i32, %c0_i32_0 : i32, i32
  }
  func.func @transform_6(%arg0: i32, %arg1: i32) -> (i32, i32) {
    %c0_i32 = arith.constant 0 : i32
    %c0_i32_0 = arith.constant 0 : i32
    %c0_i32_1 = arith.constant 0 : i32
    return %c0_i32, %c0_i32_0 : i32, i32
  }
  func.func @transform_7(%arg0: i32, %arg1: i32) -> (i32, i32, i32, i32) {
    %c0_i32 = arith.constant 0 : i32
    %c0_i32_0 = arith.constant 0 : i32
    %c0_i32_1 = arith.constant 0 : i32
    return %arg0, %arg1, %c0_i32, %c0_i32_0 : i32, i32, i32, i32
  }
}

</mosaic_0001>

<llo_original>
// kernel: tpu_custom_call.1
$region0: #{tpu_custom_call.1}
  #allocation0 [shape = 'u32[]', space=smem, size = 0x4, offset = 0x4, fixed_abs, tag = 'smem constant byte address 0x4 - core index']
  #allocation1 [shape = 'u32[144,128]{1,0:T(1,128)}', space=vmem, size = 0x12000, scoped, tag = 'internal scratch']
  #allocation2 [shape = 'f32[16,18,32]{2,1,0:T(8,128)}', space=vmem, size = 0x30000, scoped, tag = 'scratch operand']
  %s0 = inlined_call_operand.hbm [shape: f32[2,16,16,16], index: 0, kind: input, shape index: {}]
  %s1 = inlined_call_operand.vmem [shape: f32[16,32], index: 1, kind: input, shape index: {}]
  %s2 = inlined_call_operand.vmem [shape: f32[1,32], index: 2, kind: input, shape index: {}]
  %s3 = inlined_call_operand.vmem [shape: f32[1,32], index: 3, kind: input, shape index: {}]
  %s4 = inlined_call_operand.vmem [shape: f32[3,96,64], index: 4, kind: input, shape index: {}]
  %s5 = inlined_call_operand.vmem [shape: f32[1,64], index: 5, kind: input, shape index: {}]
  %s6 = inlined_call_operand.vmem [shape: f32[1,64], index: 6, kind: input, shape index: {}]
  %s7 = inlined_call_operand.vmem [shape: f32[2,14,14,64], index: 7, kind: output, shape index: {}]
  %s8 = sld [smem:[#allocation0]]
  $region69: #{tpu_custom_call.1} parent=0
    _
  %s10 = ssub.s32 1, %s8
  %s11 = scalar_select 0, %s10, %s8
  $region1: #{tpu_custom_call.1} parent=0
    #allocation3 [shape = 'u8[262144]{0}', space=vmem, size = 0x40000, scoped, tag = 'input window, operand 0']
    #allocation4 [shape = 's32[2]{0}', space=sflag, size = 0x8, scoped, tag = 'scoped memory for tpu_custom_call.1']
    %12 = vsyncpa [#allocation4], 0
    %s13 = scalar_lea.sflag [#allocation4], 1
    %14 = vsyncpa %s13, 0
    loop: start=0, step=1, limit=4
    $region2: #{tpu_custom_call.1} parent=1 // loop_pre_header
      _
    $region3: #{tpu_custom_call.1} parent=1 // loop_header
      %s16 = sphi 0, %s20
      %p17 = scmp.ge.s32.totalorder %s16, 4
      %s23 = sphi 0, %s35
      %s24 = sphi 0, %s31
      %s25 = sphi 0, %s23
      %s26 = sphi 0, %s24
      %s27 = sphi 0, %s25
      %s28 = sphi 0, %s26
      %s38 = sphi 0, %s40
      %s41 = sphi 0, %s38
      %s42 = sphi 0, %s41
      %s58 = sphi 0, %s42
      %s62 = sphi 0, %s62
      %s64 = sphi 0, %s62
      %s65 = sphi 0, %s64
      %s79 = sphi 0, %s65
      %s83 = sphi 0, %s83
      %s85 = sphi 0, %s83
      %s86 = sphi 0, %s85
      %s100 = sphi 0, %s86
      %s104 = sphi 0, %s104
      %s106 = sphi 0, %s104
      %s107 = sphi 0, %s106
      %s121 = sphi 0, %s107
      %s125 = sphi 0, %s125
      %s127 = sphi 0, %s125
      %s128 = sphi 0, %s127
      %s142 = sphi 0, %s128
      %s146 = sphi 0, %s146
      %s148 = sphi 0, %s146
      %s149 = sphi 0, %s148
      %s163 = sphi 0, %s149
      %s167 = sphi 0, %s167
      %s169 = sphi 0, %s167
      %s170 = sphi 0, %s169
      %s184 = sphi 0, %s170
      %s192 = sphi 0, %s194
      %s195 = sphi 0, %s192
      %s196 = sphi 0, %s195
      %s212 = sphi 0, %s196
    $region4: #{tpu_custom_call.1} parent=1 // loop_header_branch
      %19 = sbr.rel (%p17) target = $region8
    $region5: #{tpu_custom_call.1} parent=1 // loop_body
      %s21 = ssub.s32 %s16, 1
      %s22 = ssub.s32 %s16, 2
      %s29 = sadd.s32 1, %s24
      %p30 = scmp.ge.s32.totalorder %s29, 1
      %s31 = scalar_select %p30, 0, %s29
      %s32 = sadd.s32 1, %s23
      %s33 = scalar_select %p30, %s32, %s23
      %p34 = scmp.ge.s32.totalorder %s33, 2
      %s35 = scalar_select %p34, 0, %s33
      %s36 = ssub.s32 %s23, %s35
      %p37 = scmp.eq.s32.totalorder %s36, 0
      %s39 = sadd.s32 %s38, 1
      %s40 = scalar_select %p37, %s38, %s39
      %p43 = pneg %p37
      %p44 = scmp.eq.s32.totalorder %s16, 1
      %p45 = por %p43, %p44
      %p46 = scmp.ne.s32.totalorder %s38, %s41
      %p47 = scmp.eq.s32.totalorder %s16, 0
      %p48 = por %p46, %p47
      %p49 = scmp.ne.s32.totalorder %s38, %s41
      %p50 = scmp.eq.s32.totalorder %s21, 1
      %p51 = por %p49, %p50
      %p52 = scmp.ne.s32.totalorder %s41, %s42
      %p53 = scmp.eq.s32.totalorder %s21, 0
      %p54 = por %p52, %p53
      %p55 = scmp.ne.s32.totalorder %s41, %s42
      %p56 = scmp.eq.s32.totalorder %s22, 1
      %p57 = por %p55, %p56
      %p59 = scmp.ne.s32.totalorder %s42, %s58
      %p60 = scmp.eq.s32.totalorder %s22, 0
      %p61 = por %p59, %p60
      %s63 = sadd.s32 %s62, 1
      %p66 = scmp.eq.s32.totalorder %s16, 1
      %p67 = scmp.ne.s32.totalorder %s62, %s64
      %p68 = scmp.eq.s32.totalorder %s16, 0
      %p69 = por %p67, %p68
      %p70 = scmp.ne.s32.totalorder %s62, %s64
      %p71 = scmp.eq.s32.totalorder %s21, 1
      %p72 = por %p70, %p71
      %p73 = scmp.ne.s32.totalorder %s64, %s65
      %p74 = scmp.eq.s32.totalorder %s21, 0
      %p75 = por %p73, %p74
      %p76 = scmp.ne.s32.totalorder %s64, %s65
      %p77 = scmp.eq.s32.totalorder %s22, 1
      %p78 = por %p76, %p77
      %p80 = scmp.ne.s32.totalorder %s65, %s79
      %p81 = scmp.eq.s32.totalorder %s22, 0
      %p82 = por %p80, %p81
      %s84 = sadd.s32 %s83, 1
      %p87 = scmp.eq.s32.totalorder %s16, 1
      %p88 = scmp.ne.s32.totalorder %s83, %s85
      %p89 = scmp.eq.s32.totalorder %s16, 0
      %p90 = por %p88, %p89
      %p91 = scmp.ne.s32.totalorder %s83, %s85
      %p92 = scmp.eq.s32.totalorder %s21, 1
      %p93 = por %p91, %p92
      %p94 = scmp.ne.s32.totalorder %s85, %s86
      %p95 = scmp.eq.s32.totalorder %s21, 0
      %p96 = por %p94, %p95
      %p97 = scmp.ne.s32.totalorder %s85, %s86
      %p98 = scmp.eq.s32.totalorder %s22, 1
      %p99 = por %p97, %p98
      %p101 = scmp.ne.s32.totalorder %s86, %s100
      %p102 = scmp.eq.s32.totalorder %s22, 0
      %p103 = por %p101, %p102
      %s105 = sadd.s32 %s104, 1
      %p108 = scmp.eq.s32.totalorder %s16, 1
      %p109 = scmp.ne.s32.totalorder %s104, %s106
      %p110 = scmp.eq.s32.totalorder %s16, 0
      %p111 = por %p109, %p110
      %p112 = scmp.ne.s32.totalorder %s104, %s106
      %p113 = scmp.eq.s32.totalorder %s21, 1
      %p114 = por %p112, %p113
      %p115 = scmp.ne.s32.totalorder %s106, %s107
      %p116 = scmp.eq.s32.totalorder %s21, 0
      %p117 = por %p115, %p116
      %p118 = scmp.ne.s32.totalorder %s106, %s107
      %p119 = scmp.eq.s32.totalorder %s22, 1
      %p120 = por %p118, %p119
      %p122 = scmp.ne.s32.totalorder %s107, %s121
      %p123 = scmp.eq.s32.totalorder %s22, 0
      %p124 = por %p122, %p123
      %s126 = sadd.s32 %s125, 1
      %p129 = scmp.eq.s32.totalorder %s16, 1
      %p130 = scmp.ne.s32.totalorder %s125, %s127
      %p131 = scmp.eq.s32.totalorder %s16, 0
      %p132 = por %p130, %p131
      %p133 = scmp.ne.s32.totalorder %s125, %s127
      %p134 = scmp.eq.s32.totalorder %s21, 1
      %p135 = por %p133, %p134
      %p136 = scmp.ne.s32.totalorder %s127, %s128
      %p137 = scmp.eq.s32.totalorder %s21, 0
      %p138 = por %p136, %p137
      %p139 = scmp.ne.s32.totalorder %s127, %s128
      %p140 = scmp.eq.s32.totalorder %s22, 1
      %p141 = por %p139, %p140
      %p143 = scmp.ne.s32.totalorder %s128, %s142
      %p144 = scmp.eq.s32.totalorder %s22, 0
      %p145 = por %p143, %p144
      %s147 = sadd.s32 %s146, 1
      %p150 = scmp.eq.s32.totalorder %s16, 1
      %p151 = scmp.ne.s32.totalorder %s146, %s148
      %p152 = scmp.eq.s32.totalorder %s16, 0
      %p153 = por %p151, %p152
      %p154 = scmp.ne.s32.totalorder %s146, %s148
      %p155 = scmp.eq.s32.totalorder %s21, 1
      %p156 = por %p154, %p155
      %p157 = scmp.ne.s32.totalorder %s148, %s149
      %p158 = scmp.eq.s32.totalorder %s21, 0
      %p159 = por %p157, %p158
      %p160 = scmp.ne.s32.totalorder %s148, %s149
      %p161 = scmp.eq.s32.totalorder %s22, 1
      %p162 = por %p160, %p161
      %p164 = scmp.ne.s32.totalorder %s149, %s163
      %p165 = scmp.eq.s32.totalorder %s22, 0
      %p166 = por %p164, %p165
      %s168 = sadd.s32 %s167, 1
      %p171 = scmp.eq.s32.totalorder %s16, 1
      %p172 = scmp.ne.s32.totalorder %s167, %s169
      %p173 = scmp.eq.s32.totalorder %s16, 0
      %p174 = por %p172, %p173
      %p175 = scmp.ne.s32.totalorder %s167, %s169
      %p176 = scmp.eq.s32.totalorder %s21, 1
      %p177 = por %p175, %p176
      %p178 = scmp.ne.s32.totalorder %s169, %s170
      %p179 = scmp.eq.s32.totalorder %s21, 0
      %p180 = por %p178, %p179
      %p181 = scmp.ne.s32.totalorder %s169, %s170
      %p182 = scmp.eq.s32.totalorder %s22, 1
      %p183 = por %p181, %p182
      %p185 = scmp.ne.s32.totalorder %s170, %s184
      %p186 = scmp.eq.s32.totalorder %s22, 0
      %p187 = por %p185, %p186
      %s188 = ssub.s32 %s23, %s35
      %s189 = ssub.s32 %s24, %s31
      %s190 = sor.u32 %s188, %s189
      %p191 = scmp.eq.s32.totalorder %s190, 0
      %s193 = sadd.s32 %s192, 1
      %s194 = scalar_select %p191, %s192, %s193
      %p197 = pneg %p191
      %p198 = scmp.eq.s32.totalorder %s16, 1
      %p199 = por %p197, %p198
      %p200 = scmp.ne.s32.totalorder %s192, %s195
      %p201 = scmp.eq.s32.totalorder %s16, 0
      %p202 = por %p200, %p201
      %p203 = scmp.ne.s32.totalorder %s192, %s195
      %p204 = scmp.eq.s32.totalorder %s21, 1
      %p205 = por %p203, %p204
      %p206 = scmp.ne.s32.totalorder %s195, %s196
      %p207 = scmp.eq.s32.totalorder %s21, 0
      %p208 = por %p206, %p207
      %p209 = scmp.ne.s32.totalorder %s195, %s196
      %p210 = scmp.eq.s32.totalorder %s22, 1
      %p211 = por %p209, %p210
      %p213 = scmp.ne.s32.totalorder %s196, %s212
      %p214 = scmp.eq.s32.totalorder %s22, 0
      %p215 = por %p213, %p214
      %p216 = scmp.le.s32.totalorder 1, %s16
      %p217 = scmp.lt.s32.totalorder %s16, 3
      %p218 = pnand %p216, %p217
      %p219 = pneg %p218
      // Predicated region
      $region9: #{tpu_custom_call.1} parent=5 // pred_check
        _
      $region10: #{tpu_custom_call.1} parent=5 // pred_check_branch
        %221 = sbr.rel (%p218) target = $region12
      $region11: #{tpu_custom_call.1} parent=5 // pred_region
        %s222 = ssub.s32 %s16, 1
        // Predicated region
        $region13: #{tpu_custom_call.1} parent=11 // pred_check
          %p223 = pneg %p75
        $region14: #{tpu_custom_call.1} parent=11 // pred_check_branch
          %225 = sbr.rel (%p223) target = $region16
        $region15: #{tpu_custom_call.1} parent=11 // pred_region
          _
        $region16: #{tpu_custom_call.1} parent=11 // pred_fallthru
          _
        // Predicated region
        $region17: #{tpu_custom_call.1} parent=11 // pred_check
          %p226 = pneg %p96
        $region18: #{tpu_custom_call.1} parent=11 // pred_check_branch
          %228 = sbr.rel (%p226) target = $region20
        $region19: #{tpu_custom_call.1} parent=11 // pred_region
          _
        $region20: #{tpu_custom_call.1} parent=11 // pred_fallthru
          _
        // Predicated region
        $region21: #{tpu_custom_call.1} parent=11 // pred_check
          %p229 = pneg %p117
        $region22: #{tpu_custom_call.1} parent=11 // pred_check_branch
          %231 = sbr.rel (%p229) target = $region24
        $region23: #{tpu_custom_call.1} parent=11 // pred_region
          _
        $region24: #{tpu_custom_call.1} parent=11 // pred_fallthru
          _
        // Predicated region
        $region25: #{tpu_custom_call.1} parent=11 // pred_check
          %p232 = pneg %p138
        $region26: #{tpu_custom_call.1} parent=11 // pred_check_branch
          %234 = sbr.rel (%p232) target = $region28
        $region27: #{tpu_custom_call.1} parent=11 // pred_region
          _
        $region28: #{tpu_custom_call.1} parent=11 // pred_fallthru
          _
        // Predicated region
        $region29: #{tpu_custom_call.1} parent=11 // pred_check
          %p235 = pneg %p159
        $region30: #{tpu_custom_call.1} parent=11 // pred_check_branch
          %237 = sbr.rel (%p235) target = $region32
        $region31: #{tpu_custom_call.1} parent=11 // pred_region
          _
        $region32: #{tpu_custom_call.1} parent=11 // pred_fallthru
          _
        // Predicated region
        $region33: #{tpu_custom_call.1} parent=11 // pred_check
          %p238 = pneg %p180
        $region34: #{tpu_custom_call.1} parent=11 // pred_check_branch
          %240 = sbr.rel (%p238) target = $region36
        $region35: #{tpu_custom_call.1} parent=11 // pred_region
          _
        $region36: #{tpu_custom_call.1} parent=11 // pred_fallthru
          _
      $region12: #{tpu_custom_call.1} parent=5 // pred_fallthru
        _
      %p241 = scmp.lt.s32.totalorder %s16, 2
      // Predicated region
      $region37: #{tpu_custom_call.1} parent=5 // pred_check
        %p242 = pneg %p241
      $region38: #{tpu_custom_call.1} parent=5 // pred_check_branch
        %244 = sbr.rel (%p242) target = $region40
      $region39: #{tpu_custom_call.1} parent=5 // pred_region
        // Predicated region
        $region41: #{tpu_custom_call.1} parent=39 // pred_check
          %p245 = pneg %p48
        $region42: #{tpu_custom_call.1} parent=39 // pred_check_branch
          %247 = sbr.rel (%p245) target = $region44
        $region43: #{tpu_custom_call.1} parent=39 // pred_region
          %s248 = sand.u32 %s38, 1
          %s249 = scalar_lea.sflag [#allocation4], %s248
          %s250 = sand.u32 %s38, 1
          %s251 = smul.addr %s250, 256
          %s252 = scalar_lea.vmem [#allocation3], %s251
          %s254 = ssub.s32 4096, 4096
          %255 = vsyncadd %s249, %s254
          %s256 = smul.addr %s23, 32
          %s257 = smul.addr %s256, 128
          %s258 = scalar_lea.hbm %s0, %s257
          %s259 = sshll.u32 %s252, 4
          %s260 = int_to_ptr.vmem [resolvable:$true] %s259
          %265 = dma.hbm_to_vmem [thread:$0]  %s258, 4096, %s260, %s249, 128, 128, 8
        $region44: #{tpu_custom_call.1} parent=39 // pred_fallthru
          _
      $region40: #{tpu_custom_call.1} parent=5 // pred_fallthru
        _
      %p266 = scmp.le.s32.totalorder 1, %s16
      %p267 = scmp.lt.s32.totalorder %s16, 3
      %p268 = pnand %p266, %p267
      %p269 = pneg %p268
      // Predicated region
      $region45: #{tpu_custom_call.1} parent=5 // pred_check
        _
      $region46: #{tpu_custom_call.1} parent=5 // pred_check_branch
        %271 = sbr.rel (%p268) target = $region48
      $region47: #{tpu_custom_call.1} parent=5 // pred_region
        %s272 = ssub.s32 %s16, 1
        %s273 = sand.u32 %s41, 1
        %s274 = scalar_lea.sflag [#allocation4], %s273
        %s275 = sand.u32 %s41, 1
        %s276 = smul.addr %s275, 256
        %s277 = scalar_lea.vmem [#allocation3], %s276
        // Predicated region
        $region49: #{tpu_custom_call.1} parent=47 // pred_check
          %p278 = pneg %p54
        $region50: #{tpu_custom_call.1} parent=47 // pred_check_branch
          %280 = sbr.rel (%p278) target = $region52
        $region51: #{tpu_custom_call.1} parent=47 // pred_region
          %281 = dma.done %s274, 4096
        $region52: #{tpu_custom_call.1} parent=47 // pred_fallthru
          _
        %s282 = sand.u32 %s41, 1
        %s283 = scalar_lea.sflag [#allocation4], %s282
        %s284 = sand.u32 %s41, 1
        %s285 = smul.addr %s284, 256
        %s286 = scalar_lea.vmem [#allocation3], %s285
        %p287 = pneg %p54
        %p288 = pneg %p51
        %p289 = pneg %p75
        %p290 = pneg %p72
        %p291 = pneg %p96
        %p292 = pneg %p93
        %p293 = pneg %p117
        %p294 = pneg %p114
        %p295 = pneg %p138
        %p296 = pneg %p135
        %p297 = pneg %p159
        %p298 = pneg %p156
        %p299 = pneg %p180
        %p300 = pneg %p177
        %p301 = pneg %p208
        %p302 = pneg %p205
        %s303 = smul.u32 14, %s26
        %p304 = scmp.lt.s32.totalorder %s25, 1
        %s305 = scalar_select %p304, %s25, 1
        %p306 = scmp.lt.s32.totalorder %s303, 13
        %s307 = scalar_select %p306, %s303, 13
        %s308 = smul.addr %s307, 2
        %s309 = smul.addr %s305, 28
        %s310 = sadd.s32 %s308, %s309
        %s311 = smul.addr %s310, 8
        %s312 = scalar_lea.vmem %s7, %s311
        %s313 = smul.u32 14, %s26
        %p314 = scmp.lt.s32.totalorder %s25, 1
        %s315 = scalar_select %p314, %s25, 1
        %p316 = scmp.lt.s32.totalorder %s313, 13
        %s317 = scalar_select %p316, %s313, 13
        %s318 = smul.addr %s317, 2
        %s319 = smul.addr %s315, 28
        %s320 = sadd.s32 %s318, %s319
        %s321 = smul.addr %s320, 8
        %s322 = scalar_lea.vmem %s7, %s321
        %s323 = smul.u32 14, %s26
        %p324 = scmp.eq.s32.totalorder %s26, 0
        // Predicated region
        $region53: #{tpu_custom_call.1} parent=47 // pred_check
          %p325 = pneg %p324
        $region54: #{tpu_custom_call.1} parent=47 // pred_check_branch
          %327 = sbr.rel (%p325) target = $region56
        $region55: #{tpu_custom_call.1} parent=47 // pred_region
          %v328 = vld [vmem:[%s277] sm:$0xff]
          %v329 = vld [vmem:[%s277 + $0x8] sm:$0xff]
          %v330 = vld [vmem:[%s277 + $0x10] sm:$0xff]
          %v331 = vld [vmem:[%s277 + $0x18] sm:$0xff]
          %v332 = vld [vmem:[%s277 + $0x20] sm:$0xff]
          %v333 = vld [vmem:[%s277 + $0x28] sm:$0xff]
          %v334 = vld [vmem:[%s277 + $0x30] sm:$0xff]
          %v335 = vld [vmem:[%s277 + $0x38] sm:$0xff]
          %v336 = vld [vmem:[%s277 + $0x40] sm:$0xff]
          %v337 = vld [vmem:[%s277 + $0x48] sm:$0xff]
          %v338 = vld [vmem:[%s277 + $0x50] sm:$0xff]
          %v339 = vld [vmem:[%s277 + $0x58] sm:$0xff]
          %v340 = vld [vmem:[%s277 + $0x60] sm:$0xff]
          %v341 = vld [vmem:[%s277 + $0x68] sm:$0xff]
          %v342 = vld [vmem:[%s277 + $0x70] sm:$0xff]
          %v343 = vld [vmem:[%s277 + $0x78] sm:$0xff]
          %v344 = vld [vmem:[%s277 + $0x80] sm:$0xff]
          %v345 = vld [vmem:[%s277 + $0x88] sm:$0xff]
          %v346 = vld [vmem:[%s277 + $0x90] sm:$0xff]
          %v347 = vld [vmem:[%s277 + $0x98] sm:$0xff]
          %v348 = vld [vmem:[%s277 + $0xa0] sm:$0xff]
          %v349 = vld [vmem:[%s277 + $0xa8] sm:$0xff]
          %v350 = vld [vmem:[%s277 + $0xb0] sm:$0xff]
          %v351 = vld [vmem:[%s277 + $0xb8] sm:$0xff]
          %v352 = vld [vmem:[%s277 + $0xc0] sm:$0xff]
          %v353 = vld [vmem:[%s277 + $0xc8] sm:$0xff]
          %v354 = vld [vmem:[%s277 + $0xd0] sm:$0xff]
          %v355 = vld [vmem:[%s277 + $0xd8] sm:$0xff]
          %v356 = vld [vmem:[%s277 + $0xe0] sm:$0xff]
          %v357 = vld [vmem:[%s277 + $0xe8] sm:$0xff]
          %v358 = vld [vmem:[%s277 + $0xf0] sm:$0xff]
          %v359 = vld [vmem:[%s277 + $0xf8] sm:$0xff]
          %v360 = vld [vmem:[%s1] sm:$0xff]
          %v361 = vld [vmem:[%s1 + $0x8] sm:$0xff]
          %vm362 = vcmask 130048
          %v364 = vsel %vm362, %v328, 0
          %v367 = vsel %vm362, %v329, 0
          %v370 = vsel %vm362, %v330, 0
          %v373 = vsel %vm362, %v331, 0
          %v376 = vsel %vm362, %v332, 0
          %v379 = vsel %vm362, %v333, 0
          %v382 = vsel %vm362, %v334, 0
          %v385 = vsel %vm362, %v335, 0
          %v388 = vsel %vm362, %v336, 0
          %v391 = vsel %vm362, %v337, 0
          %v394 = vsel %vm362, %v338, 0
          %v397 = vsel %vm362, %v339, 0
          %v400 = vsel %vm362, %v340, 0
          %v403 = vsel %vm362, %v341, 0
          %v406 = vsel %vm362, %v342, 0
          %v409 = vsel %vm362, %v343, 0
          %v412 = vsel %vm362, %v344, 0
          %v415 = vsel %vm362, %v345, 0
          %v418 = vsel %vm362, %v346, 0
          %v421 = vsel %vm362, %v347, 0
          %v424 = vsel %vm362, %v348, 0
          %v427 = vsel %vm362, %v349, 0
          %v430 = vsel %vm362, %v350, 0
          %v433 = vsel %vm362, %v351, 0
          %v436 = vsel %vm362, %v352, 0
          %v439 = vsel %vm362, %v353, 0
          %v442 = vsel %vm362, %v354, 0
          %v445 = vsel %vm362, %v355, 0
          %v448 = vsel %vm362, %v356, 0
          %v451 = vsel %vm362, %v357, 0
          %v454 = vsel %vm362, %v358, 0
          %v457 = vsel %vm362, %v359, 0
          %459 = vmatprep.subr.mxu0 0.0
          %460 = vmatpush1.msra.mxu0 %v360
          %461 = vmatprep.subr.mxu0 0.0
          %462 = vmatpush1.msra.mxu0 %v361
          %463 = vmatprep.subr.mxu0 0.0
          %464 = vmatpush1.msra.mxu0 0.0
          %465 = vmatprep.subr.mxu0 0.0
          %466 = vmatpush1.msra.mxu0 0.0
          %467 = vmatprep.subr.mxu0 0.0
          %468 = vmatpush1.msra.mxu0 0.0
          %469 = vmatprep.subr.mxu0 0.0
          %470 = vmatpush1.msra.mxu0 0.0
          %471 = vmatprep.subr.mxu0 0.0
          %472 = vmatpush1.msra.mxu0 0.0
          %473 = vmatprep.subr.mxu0 0.0
          %474 = vmatpush1.msra.mxu0 0.0
          %475 = vmatprep.subr.mxu0 0.0
          %476 = vmatpush1.msra.mxu0 0.0
          %477 = vmatprep.subr.mxu0 0.0
          %478 = vmatpush1.msra.mxu0 0.0
          %479 = vmatprep.subr.mxu0 0.0
          %480 = vmatpush1.msra.mxu0 0.0
          %481 = vmatprep.subr.mxu0 0.0
          %482 = vmatpush1.msra.mxu0 0.0
          %483 = vmatprep.subr.mxu0 0.0
          %484 = vmatpush1.msra.mxu0 0.0
          %485 = vmatprep.subr.mxu0 0.0
          %486 = vmatpush1.msra.mxu0 0.0
          %487 = vmatprep.subr.mxu0 0.0
          %488 = vmatpush1.msra.mxu0 0.0
          %489 = vmatprep.subr.mxu0 0.0
          %490 = vmatpush1.msra.mxu0 0.0
          %491 = vmatprep.subr.mxu0 0.0
          %492 = vmatpush1.msra.mxu0 0.0
          %493 = vmatprep.subr.mxu0 0.0
          %494 = vmatpush1.msra.mxu0 0.0
          %495 = vmatprep.subr.mxu0 0.0
          %496 = vmatpush1.msra.mxu0 0.0
          %497 = vmatprep.subr.mxu0 0.0
          %498 = vmatpush1.msra.mxu0 0.0
          %499 = vmatprep.subr.mxu0 0.0
          %500 = vmatpush1.msra.mxu0 0.0
          %501 = vmatprep.subr.mxu0 0.0
          %502 = vmatpush1.msra.mxu0 0.0
          %503 = vmatprep.subr.mxu0 0.0
          %504 = vmatpush1.msra.mxu0 0.0
          %505 = vmatprep.subr.mxu0 0.0
          %506 = vmatpush1.msra.mxu0 0.0
          %507 = vmatprep.subr.mxu0 0.0
          %508 = vmatpush1.msra.mxu0 0.0
          %509 = vmatprep.subr.mxu0 0.0
          %510 = vmatpush1.msra.mxu0 0.0
          %511 = vmatprep.subr.mxu0 0.0
          %512 = vmatpush1.msra.mxu0 0.0
          %513 = vmatprep.subr.mxu0 0.0
          %514 = vmatpush1.msra.mxu0 0.0
          %515 = vmatprep.subr.mxu0 0.0
          %516 = vmatpush1.msra.mxu0 0.0
          %517 = vmatprep.subr.mxu0 0.0
          %518 = vmatpush1.msra.mxu0 0.0
          %519 = vmatprep.subr.mxu0 0.0
          %520 = vmatpush1.msra.mxu0 0.0
          %521 = vmatprep.subr.mxu0 0.0
          %522 = vmatpush1.msra.mxu0 0.0
          %523 = vmatprep.mubr.f32.mxu0 0.0
          %524 = vmatmul.mubr.f32.gmra.mrb[0].mxu0 %v364
          %v525 = vpop.f32.mrb[0].mxu0
          %v526 = vadd.f32 0.0, %v525
          %v527 = vpop.f32.mrb[0].mxu0
          %528 = vmatprep.mubr.f32.mxu0 0.0
          %529 = vmatmul.mubr.f32.gmra.mrb[0].mxu0 %v367
          %v530 = vpop.f32.mrb[0].mxu0
          %v531 = vadd.f32 0.0, %v530
          %v532 = vpop.f32.mrb[0].mxu0
          %533 = vmatprep.mubr.f32.mxu0 0.0
          %534 = vmatmul.mubr.f32.gmra.mrb[0].mxu0 %v370
          %v535 = vpop.f32.mrb[0].mxu0
          %v536 = vadd.f32 0.0, %v535
          %v537 = vpop.f32.mrb[0].mxu0
          %538 = vmatprep.mubr.f32.mxu0 0.0
          %539 = vmatmul.mubr.f32.gmra.mrb[0].mxu0 %v373
          %v540 = vpop.f32.mrb[0].mxu0
          %v541 = vadd.f32 0.0, %v540
          %v542 = vpop.f32.mrb[0].mxu0
          %543 = vmatprep.mubr.f32.mxu0 0.0
          %544 = vmatmul.mubr.f32.gmra.mrb[0].mxu0 %v376
          %v545 = vpop.f32.mrb[0].mxu0
          %v546 = vadd.f32 0.0, %v545
          %v547 = vpop.f32.mrb[0].mxu0
          %548 = vmatprep.mubr.f32.mxu0 0.0
          %549 = vmatmul.mubr.f32.gmra.mrb[0].mxu0 %v379
          %v550 = vpop.f32.mrb[0].mxu0
          %v551 = vadd.f32 0.0, %v550
          %v552 = vpop.f32.mrb[0].mxu0
          %553 = vmatprep.mubr.f32.mxu0 0.0
          %554 = vmatmul.mubr.f32.gmra.mrb[0].mxu0 %v382
          %v555 = vpop.f32.mrb[0].mxu0
          %v556 = vadd.f32 0.0, %v555
          %v557 = vpop.f32.mrb[0].mxu0
          %558 = vmatprep.mubr.f32.mxu0 0.0
          %559 = vmatmul.mubr.f32.gmra.mrb[0].mxu0 %v385
          %v560 = vpop.f32.mrb[0].mxu0
          %v561 = vadd.f32 0.0, %v560
          %v562 = vpop.f32.mrb[0].mxu0
          %563 = vmatprep.mubr.f32.mxu0 0.0
          %564 = vmatmul.mubr.f32.gmra.mrb[0].mxu0 %v388
          %v565 = vpop.f32.mrb[0].mxu0
          %v566 = vadd.f32 0.0, %v565
          %v567 = vpop.f32.mrb[0].mxu0
          %568 = vmatprep.mubr.f32.mxu0 0.0
          %569 = vmatmul.mubr.f32.gmra.mrb[0].mxu0 %v391
          %v570 = vpop.f32.mrb[0].mxu0
          %v571 = vadd.f32 0.0, %v570
          %v572 = vpop.f32.mrb[0].mxu0
          %573 = vmatprep.mubr.f32.mxu0 0.0
          %574 = vmatmul.mubr.f32.gmra.mrb[0].mxu0 %v394
          %v575 = vpop.f32.mrb[0].mxu0
          %v576 = vadd.f32 0.0, %v575
          %v577 = vpop.f32.mrb[0].mxu0
          %578 = vmatprep.mubr.f32.mxu0 0.0
          %579 = vmatmul.mubr.f32.gmra.mrb[0].mxu0 %v397
          %v580 = vpop.f32.mrb[0].mxu0
          %v581 = vadd.f32 0.0, %v580
          %v582 = vpop.f32.mrb[0].mxu0
          %583 = vmatprep.mubr.f32.mxu0 0.0
          %584 = vmatmul.mubr.f32.gmra.mrb[0].mxu0 %v400
          %v585 = vpop.f32.mrb[0].mxu0
          %v586 = vadd.f32 0.0, %v585
          %v587 = vpop.f32.mrb[0].mxu0
          %588 = vmatprep.mubr.f32.mxu0 0.0
          %589 = vmatmul.mubr.f32.gmra.mrb[0].mxu0 %v403
          %v590 = vpop.f32.mrb[0].mxu0
          %v591 = vadd.f32 0.0, %v590
          %v592 = vpop.f32.mrb[0].mxu0
          %593 = vmatprep.mubr.f32.mxu0 0.0
          %594 = vmatmul.mubr.f32.gmra.mrb[0].mxu0 %v406
          %v595 = vpop.f32.mrb[0].mxu0
          %v596 = vadd.f32 0.0, %v595
          %v597 = vpop.f32.mrb[0].mxu0
          %598 = vmatprep.mubr.f32.mxu0 0.0
          %599 = vmatmul.mubr.f32.gmra.mrb[0].mxu0 %v409
          %v600 = vpop.f32.mrb[0].mxu0
          %v601 = vadd.f32 0.0, %v600
          %v602 = vpop.f32.mrb[0].mxu0
          %603 = vmatprep.mubr.f32.mxu0 0.0
          %604 = vmatmul.mubr.f32.gmra.mrb[0].mxu0 %v412
          %v605 = vpop.f32.mrb[0].mxu0
          %v606 = vadd.f32 0.0, %v605
          %v607 = vpop.f32.mrb[0].mxu0
          %608 = vmatprep.mubr.f32.mxu0 0.0
          %609 = vmatmul.mubr.f32.gmra.mrb[0].mxu0 %v415
          %v610 = vpop.f32.mrb[0].mxu0
          %v611 = vadd.f32 0.0, %v610
          %v612 = vpop.f32.mrb[0].mxu0
          %613 = vmatprep.mubr.f32.mxu0 0.0
          %614 = vmatmul.mubr.f32.gmra.mrb[0].mxu0 %v418
          %v615 = vpop.f32.mrb[0].mxu0
          %v616 = vadd.f32 0.0, %v615
          %v617 = vpop.f32.mrb[0].mxu0
          %618 = vmatprep.mubr.f32.mxu0 0.0
          %619 = vmatmul.mubr.f32.gmra.mrb[0].mxu0 %v421
          %v620 = vpop.f32.mrb[0].mxu0
          %v621 = vadd.f32 0.0, %v620
          %v622 = vpop.f32.mrb[0].mxu0
          %623 = vmatprep.mubr.f32.mxu0 0.0
          %624 = vmatmul.mubr.f32.gmra.mrb[0].mxu0 %v424
          %v625 = vpop.f32.mrb[0].mxu0
          %v626 = vadd.f32 0.0, %v625
          %v627 = vpop.f32.mrb[0].mxu0
          %628 = vmatprep.mubr.f32.mxu0 0.0
          %629 = vmatmul.mubr.f32.gmra.mrb[0].mxu0 %v427
          %v630 = vpop.f32.mrb[0].mxu0
          %v631 = vadd.f32 0.0, %v630
          %v632 = vpop.f32.mrb[0].mxu0
          %633 = vmatprep.mubr.f32.mxu0 0.0
          %634 = vmatmul.mubr.f32.gmra.mrb[0].mxu0 %v430
          %v635 = vpop.f32.mrb[0].mxu0
          %v636 = vadd.f32 0.0, %v635
          %v637 = vpop.f32.mrb[0].mxu0
          %638 = vmatprep.mubr.f32.mxu0 0.0
          %639 = vmatmul.mubr.f32.gmra.mrb[0].mxu0 %v433
          %v640 = vpop.f32.mrb[0].mxu0
          %v641 = vadd.f32 0.0, %v640
          %v642 = vpop.f32.mrb[0].mxu0
          %643 = vmatprep.mubr.f32.mxu0 0.0
          %644 = vmatmul.mubr.f32.gmra.mrb[0].mxu0 %v436
          %v645 = vpop.f32.mrb[0].mxu0
          %v646 = vadd.f32 0.0, %v645
          %v647 = vpop.f32.mrb[0].mxu0
          %648 = vmatprep.mubr.f32.mxu0 0.0
          %649 = vmatmul.mubr.f32.gmra.mrb[0].mxu0 %v439
          %v650 = vpop.f32.mrb[0].mxu0
          %v651 = vadd.f32 0.0, %v650
          %v652 = vpop.f32.mrb[0].mxu0
          %653 = vmatprep.mubr.f32.mxu0 0.0
          %654 = vmatmul.mubr.f32.gmra.mrb[0].mxu0 %v442
          %v655 = vpop.f32.mrb[0].mxu0
          %v656 = vadd.f32 0.0, %v655
          %v657 = vpop.f32.mrb[0].mxu0
          %658 = vmatprep.mubr.f32.mxu0 0.0
          %659 = vmatmul.mubr.f32.gmra.mrb[0].mxu0 %v445
          %v660 = vpop.f32.mrb[0].mxu0
          %v661 = vadd.f32 0.0, %v660
          %v662 = vpop.f32.mrb[0].mxu0
          %663 = vmatprep.mubr.f32.mxu0 0.0
          %664 = vmatmul.mubr.f32.gmra.mrb[0].mxu0 %v448
          %v665 = vpop.f32.mrb[0].mxu0
          %v666 = vadd.f32 0.0, %v665
          %v667 = vpop.f32.mrb[0].mxu0
          %668 = vmatprep.mubr.f32.mxu0 0.0
          %669 = vmatmul.mubr.f32.gmra.mrb[0].mxu0 %v451
          %v670 = vpop.f32.mrb[0].mxu0
          %v671 = vadd.f32 0.0, %v670
          %v672 = vpop.f32.mrb[0].mxu0
          %673 = vmatprep.mubr.f32.mxu0 0.0
          %674 = vmatmul.mubr.f32.gmra.mrb[0].mxu0 %v454
          %v675 = vpop.f32.mrb[0].mxu0
          %v676 = vadd.f32 0.0, %v675
          %v677 = vpop.f32.mrb[0].mxu0
          %678 = vmatprep.mubr.f32.mxu0 0.0
          %679 = vmatmul.mubr.f32.gmra.mrb[0].mxu0 %v457
          %v680 = vpop.f32.mrb[0].mxu0
          %v681 = vadd.f32 0.0, %v680
          %v682 = vpop.f32.mrb[0].mxu0
          %683 = vdwg.mxu0
          %v684 = vld [vmem:[%s2] sm:$0x1]
          %v686 = vlaneseq
          %v687 = vshrl.u32 %v686, 7
          %v688 = vsub.s32 0, %v687
          %v689 = vrot.slane %v684, %v688
          %v691 = vmul.f32 %v526, %v689
          %v692 = vmul.f32 %v531, %v689
          %v693 = vmul.f32 %v536, %v689
          %v694 = vmul.f32 %v541, %v689
          %v695 = vmul.f32 %v546, %v689
          %v696 = vmul.f32 %v551, %v689
          %v697 = vmul.f32 %v556, %v689
          %v698 = vmul.f32 %v561, %v689
          %v699 = vmul.f32 %v566, %v689
          %v700 = vmul.f32 %v571, %v689
          %v701 = vmul.f32 %v576, %v689
          %v702 = vmul.f32 %v581, %v689
          %v703 = vmul.f32 %v586, %v689
          %v704 = vmul.f32 %v591, %v689
          %v705 = vmul.f32 %v596, %v689
          %v706 = vmul.f32 %v601, %v689
          %v707 = vmul.f32 %v606, %v689
          %v708 = vmul.f32 %v611, %v689
          %v709 = vmul.f32 %v616, %v689
          %v710 = vmul.f32 %v621, %v689
          %v711 = vmul.f32 %v626, %v689
          %v712 = vmul.f32 %v631, %v689
          %v713 = vmul.f32 %v636, %v689
          %v714 = vmul.f32 %v641, %v689
          %v715 = vmul.f32 %v646, %v689
          %v716 = vmul.f32 %v651, %v689
          %v717 = vmul.f32 %v656, %v689
          %v718 = vmul.f32 %v661, %v689
          %v719 = vmul.f32 %v666, %v689
          %v720 = vmul.f32 %v671, %v689
          %v721 = vmul.f32 %v676, %v689
          %v722 = vmul.f32 %v681, %v689
          %v723 = vld [vmem:[%s3] sm:$0x1]
          %v725 = vlaneseq
          %v726 = vshrl.u32 %v725, 7
          %v727 = vsub.s32 0, %v726
          %v728 = vrot.slane %v723, %v727
          %v730 = vadd.f32 %v691, %v728
          %v731 = vadd.f32 %v692, %v728
          %v732 = vadd.f32 %v693, %v728
          %v733 = vadd.f32 %v694, %v728
          %v734 = vadd.f32 %v695, %v728
          %v735 = vadd.f32 %v696, %v728
          %v736 = vadd.f32 %v697, %v728
          %v737 = vadd.f32 %v698, %v728
          %v738 = vadd.f32 %v699, %v728
          %v739 = vadd.f32 %v700, %v728
          %v740 = vadd.f32 %v701, %v728
          %v741 = vadd.f32 %v702, %v728
          %v742 = vadd.f32 %v703, %v728
          %v743 = vadd.f32 %v704, %v728
          %v744 = vadd.f32 %v705, %v728
          %v745 = vadd.f32 %v706, %v728
          %v746 = vadd.f32 %v707, %v728
          %v747 = vadd.f32 %v708, %v728
          %v748 = vadd.f32 %v709, %v728
          %v749 = vadd.f32 %v710, %v728
          %v750 = vadd.f32 %v711, %v728
          %v751 = vadd.f32 %v712, %v728
          %v752 = vadd.f32 %v713, %v728
          %v753 = vadd.f32 %v714, %v728
          %v754 = vadd.f32 %v715, %v728
          %v755 = vadd.f32 %v716, %v728
          %v756 = vadd.f32 %v717, %v728
          %v757 = vadd.f32 %v718, %v728
          %v758 = vadd.f32 %v719, %v728
          %v759 = vadd.f32 %v720, %v728
          %v760 = vadd.f32 %v721, %v728
          %v761 = vadd.f32 %v722, %v728
          %v762 = vmax.f32 %v730, 0.0
          %v763 = vmax.f32 %v731, 0.0
          %v764 = vmax.f32 %v732, 0.0
          %v765 = vmax.f32 %v733, 0.0
          %v766 = vmax.f32 %v734, 0.0
          %v767 = vmax.f32 %v735, 0.0
          %v768 = vmax.f32 %v736, 0.0
          %v769 = vmax.f32 %v737, 0.0
          %v770 = vmax.f32 %v738, 0.0
          %v771 = vmax.f32 %v739, 0.0
          %v772 = vmax.f32 %v740, 0.0
          %v773 = vmax.f32 %v741, 0.0
          %v774 = vmax.f32 %v742, 0.0
          %v775 = vmax.f32 %v743, 0.0
          %v776 = vmax.f32 %v744, 0.0
          %v777 = vmax.f32 %v745, 0.0
          %v778 = vmax.f32 %v746, 0.0
          %v779 = vmax.f32 %v747, 0.0
          %v780 = vmax.f32 %v748, 0.0
          %v781 = vmax.f32 %v749, 0.0
          %v782 = vmax.f32 %v750, 0.0
          %v783 = vmax.f32 %v751, 0.0
          %v784 = vmax.f32 %v752, 0.0
          %v785 = vmax.f32 %v753, 0.0
          %v786 = vmax.f32 %v754, 0.0
          %v787 = vmax.f32 %v755, 0.0
          %v788 = vmax.f32 %v756, 0.0
          %v789 = vmax.f32 %v757, 0.0
          %v790 = vmax.f32 %v758, 0.0
          %v791 = vmax.f32 %v759, 0.0
          %v792 = vmax.f32 %v760, 0.0
          %v793 = vmax.f32 %v761, 0.0
          %vm794 = vcmask 261120
          %795 = vst.msk [vmem:[#allocation2] sm:$0xff] %vm794, %v762
          %796 = vst.msk [vmem:[#allocation2 + $0x8] sm:$0xff] %vm794, %v763
          %797 = vst.msk [vmem:[#allocation2 + $0x18] sm:$0xff] %vm794, %v764
          %798 = vst.msk [vmem:[#allocation2 + $0x20] sm:$0xff] %vm794, %v765
          %799 = vst.msk [vmem:[#allocation2 + $0x30] sm:$0xff] %vm794, %v766
          %800 = vst.msk [vmem:[#allocation2 + $0x38] sm:$0xff] %vm794, %v767
          %801 = vst.msk [vmem:[#allocation2 + $0x48] sm:$0xff] %vm794, %v768
          %802 = vst.msk [vmem:[#allocation2 + $0x50] sm:$0xff] %vm794, %v769
          %803 = vst.msk [vmem:[#allocation2 + $0x60] sm:$0xff] %vm794, %v770
          %804 = vst.msk [vmem:[#allocation2 + $0x68] sm:$0xff] %vm794, %v771
          %805 = vst.msk [vmem:[#allocation2 + $0x78] sm:$0xff] %vm794, %v772
          %806 = vst.msk [vmem:[#allocation2 + $0x80] sm:$0xff] %vm794, %v773
          %807 = vst.msk [vmem:[#allocation2 + $0x90] sm:$0xff] %vm794, %v774
          %808 = vst.msk [vmem:[#allocation2 + $0x98] sm:$0xff] %vm794, %v775
          %809 = vst.msk [vmem:[#allocation2 + $0xa8] sm:$0xff] %vm794, %v776
          %810 = vst.msk [vmem:[#allocation2 + $0xb0] sm:$0xff] %vm794, %v777
          %811 = vst.msk [vmem:[#allocation2 + $0xc0] sm:$0xff] %vm794, %v778
          %812 = vst.msk [vmem:[#allocation2 + $0xc8] sm:$0xff] %vm794, %v779
          %813 = vst.msk [vmem:[#allocation2 + $0xd8] sm:$0xff] %vm794, %v780
          %814 = vst.msk [vmem:[#allocation2 + $0xe0] sm:$0xff] %vm794, %v781
          %815 = vst.msk [vmem:[#allocation2 + $0xf0] sm:$0xff] %vm794, %v782
          %816 = vst.msk [vmem:[#allocation2 + $0xf8] sm:$0xff] %vm794, %v783
          %817 = vst.msk [vmem:[#allocation2 + $0x108] sm:$0xff] %vm794, %v784
          %818 = vst.msk [vmem:[#allocation2 + $0x110] sm:$0xff] %vm794, %v785
          %819 = vst.msk [vmem:[#allocation2 + $0x120] sm:$0xff] %vm794, %v786
          %820 = vst.msk [vmem:[#allocation2 + $0x128] sm:$0xff] %vm794, %v787
          %821 = vst.msk [vmem:[#allocation2 + $0x138] sm:$0xff] %vm794, %v788
          %822 = vst.msk [vmem:[#allocation2 + $0x140] sm:$0xff] %vm794, %v789
          %823 = vst.msk [vmem:[#allocation2 + $0x150] sm:$0xff] %vm794, %v790
          %824 = vst.msk [vmem:[#allocation2 + $0x158] sm:$0xff] %vm794, %v791
          %825 = vst.msk [vmem:[#allocation2 + $0x168] sm:$0xff] %vm794, %v792
          %826 = vst.msk [vmem:[#allocation2 + $0x170] sm:$0xff] %vm794, %v793
        $region56: #{tpu_custom_call.1} parent=47 // pred_fallthru
          _
        %s827 = smul.u32 %s26, 14
        %s828 = smul.u32 %s827, 24
        %s829 = scalar_lea.vmem [#allocation2], %s828
        %v830 = vld [vmem:[%s829] sm:$0xff]
        %v831 = vld [vmem:[%s829 + $0x8] sm:$0xff]
        %v832 = vld [vmem:[%s829 + $0x10] sm:$0x3]
        %v833 = vld [vmem:[%s829 + $0x18] sm:$0xff]
        %v834 = vld [vmem:[%s829 + $0x20] sm:$0xff]
        %v835 = vld [vmem:[%s829 + $0x28] sm:$0x3]
        %v836 = vld [vmem:[%s829 + $0x30] sm:$0xff]
        %v837 = vld [vmem:[%s829 + $0x38] sm:$0xff]
        %v838 = vld [vmem:[%s829 + $0x40] sm:$0x3]
        %v839 = vld [vmem:[%s829 + $0x48] sm:$0xff]
        %v840 = vld [vmem:[%s829 + $0x50] sm:$0xff]
        %v841 = vld [vmem:[%s829 + $0x58] sm:$0x3]
        %v842 = vld [vmem:[%s829 + $0x60] sm:$0xff]
        %v843 = vld [vmem:[%s829 + $0x68] sm:$0xff]
        %v844 = vld [vmem:[%s829 + $0x70] sm:$0x3]
        %v845 = vld [vmem:[%s829 + $0x78] sm:$0xff]
        %v846 = vld [vmem:[%s829 + $0x80] sm:$0xff]
        %v847 = vld [vmem:[%s829 + $0x88] sm:$0x3]
        %v848 = vld [vmem:[%s829 + $0x90] sm:$0xff]
        %v849 = vld [vmem:[%s829 + $0x98] sm:$0xff]
        %v850 = vld [vmem:[%s829 + $0xa0] sm:$0x3]
        %v851 = vld [vmem:[%s829 + $0xa8] sm:$0xff]
        %v852 = vld [vmem:[%s829 + $0xb0] sm:$0xff]
        %v853 = vld [vmem:[%s829 + $0xb8] sm:$0x3]
        %v854 = vld [vmem:[%s829 + $0xc0] sm:$0xff]
        %v855 = vld [vmem:[%s829 + $0xc8] sm:$0xff]
        %v856 = vld [vmem:[%s829 + $0xd0] sm:$0x3]
        %v857 = vld [vmem:[%s829 + $0xd8] sm:$0xff]
        %v858 = vld [vmem:[%s829 + $0xe0] sm:$0xff]
        %v859 = vld [vmem:[%s829 + $0xe8] sm:$0x3]
        %v860 = vld [vmem:[%s829 + $0xf0] sm:$0xff]
        %v861 = vld [vmem:[%s829 + $0xf8] sm:$0xff]
        %v862 = vld [vmem:[%s829 + $0x100] sm:$0x3]
        %v863 = vld [vmem:[%s829 + $0x108] sm:$0xff]
        %v864 = vld [vmem:[%s829 + $0x110] sm:$0xff]
        %v865 = vld [vmem:[%s829 + $0x118] sm:$0x3]
        %v866 = vld [vmem:[%s829 + $0x120] sm:$0xff]
        %v867 = vld [vmem:[%s829 + $0x128] sm:$0xff]
        %v868 = vld [vmem:[%s829 + $0x130] sm:$0x3]
        %v869 = vld [vmem:[%s829 + $0x138] sm:$0xff]
        %v870 = vld [vmem:[%s829 + $0x140] sm:$0xff]
        %v871 = vld [vmem:[%s829 + $0x148] sm:$0x3]
        %vm914 = vcmask 1046528
        %v915 = vrot.slane %v830, 1
        %v916 = vrot.slane %v831, 1
        %v917 = vsel %vm914, %v915, %v916
        %v918 = vrot.slane %v832, 1
        %v919 = vsel %vm914, %v916, %v918
        %v920 = vrot.slane %v833, 1
        %v921 = vrot.slane %v834, 1
        %v922 = vsel %vm914, %v920, %v921
        %v923 = vrot.slane %v835, 1
        %v924 = vsel %vm914, %v921, %v923
        %v925 = vrot.slane %v836, 1
        %v926 = vrot.slane %v837, 1
        %v927 = vsel %vm914, %v925, %v926
        %v928 = vrot.slane %v838, 1
        %v929 = vsel %vm914, %v926, %v928
        %v930 = vrot.slane %v839, 1
        %v931 = vrot.slane %v840, 1
        %v932 = vsel %vm914, %v930, %v931
        %v933 = vrot.slane %v841, 1
        %v934 = vsel %vm914, %v931, %v933
        %v935 = vrot.slane %v842, 1
        %v936 = vrot.slane %v843, 1
        %v937 = vsel %vm914, %v935, %v936
        %v938 = vrot.slane %v844, 1
        %v939 = vsel %vm914, %v936, %v938
        %v940 = vrot.slane %v845, 1
        %v941 = vrot.slane %v846, 1
        %v942 = vsel %vm914, %v940, %v941
        %v943 = vrot.slane %v847, 1
        %v944 = vsel %vm914, %v941, %v943
        %v945 = vrot.slane %v848, 1
        %v946 = vrot.slane %v849, 1
        %v947 = vsel %vm914, %v945, %v946
        %v948 = vrot.slane %v850, 1
        %v949 = vsel %vm914, %v946, %v948
        %v950 = vrot.slane %v851, 1
        %v951 = vrot.slane %v852, 1
        %v952 = vsel %vm914, %v950, %v951
        %v953 = vrot.slane %v853, 1
        %v954 = vsel %vm914, %v951, %v953
        %v955 = vrot.slane %v854, 1
        %v956 = vrot.slane %v855, 1
        %v957 = vsel %vm914, %v955, %v956
        %v958 = vrot.slane %v856, 1
        %v959 = vsel %vm914, %v956, %v958
        %v960 = vrot.slane %v857, 1
        %v961 = vrot.slane %v858, 1
        %v962 = vsel %vm914, %v960, %v961
        %v963 = vrot.slane %v859, 1
        %v964 = vsel %vm914, %v961, %v963
        %v965 = vrot.slane %v860, 1
        %v966 = vrot.slane %v861, 1
        %v967 = vsel %vm914, %v965, %v966
        %v968 = vrot.slane %v862, 1
        %v969 = vsel %vm914, %v966, %v968
        %v970 = vrot.slane %v863, 1
        %v971 = vrot.slane %v864, 1
        %v972 = vsel %vm914, %v970, %v971
        %v973 = vrot.slane %v865, 1
        %v974 = vsel %vm914, %v971, %v973
        %v975 = vrot.slane %v866, 1
        %v976 = vrot.slane %v867, 1
        %v977 = vsel %vm914, %v975, %v976
        %v978 = vrot.slane %v868, 1
        %v979 = vsel %vm914, %v976, %v978
        %v980 = vrot.slane %v869, 1
        %v981 = vrot.slane %v870, 1
        %v982 = vsel %vm914, %v980, %v981
        %v983 = vrot.slane %v871, 1
        %v984 = vsel %vm914, %v981, %v983
        %985 = vrot.lane.b32.xlu0 %v917, 32
        %v986 = vpop.permute.xlu0 %985
        %987 = vrot.lane.b32.xlu0 %v919, 32
        %v988 = vpop.permute.xlu0 %987
        %989 = vrot.lane.b32.xlu0 %v922, 32
        %v990 = vpop.permute.xlu0 %989
        %991 = vrot.lane.b32.xlu0 %v924, 32
        %v992 = vpop.permute.xlu0 %991
        %993 = vrot.lane.b32.xlu0 %v927, 32
        %v994 = vpop.permute.xlu0 %993
        %995 = vrot.lane.b32.xlu0 %v929, 32
        %v996 = vpop.permute.xlu0 %995
        %997 = vrot.lane.b32.xlu0 %v932, 32
        %v998 = vpop.permute.xlu0 %997
        %999 = vrot.lane.b32.xlu0 %v934, 32
        %v1000 = vpop.permute.xlu0 %999
        %1001 = vrot.lane.b32.xlu0 %v937, 32
        %v1002 = vpop.permute.xlu0 %1001
        %1003 = vrot.lane.b32.xlu0 %v939, 32
        %v1004 = vpop.permute.xlu0 %1003
        %1005 = vrot.lane.b32.xlu0 %v942, 32
        %v1006 = vpop.permute.xlu0 %1005
        %1007 = vrot.lane.b32.xlu0 %v944, 32
        %v1008 = vpop.permute.xlu0 %1007
        %1009 = vrot.lane.b32.xlu0 %v947, 32
        %v1010 = vpop.permute.xlu0 %1009
        %1011 = vrot.lane.b32.xlu0 %v949, 32
        %v1012 = vpop.permute.xlu0 %1011
        %1013 = vrot.lane.b32.xlu0 %v952, 32
        %v1014 = vpop.permute.xlu0 %1013
        %1015 = vrot.lane.b32.xlu0 %v954, 32
        %v1016 = vpop.permute.xlu0 %1015
        %1017 = vrot.lane.b32.xlu0 %v957, 32
        %v1018 = vpop.permute.xlu0 %1017
        %1019 = vrot.lane.b32.xlu0 %v959, 32
        %v1020 = vpop.permute.xlu0 %1019
        %1021 = vrot.lane.b32.xlu0 %v962, 32
        %v1022 = vpop.permute.xlu0 %1021
        %1023 = vrot.lane.b32.xlu0 %v964, 32
        %v1024 = vpop.permute.xlu0 %1023
        %1025 = vrot.lane.b32.xlu0 %v967, 32
        %v1026 = vpop.permute.xlu0 %1025
        %1027 = vrot.lane.b32.xlu0 %v969, 32
        %v1028 = vpop.permute.xlu0 %1027
        %1029 = vrot.lane.b32.xlu0 %v972, 32
        %v1030 = vpop.permute.xlu0 %1029
        %1031 = vrot.lane.b32.xlu0 %v974, 32
        %v1032 = vpop.permute.xlu0 %1031
        %1033 = vrot.lane.b32.xlu0 %v977, 32
        %v1034 = vpop.permute.xlu0 %1033
        %1035 = vrot.lane.b32.xlu0 %v979, 32
        %v1036 = vpop.permute.xlu0 %1035
        %1037 = vrot.lane.b32.xlu0 %v982, 32
        %v1038 = vpop.permute.xlu0 %1037
        %1039 = vrot.lane.b32.xlu0 %v984, 32
        %v1040 = vpop.permute.xlu0 %1039
        %vm1069 = vcmask 1045504
        %v1070 = vrot.slane %v830, 2
        %v1071 = vrot.slane %v831, 2
        %v1072 = vsel %vm1069, %v1070, %v1071
        %v1073 = vrot.slane %v832, 2
        %v1074 = vsel %vm1069, %v1071, %v1073
        %v1075 = vrot.slane %v833, 2
        %v1076 = vrot.slane %v834, 2
        %v1077 = vsel %vm1069, %v1075, %v1076
        %v1078 = vrot.slane %v835, 2
        %v1079 = vsel %vm1069, %v1076, %v1078
        %v1080 = vrot.slane %v836, 2
        %v1081 = vrot.slane %v837, 2
        %v1082 = vsel %vm1069, %v1080, %v1081
        %v1083 = vrot.slane %v838, 2
        %v1084 = vsel %vm1069, %v1081, %v1083
        %v1085 = vrot.slane %v839, 2
        %v1086 = vrot.slane %v840, 2
        %v1087 = vsel %vm1069, %v1085, %v1086
        %v1088 = vrot.slane %v841, 2
        %v1089 = vsel %vm1069, %v1086, %v1088
        %v1090 = vrot.slane %v842, 2
        %v1091 = vrot.slane %v843, 2
        %v1092 = vsel %vm1069, %v1090, %v1091
        %v1093 = vrot.slane %v844, 2
        %v1094 = vsel %vm1069, %v1091, %v1093
        %v1095 = vrot.slane %v845, 2
        %v1096 = vrot.slane %v846, 2
        %v1097 = vsel %vm1069, %v1095, %v1096
        %v1098 = vrot.slane %v847, 2
        %v1099 = vsel %vm1069, %v1096, %v1098
        %v1100 = vrot.slane %v848, 2
        %v1101 = vrot.slane %v849, 2
        %v1102 = vsel %vm1069, %v1100, %v1101
        %v1103 = vrot.slane %v850, 2
        %v1104 = vsel %vm1069, %v1101, %v1103
        %v1105 = vrot.slane %v851, 2
        %v1106 = vrot.slane %v852, 2
        %v1107 = vsel %vm1069, %v1105, %v1106
        %v1108 = vrot.slane %v853, 2
        %v1109 = vsel %vm1069, %v1106, %v1108
        %v1110 = vrot.slane %v854, 2
        %v1111 = vrot.slane %v855, 2
        %v1112 = vsel %vm1069, %v1110, %v1111
        %v1113 = vrot.slane %v856, 2
        %v1114 = vsel %vm1069, %v1111, %v1113
        %v1115 = vrot.slane %v857, 2
        %v1116 = vrot.slane %v858, 2
        %v1117 = vsel %vm1069, %v1115, %v1116
        %v1118 = vrot.slane %v859, 2
        %v1119 = vsel %vm1069, %v1116, %v1118
        %v1120 = vrot.slane %v860, 2
        %v1121 = vrot.slane %v861, 2
        %v1122 = vsel %vm1069, %v1120, %v1121
        %v1123 = vrot.slane %v862, 2
        %v1124 = vsel %vm1069, %v1121, %v1123
        %v1125 = vrot.slane %v863, 2
        %v1126 = vrot.slane %v864, 2
        %v1127 = vsel %vm1069, %v1125, %v1126
        %v1128 = vrot.slane %v865, 2
        %v1129 = vsel %vm1069, %v1126, %v1128
        %v1130 = vrot.slane %v866, 2
        %v1131 = vrot.slane %v867, 2
        %v1132 = vsel %vm1069, %v1130, %v1131
        %v1133 = vrot.slane %v868, 2
        %v1134 = vsel %vm1069, %v1131, %v1133
        %v1135 = vrot.slane %v869, 2
        %v1136 = vrot.slane %v870, 2
        %v1137 = vsel %vm1069, %v1135, %v1136
        %v1138 = vrot.slane %v871, 2
        %v1139 = vsel %vm1069, %v1136, %v1138
        %1140 = vrot.lane.b32.xlu0 %v1072, 64
        %v1141 = vpop.permute.xlu0 %1140
        %1142 = vrot.lane.b32.xlu0 %v1074, 64
        %v1143 = vpop.permute.xlu0 %1142
        %1144 = vrot.lane.b32.xlu0 %v1077, 64
        %v1145 = vpop.permute.xlu0 %1144
        %1146 = vrot.lane.b32.xlu0 %v1079, 64
        %v1147 = vpop.permute.xlu0 %1146
        %1148 = vrot.lane.b32.xlu0 %v1082, 64
        %v1149 = vpop.permute.xlu0 %1148
        %1150 = vrot.lane.b32.xlu0 %v1084, 64
        %v1151 = vpop.permute.xlu0 %1150
        %1152 = vrot.lane.b32.xlu0 %v1087, 64
        %v1153 = vpop.permute.xlu0 %1152
        %1154 = vrot.lane.b32.xlu0 %v1089, 64
        %v1155 = vpop.permute.xlu0 %1154
        %1156 = vrot.lane.b32.xlu0 %v1092, 64
        %v1157 = vpop.permute.xlu0 %1156
        %1158 = vrot.lane.b32.xlu0 %v1094, 64
        %v1159 = vpop.permute.xlu0 %1158
        %1160 = vrot.lane.b32.xlu0 %v1097, 64
        %v1161 = vpop.permute.xlu0 %1160
        %1162 = vrot.lane.b32.xlu0 %v1099, 64
        %v1163 = vpop.permute.xlu0 %1162
        %1164 = vrot.lane.b32.xlu0 %v1102, 64
        %v1165 = vpop.permute.xlu0 %1164
        %1166 = vrot.lane.b32.xlu0 %v1104, 64
        %v1167 = vpop.permute.xlu0 %1166
        %1168 = vrot.lane.b32.xlu0 %v1107, 64
        %v1169 = vpop.permute.xlu0 %1168
        %1170 = vrot.lane.b32.xlu0 %v1109, 64
        %v1171 = vpop.permute.xlu0 %1170
        %1172 = vrot.lane.b32.xlu0 %v1112, 64
        %v1173 = vpop.permute.xlu0 %1172
        %1174 = vrot.lane.b32.xlu0 %v1114, 64
        %v1175 = vpop.permute.xlu0 %1174
        %1176 = vrot.lane.b32.xlu0 %v1117, 64
        %v1177 = vpop.permute.xlu0 %1176
        %1178 = vrot.lane.b32.xlu0 %v1119, 64
        %v1179 = vpop.permute.xlu0 %1178
        %1180 = vrot.lane.b32.xlu0 %v1122, 64
        %v1181 = vpop.permute.xlu0 %1180
        %1182 = vrot.lane.b32.xlu0 %v1124, 64
        %v1183 = vpop.permute.xlu0 %1182
        %1184 = vrot.lane.b32.xlu0 %v1127, 64
        %v1185 = vpop.permute.xlu0 %1184
        %1186 = vrot.lane.b32.xlu0 %v1129, 64
        %v1187 = vpop.permute.xlu0 %1186
        %1188 = vrot.lane.b32.xlu0 %v1132, 64
        %v1189 = vpop.permute.xlu0 %1188
        %1190 = vrot.lane.b32.xlu0 %v1134, 64
        %v1191 = vpop.permute.xlu0 %1190
        %1192 = vrot.lane.b32.xlu0 %v1137, 64
        %v1193 = vpop.permute.xlu0 %1192
        %1194 = vrot.lane.b32.xlu0 %v1139, 64
        %v1195 = vpop.permute.xlu0 %1194
        %vm1224 = vcmask 261120
        %v1225 = vsel %vm1224, %v830, %v986
        %v1226 = vsel %vm1224, %v831, %v988
        %v1227 = vsel %vm1224, %v833, %v990
        %v1228 = vsel %vm1224, %v834, %v992
        %v1229 = vsel %vm1224, %v836, %v994
        %v1230 = vsel %vm1224, %v837, %v996
        %v1231 = vsel %vm1224, %v839, %v998
        %v1232 = vsel %vm1224, %v840, %v1000
        %v1233 = vsel %vm1224, %v842, %v1002
        %v1234 = vsel %vm1224, %v843, %v1004
        %v1235 = vsel %vm1224, %v845, %v1006
        %v1236 = vsel %vm1224, %v846, %v1008
        %v1237 = vsel %vm1224, %v848, %v1010
        %v1238 = vsel %vm1224, %v849, %v1012
        %v1239 = vsel %vm1224, %v851, %v1014
        %v1240 = vsel %vm1224, %v852, %v1016
        %v1241 = vsel %vm1224, %v854, %v1018
        %v1242 = vsel %vm1224, %v855, %v1020
        %v1243 = vsel %vm1224, %v857, %v1022
        %v1244 = vsel %vm1224, %v858, %v1024
        %v1245 = vsel %vm1224, %v860, %v1026
        %v1246 = vsel %vm1224, %v861, %v1028
        %v1247 = vsel %vm1224, %v863, %v1030
        %v1248 = vsel %vm1224, %v864, %v1032
        %v1249 = vsel %vm1224, %v866, %v1034
        %v1250 = vsel %vm1224, %v867, %v1036
        %v1251 = vsel %vm1224, %v869, %v1038
        %v1252 = vsel %vm1224, %v870, %v1040
        %vm1253 = vcmask 523264
        %v1254 = vsel %vm1253, %v1225, %v1141
        %v1255 = vsel %vm1253, %v1226, %v1143
        %v1256 = vsel %vm1253, %v1227, %v1145
        %v1257 = vsel %vm1253, %v1228, %v1147
        %v1258 = vsel %vm1253, %v1229, %v1149
        %v1259 = vsel %vm1253, %v1230, %v1151
        %v1260 = vsel %vm1253, %v1231, %v1153
        %v1261 = vsel %vm1253, %v1232, %v1155
        %v1262 = vsel %vm1253, %v1233, %v1157
        %v1263 = vsel %vm1253, %v1234, %v1159
        %v1264 = vsel %vm1253, %v1235, %v1161
        %v1265 = vsel %vm1253, %v1236, %v1163
        %v1266 = vsel %vm1253, %v1237, %v1165
        %v1267 = vsel %vm1253, %v1238, %v1167
        %v1268 = vsel %vm1253, %v1239, %v1169
        %v1269 = vsel %vm1253, %v1240, %v1171
        %v1270 = vsel %vm1253, %v1241, %v1173
        %v1271 = vsel %vm1253, %v1242, %v1175
        %v1272 = vsel %vm1253, %v1243, %v1177
        %v1273 = vsel %vm1253, %v1244, %v1179
        %v1274 = vsel %vm1253, %v1245, %v1181
        %v1275 = vsel %vm1253, %v1246, %v1183
        %v1276 = vsel %vm1253, %v1247, %v1185
        %v1277 = vsel %vm1253, %v1248, %v1187
        %v1278 = vsel %vm1253, %v1249, %v1189
        %v1279 = vsel %vm1253, %v1250, %v1191
        %v1280 = vsel %vm1253, %v1251, %v1193
        %v1281 = vsel %vm1253, %v1252, %v1195
        %s1282 = sadd.s32 %s827, 1
        %s1283 = smul.u32 %s1282, 24
        %s1284 = scalar_lea.vmem [#allocation2], %s1283
        %v1285 = vld [vmem:[%s1284] sm:$0xff]
        %v1286 = vld [vmem:[%s1284 + $0x8] sm:$0xff]
        %v1287 = vld [vmem:[%s1284 + $0x10] sm:$0x3]
        %v1288 = vld [vmem:[%s1284 + $0x18] sm:$0xff]
        %v1289 = vld [vmem:[%s1284 + $0x20] sm:$0xff]
        %v1290 = vld [vmem:[%s1284 + $0x28] sm:$0x3]
        %v1291 = vld [vmem:[%s1284 + $0x30] sm:$0xff]
        %v1292 = vld [vmem:[%s1284 + $0x38] sm:$0xff]
        %v1293 = vld [vmem:[%s1284 + $0x40] sm:$0x3]
        %v1294 = vld [vmem:[%s1284 + $0x48] sm:$0xff]
        %v1295 = vld [vmem:[%s1284 + $0x50] sm:$0xff]
        %v1296 = vld [vmem:[%s1284 + $0x58] sm:$0x3]
        %v1297 = vld [vmem:[%s1284 + $0x60] sm:$0xff]
        %v1298 = vld [vmem:[%s1284 + $0x68] sm:$0xff]
        %v1299 = vld [vmem:[%s1284 + $0x70] sm:$0x3]
        %v1300 = vld [vmem:[%s1284 + $0x78] sm:$0xff]
        %v1301 = vld [vmem:[%s1284 + $0x80] sm:$0xff]
        %v1302 = vld [vmem:[%s1284 + $0x88] sm:$0x3]
        %v1303 = vld [vmem:[%s1284 + $0x90] sm:$0xff]
        %v1304 = vld [vmem:[%s1284 + $0x98] sm:$0xff]
        %v1305 = vld [vmem:[%s1284 + $0xa0] sm:$0x3]
        %v1306 = vld [vmem:[%s1284 + $0xa8] sm:$0xff]
        %v1307 = vld [vmem:[%s1284 + $0xb0] sm:$0xff]
        %v1308 = vld [vmem:[%s1284 + $0xb8] sm:$0x3]
        %v1309 = vld [vmem:[%s1284 + $0xc0] sm:$0xff]
        %v1310 = vld [vmem:[%s1284 + $0xc8] sm:$0xff]
        %v1311 = vld [vmem:[%s1284 + $0xd0] sm:$0x3]
        %v1312 = vld [vmem:[%s1284 + $0xd8] sm:$0xff]
        %v1313 = vld [vmem:[%s1284 + $0xe0] sm:$0xff]
        %v1314 = vld [vmem:[%s1284 + $0xe8] sm:$0x3]
        %v1315 = vld [vmem:[%s1284 + $0xf0] sm:$0xff]
        %v1316 = vld [vmem:[%s1284 + $0xf8] sm:$0xff]
        %v1317 = vld [vmem:[%s1284 + $0x100] sm:$0x3]
        %v1318 = vld [vmem:[%s1284 + $0x108] sm:$0xff]
        %v1319 = vld [vmem:[%s1284 + $0x110] sm:$0xff]
        %v1320 = vld [vmem:[%s1284 + $0x118] sm:$0x3]
        %v1321 = vld [vmem:[%s1284 + $0x120] sm:$0xff]
        %v1322 = vld [vmem:[%s1284 + $0x128] sm:$0xff]
        %v1323 = vld [vmem:[%s1284 + $0x130] sm:$0x3]
        %v1324 = vld [vmem:[%s1284 + $0x138] sm:$0xff]
        %v1325 = vld [vmem:[%s1284 + $0x140] sm:$0xff]
        %v1326 = vld [vmem:[%s1284 + $0x148] sm:$0x3]
        %v1369 = vrot.slane %v1285, 1
        %v1370 = vrot.slane %v1286, 1
        %v1371 = vsel %vm914, %v1369, %v1370
        %v1372 = vrot.slane %v1287, 1
        %v1373 = vsel %vm914, %v1370, %v1372
        %v1374 = vrot.slane %v1288, 1
        %v1375 = vrot.slane %v1289, 1
        %v1376 = vsel %vm914, %v1374, %v1375
        %v1377 = vrot.slane %v1290, 1
        %v1378 = vsel %vm914, %v1375, %v1377
        %v1379 = vrot.slane %v1291, 1
        %v1380 = vrot.slane %v1292, 1
        %v1381 = vsel %vm914, %v1379, %v1380
        %v1382 = vrot.slane %v1293, 1
        %v1383 = vsel %vm914, %v1380, %v1382
        %v1384 = vrot.slane %v1294, 1
        %v1385 = vrot.slane %v1295, 1
        %v1386 = vsel %vm914, %v1384, %v1385
        %v1387 = vrot.slane %v1296, 1
        %v1388 = vsel %vm914, %v1385, %v1387
        %v1389 = vrot.slane %v1297, 1
        %v1390 = vrot.slane %v1298, 1
        %v1391 = vsel %vm914, %v1389, %v1390
        %v1392 = vrot.slane %v1299, 1
        %v1393 = vsel %vm914, %v1390, %v1392
        %v1394 = vrot.slane %v1300, 1
        %v1395 = vrot.slane %v1301, 1
        %v1396 = vsel %vm914, %v1394, %v1395
        %v1397 = vrot.slane %v1302, 1
        %v1398 = vsel %vm914, %v1395, %v1397
        %v1399 = vrot.slane %v1303, 1
        %v1400 = vrot.slane %v1304, 1
        %v1401 = vsel %vm914, %v1399, %v1400
        %v1402 = vrot.slane %v1305, 1
        %v1403 = vsel %vm914, %v1400, %v1402
        %v1404 = vrot.slane %v1306, 1
        %v1405 = vrot.slane %v1307, 1
        %v1406 = vsel %vm914, %v1404, %v1405
        %v1407 = vrot.slane %v1308, 1
        %v1408 = vsel %vm914, %v1405, %v1407
        %v1409 = vrot.slane %v1309, 1
        %v1410 = vrot.slane %v1310, 1
        %v1411 = vsel %vm914, %v1409, %v1410
        %v1412 = vrot.slane %v1311, 1
        %v1413 = vsel %vm914, %v1410, %v1412
        %v1414 = vrot.slane %v1312, 1
        %v1415 = vrot.slane %v1313, 1
        %v1416 = vsel %vm914, %v1414, %v1415
        %v1417 = vrot.slane %v1314, 1
        %v1418 = vsel %vm914, %v1415, %v1417
        %v1419 = vrot.slane %v1315, 1
        %v1420 = vrot.slane %v1316, 1
        %v1421 = vsel %vm914, %v1419, %v1420
        %v1422 = vrot.slane %v1317, 1
        %v1423 = vsel %vm914, %v1420, %v1422
        %v1424 = vrot.slane %v1318, 1
        %v1425 = vrot.slane %v1319, 1
        %v1426 = vsel %vm914, %v1424, %v1425
        %v1427 = vrot.slane %v1320, 1
        %v1428 = vsel %vm914, %v1425, %v1427
        %v1429 = vrot.slane %v1321, 1
        %v1430 = vrot.slane %v1322, 1
        %v1431 = vsel %vm914, %v1429, %v1430
        %v1432 = vrot.slane %v1323, 1
        %v1433 = vsel %vm914, %v1430, %v1432
        %v1434 = vrot.slane %v1324, 1
        %v1435 = vrot.slane %v1325, 1
        %v1436 = vsel %vm914, %v1434, %v1435
        %v1437 = vrot.slane %v1326, 1
        %v1438 = vsel %vm914, %v1435, %v1437
        %1439 = vrot.lane.b32.xlu0 %v1371, 32
        %v1440 = vpop.permute.xlu0 %1439
        %1441 = vrot.lane.b32.xlu0 %v1373, 32
        %v1442 = vpop.permute.xlu0 %1441
        %1443 = vrot.lane.b32.xlu0 %v1376, 32
        %v1444 = vpop.permute.xlu0 %1443
        %1445 = vrot.lane.b32.xlu0 %v1378, 32
        %v1446 = vpop.permute.xlu0 %1445
        %1447 = vrot.lane.b32.xlu0 %v1381, 32
        %v1448 = vpop.permute.xlu0 %1447
        %1449 = vrot.lane.b32.xlu0 %v1383, 32
        %v1450 = vpop.permute.xlu0 %1449
        %1451 = vrot.lane.b32.xlu0 %v1386, 32
        %v1452 = vpop.permute.xlu0 %1451
        %1453 = vrot.lane.b32.xlu0 %v1388, 32
        %v1454 = vpop.permute.xlu0 %1453
        %1455 = vrot.lane.b32.xlu0 %v1391, 32
        %v1456 = vpop.permute.xlu0 %1455
        %1457 = vrot.lane.b32.xlu0 %v1393, 32
        %v1458 = vpop.permute.xlu0 %1457
        %1459 = vrot.lane.b32.xlu0 %v1396, 32
        %v1460 = vpop.permute.xlu0 %1459
        %1461 = vrot.lane.b32.xlu0 %v1398, 32
        %v1462 = vpop.permute.xlu0 %1461
        %1463 = vrot.lane.b32.xlu0 %v1401, 32
        %v1464 = vpop.permute.xlu0 %1463
        %1465 = vrot.lane.b32.xlu0 %v1403, 32
        %v1466 = vpop.permute.xlu0 %1465
        %1467 = vrot.lane.b32.xlu0 %v1406, 32
        %v1468 = vpop.permute.xlu0 %1467
        %1469 = vrot.lane.b32.xlu0 %v1408, 32
        %v1470 = vpop.permute.xlu0 %1469
        %1471 = vrot.lane.b32.xlu0 %v1411, 32
        %v1472 = vpop.permute.xlu0 %1471
        %1473 = vrot.lane.b32.xlu0 %v1413, 32
        %v1474 = vpop.permute.xlu0 %1473
        %1475 = vrot.lane.b32.xlu0 %v1416, 32
        %v1476 = vpop.permute.xlu0 %1475
        %1477 = vrot.lane.b32.xlu0 %v1418, 32
        %v1478 = vpop.permute.xlu0 %1477
        %1479 = vrot.lane.b32.xlu0 %v1421, 32
        %v1480 = vpop.permute.xlu0 %1479
        %1481 = vrot.lane.b32.xlu0 %v1423, 32
        %v1482 = vpop.permute.xlu0 %1481
        %1483 = vrot.lane.b32.xlu0 %v1426, 32
        %v1484 = vpop.permute.xlu0 %1483
        %1485 = vrot.lane.b32.xlu0 %v1428, 32
        %v1486 = vpop.permute.xlu0 %1485
        %1487 = vrot.lane.b32.xlu0 %v1431, 32
        %v1488 = vpop.permute.xlu0 %1487
        %1489 = vrot.lane.b32.xlu0 %v1433, 32
        %v1490 = vpop.permute.xlu0 %1489
        %1491 = vrot.lane.b32.xlu0 %v1436, 32
        %v1492 = vpop.permute.xlu0 %1491
        %1493 = vrot.lane.b32.xlu0 %v1438, 32
        %v1494 = vpop.permute.xlu0 %1493
        %v1523 = vrot.slane %v1285, 2
        %v1524 = vrot.slane %v1286, 2
        %v1525 = vsel %vm1069, %v1523, %v1524
        %v1526 = vrot.slane %v1287, 2
        %v1527 = vsel %vm1069, %v1524, %v1526
        %v1528 = vrot.slane %v1288, 2
        %v1529 = vrot.slane %v1289, 2
        %v1530 = vsel %vm1069, %v1528, %v1529
        %v1531 = vrot.slane %v1290, 2
        %v1532 = vsel %vm1069, %v1529, %v1531
        %v1533 = vrot.slane %v1291, 2
        %v1534 = vrot.slane %v1292, 2
        %v1535 = vsel %vm1069, %v1533, %v1534
        %v1536 = vrot.slane %v1293, 2
        %v1537 = vsel %vm1069, %v1534, %v1536
        %v1538 = vrot.slane %v1294, 2
        %v1539 = vrot.slane %v1295, 2
        %v1540 = vsel %vm1069, %v1538, %v1539
        %v1541 = vrot.slane %v1296, 2
        %v1542 = vsel %vm1069, %v1539, %v1541
        %v1543 = vrot.slane %v1297, 2
        %v1544 = vrot.slane %v1298, 2
        %v1545 = vsel %vm1069, %v1543, %v1544
        %v1546 = vrot.slane %v1299, 2
        %v1547 = vsel %vm1069, %v1544, %v1546
        %v1548 = vrot.slane %v1300, 2
        %v1549 = vrot.slane %v1301, 2
        %v1550 = vsel %vm1069, %v1548, %v1549
        %v1551 = vrot.slane %v1302, 2
        %v1552 = vsel %vm1069, %v1549, %v1551
        %v1553 = vrot.slane %v1303, 2
        %v1554 = vrot.slane %v1304, 2
        %v1555 = vsel %vm1069, %v1553, %v1554
        %v1556 = vrot.slane %v1305, 2
        %v1557 = vsel %vm1069, %v1554, %v1556
        %v1558 = vrot.slane %v1306, 2
        %v1559 = vrot.slane %v1307, 2
        %v1560 = vsel %vm1069, %v1558, %v1559
        %v1561 = vrot.slane %v1308, 2
        %v1562 = vsel %vm1069, %v1559, %v1561
        %v1563 = vrot.slane %v1309, 2
        %v1564 = vrot.slane %v1310, 2
        %v1565 = vsel %vm1069, %v1563, %v1564
        %v1566 = vrot.slane %v1311, 2
        %v1567 = vsel %vm1069, %v1564, %v1566
        %v1568 = vrot.slane %v1312, 2
        %v1569 = vrot.slane %v1313, 2
        %v1570 = vsel %vm1069, %v1568, %v1569
        %v1571 = vrot.slane %v1314, 2
        %v1572 = vsel %vm1069, %v1569, %v1571
        %v1573 = vrot.slane %v1315, 2
        %v1574 = vrot.slane %v1316, 2
        %v1575 = vsel %vm1069, %v1573, %v1574
        %v1576 = vrot.slane %v1317, 2
        %v1577 = vsel %vm1069, %v1574, %v1576
        %v1578 = vrot.slane %v1318, 2
        %v1579 = vrot.slane %v1319, 2
        %v1580 = vsel %vm1069, %v1578, %v1579
        %v1581 = vrot.slane %v1320, 2
        %v1582 = vsel %vm1069, %v1579, %v1581
        %v1583 = vrot.slane %v1321, 2
        %v1584 = vrot.slane %v1322, 2
        %v1585 = vsel %vm1069, %v1583, %v1584
        %v1586 = vrot.slane %v1323, 2
        %v1587 = vsel %vm1069, %v1584, %v1586
        %v1588 = vrot.slane %v1324, 2
        %v1589 = vrot.slane %v1325, 2
        %v1590 = vsel %vm1069, %v1588, %v1589
        %v1591 = vrot.slane %v1326, 2
        %v1592 = vsel %vm1069, %v1589, %v1591
        %1593 = vrot.lane.b32.xlu0 %v1525, 64
        %v1594 = vpop.permute.xlu0 %1593
        %1595 = vrot.lane.b32.xlu0 %v1527, 64
        %v1596 = vpop.permute.xlu0 %1595
        %1597 = vrot.lane.b32.xlu0 %v1530, 64
        %v1598 = vpop.permute.xlu0 %1597
        %1599 = vrot.lane.b32.xlu0 %v1532, 64
        %v1600 = vpop.permute.xlu0 %1599
        %1601 = vrot.lane.b32.xlu0 %v1535, 64
        %v1602 = vpop.permute.xlu0 %1601
        %1603 = vrot.lane.b32.xlu0 %v1537, 64
        %v1604 = vpop.permute.xlu0 %1603
        %1605 = vrot.lane.b32.xlu0 %v1540, 64
        %v1606 = vpop.permute.xlu0 %1605
        %1607 = vrot.lane.b32.xlu0 %v1542, 64
        %v1608 = vpop.permute.xlu0 %1607
        %1609 = vrot.lane.b32.xlu0 %v1545, 64
        %v1610 = vpop.permute.xlu0 %1609
        %1611 = vrot.lane.b32.xlu0 %v1547, 64
        %v1612 = vpop.permute.xlu0 %1611
        %1613 = vrot.lane.b32.xlu0 %v1550, 64
        %v1614 = vpop.permute.xlu0 %1613
        %1615 = vrot.lane.b32.xlu0 %v1552, 64
        %v1616 = vpop.permute.xlu0 %1615
        %1617 = vrot.lane.b32.xlu0 %v1555, 64
        %v1618 = vpop.permute.xlu0 %1617
        %1619 = vrot.lane.b32.xlu0 %v1557, 64
        %v1620 = vpop.permute.xlu0 %1619
        %1621 = vrot.lane.b32.xlu0 %v1560, 64
        %v1622 = vpop.permute.xlu0 %1621
        %1623 = vrot.lane.b32.xlu0 %v1562, 64
        %v1624 = vpop.permute.xlu0 %1623
        %1625 = vrot.lane.b32.xlu0 %v1565, 64
        %v1626 = vpop.permute.xlu0 %1625
        %1627 = vrot.lane.b32.xlu0 %v1567, 64
        %v1628 = vpop.permute.xlu0 %1627
        %1629 = vrot.lane.b32.xlu0 %v1570, 64
        %v1630 = vpop.permute.xlu0 %1629
        %1631 = vrot.lane.b32.xlu0 %v1572, 64
        %v1632 = vpop.permute.xlu0 %1631
        %1633 = vrot.lane.b32.xlu0 %v1575, 64
        %v1634 = vpop.permute.xlu0 %1633
        %1635 = vrot.lane.b32.xlu0 %v1577, 64
        %v1636 = vpop.permute.xlu0 %1635
        %1637 = vrot.lane.b32.xlu0 %v1580, 64
        %v1638 = vpop.permute.xlu0 %1637
        %1639 = vrot.lane.b32.xlu0 %v1582, 64
        %v1640 = vpop.permute.xlu0 %1639
        %1641 = vrot.lane.b32.xlu0 %v1585, 64
        %v1642 = vpop.permute.xlu0 %1641
        %1643 = vrot.lane.b32.xlu0 %v1587, 64
        %v1644 = vpop.permute.xlu0 %1643
        %1645 = vrot.lane.b32.xlu0 %v1590, 64
        %v1646 = vpop.permute.xlu0 %1645
        %1647 = vrot.lane.b32.xlu0 %v1592, 64
        %v1648 = vpop.permute.xlu0 %1647
        %v1677 = vsel %vm1224, %v1285, %v1440
        %v1678 = vsel %vm1224, %v1286, %v1442
        %v1679 = vsel %vm1224, %v1288, %v1444
        %v1680 = vsel %vm1224, %v1289, %v1446
        %v1681 = vsel %vm1224, %v1291, %v1448
        %v1682 = vsel %vm1224, %v1292, %v1450
        %v1683 = vsel %vm1224, %v1294, %v1452
        %v1684 = vsel %vm1224, %v1295, %v1454
        %v1685 = vsel %vm1224, %v1297, %v1456
        %v1686 = vsel %vm1224, %v1298, %v1458
        %v1687 = vsel %vm1224, %v1300, %v1460
        %v1688 = vsel %vm1224, %v1301, %v1462
        %v1689 = vsel %vm1224, %v1303, %v1464
        %v1690 = vsel %vm1224, %v1304, %v1466
        %v1691 = vsel %vm1224, %v1306, %v1468
        %v1692 = vsel %vm1224, %v1307, %v1470
        %v1693 = vsel %vm1224, %v1309, %v1472
        %v1694 = vsel %vm1224, %v1310, %v1474
        %v1695 = vsel %vm1224, %v1312, %v1476
        %v1696 = vsel %vm1224, %v1313, %v1478
        %v1697 = vsel %vm1224, %v1315, %v1480
        %v1698 = vsel %vm1224, %v1316, %v1482
        %v1699 = vsel %vm1224, %v1318, %v1484
        %v1700 = vsel %vm1224, %v1319, %v1486
        %v1701 = vsel %vm1224, %v1321, %v1488
        %v1702 = vsel %vm1224, %v1322, %v1490
        %v1703 = vsel %vm1224, %v1324, %v1492
        %v1704 = vsel %vm1224, %v1325, %v1494
        %v1705 = vsel %vm1253, %v1677, %v1594
        %v1706 = vsel %vm1253, %v1678, %v1596
        %v1707 = vsel %vm1253, %v1679, %v1598
        %v1708 = vsel %vm1253, %v1680, %v1600
        %v1709 = vsel %vm1253, %v1681, %v1602
        %v1710 = vsel %vm1253, %v1682, %v1604
        %v1711 = vsel %vm1253, %v1683, %v1606
        %v1712 = vsel %vm1253, %v1684, %v1608
        %v1713 = vsel %vm1253, %v1685, %v1610
        %v1714 = vsel %vm1253, %v1686, %v1612
        %v1715 = vsel %vm1253, %v1687, %v1614
        %v1716 = vsel %vm1253, %v1688, %v1616
        %v1717 = vsel %vm1253, %v1689, %v1618
        %v1718 = vsel %vm1253, %v1690, %v1620
        %v1719 = vsel %vm1253, %v1691, %v1622
        %v1720 = vsel %vm1253, %v1692, %v1624
        %v1721 = vsel %vm1253, %v1693, %v1626
        %v1722 = vsel %vm1253, %v1694, %v1628
        %v1723 = vsel %vm1253, %v1695, %v1630
        %v1724 = vsel %vm1253, %v1696, %v1632
        %v1725 = vsel %vm1253, %v1697, %v1634
        %v1726 = vsel %vm1253, %v1698, %v1636
        %v1727 = vsel %vm1253, %v1699, %v1638
        %v1728 = vsel %vm1253, %v1700, %v1640
        %v1729 = vsel %vm1253, %v1701, %v1642
        %v1730 = vsel %vm1253, %v1702, %v1644
        %v1731 = vsel %vm1253, %v1703, %v1646
        %v1732 = vsel %vm1253, %v1704, %v1648
        %s1733 = sadd.s32 %s827, 2
        %s1734 = smul.u32 %s1733, 24
        %s1735 = scalar_lea.vmem [#allocation2], %s1734
        %v1736 = vld [vmem:[%s1735] sm:$0xff]
        %v1737 = vld [vmem:[%s1735 + $0x8] sm:$0xff]
        %v1738 = vld [vmem:[%s1735 + $0x10] sm:$0x3]
        %v1739 = vld [vmem:[%s1735 + $0x18] sm:$0xff]
        %v1740 = vld [vmem:[%s1735 + $0x20] sm:$0xff]
        %v1741 = vld [vmem:[%s1735 + $0x28] sm:$0x3]
        %v1742 = vld [vmem:[%s1735 + $0x30] sm:$0xff]
        %v1743 = vld [vmem:[%s1735 + $0x38] sm:$0xff]
        %v1744 = vld [vmem:[%s1735 + $0x40] sm:$0x3]
        %v1745 = vld [vmem:[%s1735 + $0x48] sm:$0xff]
        %v1746 = vld [vmem:[%s1735 + $0x50] sm:$0xff]
        %v1747 = vld [vmem:[%s1735 + $0x58] sm:$0x3]
        %v1748 = vld [vmem:[%s1735 + $0x60] sm:$0xff]
        %v1749 = vld [vmem:[%s1735 + $0x68] sm:$0xff]
        %v1750 = vld [vmem:[%s1735 + $0x70] sm:$0x3]
        %v1751 = vld [vmem:[%s1735 + $0x78] sm:$0xff]
        %v1752 = vld [vmem:[%s1735 + $0x80] sm:$0xff]
        %v1753 = vld [vmem:[%s1735 + $0x88] sm:$0x3]
        %v1754 = vld [vmem:[%s1735 + $0x90] sm:$0xff]
        %v1755 = vld [vmem:[%s1735 + $0x98] sm:$0xff]
        %v1756 = vld [vmem:[%s1735 + $0xa0] sm:$0x3]
        %v1757 = vld [vmem:[%s1735 + $0xa8] sm:$0xff]
        %v1758 = vld [vmem:[%s1735 + $0xb0] sm:$0xff]
        %v1759 = vld [vmem:[%s1735 + $0xb8] sm:$0x3]
        %v1760 = vld [vmem:[%s1735 + $0xc0] sm:$0xff]
        %v1761 = vld [vmem:[%s1735 + $0xc8] sm:$0xff]
        %v1762 = vld [vmem:[%s1735 + $0xd0] sm:$0x3]
        %v1763 = vld [vmem:[%s1735 + $0xd8] sm:$0xff]
        %v1764 = vld [vmem:[%s1735 + $0xe0] sm:$0xff]
        %v1765 = vld [vmem:[%s1735 + $0xe8] sm:$0x3]
        %v1766 = vld [vmem:[%s1735 + $0xf0] sm:$0xff]
        %v1767 = vld [vmem:[%s1735 + $0xf8] sm:$0xff]
        %v1768 = vld [vmem:[%s1735 + $0x100] sm:$0x3]
        %v1769 = vld [vmem:[%s1735 + $0x108] sm:$0xff]
        %v1770 = vld [vmem:[%s1735 + $0x110] sm:$0xff]
        %v1771 = vld [vmem:[%s1735 + $0x118] sm:$0x3]
        %v1772 = vld [vmem:[%s1735 + $0x120] sm:$0xff]
        %v1773 = vld [vmem:[%s1735 + $0x128] sm:$0xff]
        %v1774 = vld [vmem:[%s1735 + $0x130] sm:$0x3]
        %v1775 = vld [vmem:[%s1735 + $0x138] sm:$0xff]
        %v1776 = vld [vmem:[%s1735 + $0x140] sm:$0xff]
        %v1777 = vld [vmem:[%s1735 + $0x148] sm:$0x3]
        %v1820 = vrot.slane %v1736, 1
        %v1821 = vrot.slane %v1737, 1
        %v1822 = vsel %vm914, %v1820, %v1821
        %v1823 = vrot.slane %v1738, 1
        %v1824 = vsel %vm914, %v1821, %v1823
        %v1825 = vrot.slane %v1739, 1
        %v1826 = vrot.slane %v1740, 1
        %v1827 = vsel %vm914, %v1825, %v1826
        %v1828 = vrot.slane %v1741, 1
        %v1829 = vsel %vm914, %v1826, %v1828
        %v1830 = vrot.slane %v1742, 1
        %v1831 = vrot.slane %v1743, 1
        %v1832 = vsel %vm914, %v1830, %v1831
        %v1833 = vrot.slane %v1744, 1
        %v1834 = vsel %vm914, %v1831, %v1833
        %v1835 = vrot.slane %v1745, 1
        %v1836 = vrot.slane %v1746, 1
        %v1837 = vsel %vm914, %v1835, %v1836
        %v1838 = vrot.slane %v1747, 1
        %v1839 = vsel %vm914, %v1836, %v1838
        %v1840 = vrot.slane %v1748, 1
        %v1841 = vrot.slane %v1749, 1
        %v1842 = vsel %vm914, %v1840, %v1841
        %v1843 = vrot.slane %v1750, 1
        %v1844 = vsel %vm914, %v1841, %v1843
        %v1845 = vrot.slane %v1751, 1
        %v1846 = vrot.slane %v1752, 1
        %v1847 = vsel %vm914, %v1845, %v1846
        %v1848 = vrot.slane %v1753, 1
        %v1849 = vsel %vm914, %v1846, %v1848
        %v1850 = vrot.slane %v1754, 1
        %v1851 = vrot.slane %v1755, 1
        %v1852 = vsel %vm914, %v1850, %v1851
        %v1853 = vrot.slane %v1756, 1
        %v1854 = vsel %vm914, %v1851, %v1853
        %v1855 = vrot.slane %v1757, 1
        %v1856 = vrot.slane %v1758, 1
        %v1857 = vsel %vm914, %v1855, %v1856
        %v1858 = vrot.slane %v1759, 1
        %v1859 = vsel %vm914, %v1856, %v1858
        %v1860 = vrot.slane %v1760, 1
        %v1861 = vrot.slane %v1761, 1
        %v1862 = vsel %vm914, %v1860, %v1861
        %v1863 = vrot.slane %v1762, 1
        %v1864 = vsel %vm914, %v1861, %v1863
        %v1865 = vrot.slane %v1763, 1
        %v1866 = vrot.slane %v1764, 1
        %v1867 = vsel %vm914, %v1865, %v1866
        %v1868 = vrot.slane %v1765, 1
        %v1869 = vsel %vm914, %v1866, %v1868
        %v1870 = vrot.slane %v1766, 1
        %v1871 = vrot.slane %v1767, 1
        %v1872 = vsel %vm914, %v1870, %v1871
        %v1873 = vrot.slane %v1768, 1
        %v1874 = vsel %vm914, %v1871, %v1873
        %v1875 = vrot.slane %v1769, 1
        %v1876 = vrot.slane %v1770, 1
        %v1877 = vsel %vm914, %v1875, %v1876
        %v1878 = vrot.slane %v1771, 1
        %v1879 = vsel %vm914, %v1876, %v1878
        %v1880 = vrot.slane %v1772, 1
        %v1881 = vrot.slane %v1773, 1
        %v1882 = vsel %vm914, %v1880, %v1881
        %v1883 = vrot.slane %v1774, 1
        %v1884 = vsel %vm914, %v1881, %v1883
        %v1885 = vrot.slane %v1775, 1
        %v1886 = vrot.slane %v1776, 1
        %v1887 = vsel %vm914, %v1885, %v1886
        %v1888 = vrot.slane %v1777, 1
        %v1889 = vsel %vm914, %v1886, %v1888
        %1890 = vrot.lane.b32.xlu0 %v1822, 32
        %v1891 = vpop.permute.xlu0 %1890
        %1892 = vrot.lane.b32.xlu0 %v1824, 32
        %v1893 = vpop.permute.xlu0 %1892
        %1894 = vrot.lane.b32.xlu0 %v1827, 32
        %v1895 = vpop.permute.xlu0 %1894
        %1896 = vrot.lane.b32.xlu0 %v1829, 32
        %v1897 = vpop.permute.xlu0 %1896
        %1898 = vrot.lane.b32.xlu0 %v1832, 32
        %v1899 = vpop.permute.xlu0 %1898
        %1900 = vrot.lane.b32.xlu0 %v1834, 32
        %v1901 = vpop.permute.xlu0 %1900
        %1902 = vrot.lane.b32.xlu0 %v1837, 32
        %v1903 = vpop.permute.xlu0 %1902
        %1904 = vrot.lane.b32.xlu0 %v1839, 32
        %v1905 = vpop.permute.xlu0 %1904
        %1906 = vrot.lane.b32.xlu0 %v1842, 32
        %v1907 = vpop.permute.xlu0 %1906
        %1908 = vrot.lane.b32.xlu0 %v1844, 32
        %v1909 = vpop.permute.xlu0 %1908
        %1910 = vrot.lane.b32.xlu0 %v1847, 32
        %v1911 = vpop.permute.xlu0 %1910
        %1912 = vrot.lane.b32.xlu0 %v1849, 32
        %v1913 = vpop.permute.xlu0 %1912
        %1914 = vrot.lane.b32.xlu0 %v1852, 32
        %v1915 = vpop.permute.xlu0 %1914
        %1916 = vrot.lane.b32.xlu0 %v1854, 32
        %v1917 = vpop.permute.xlu0 %1916
        %1918 = vrot.lane.b32.xlu0 %v1857, 32
        %v1919 = vpop.permute.xlu0 %1918
        %1920 = vrot.lane.b32.xlu0 %v1859, 32
        %v1921 = vpop.permute.xlu0 %1920
        %1922 = vrot.lane.b32.xlu0 %v1862, 32
        %v1923 = vpop.permute.xlu0 %1922
        %1924 = vrot.lane.b32.xlu0 %v1864, 32
        %v1925 = vpop.permute.xlu0 %1924
        %1926 = vrot.lane.b32.xlu0 %v1867, 32
        %v1927 = vpop.permute.xlu0 %1926
        %1928 = vrot.lane.b32.xlu0 %v1869, 32
        %v1929 = vpop.permute.xlu0 %1928
        %1930 = vrot.lane.b32.xlu0 %v1872, 32
        %v1931 = vpop.permute.xlu0 %1930
        %1932 = vrot.lane.b32.xlu0 %v1874, 32
        %v1933 = vpop.permute.xlu0 %1932
        %1934 = vrot.lane.b32.xlu0 %v1877, 32
        %v1935 = vpop.permute.xlu0 %1934
        %1936 = vrot.lane.b32.xlu0 %v1879, 32
        %v1937 = vpop.permute.xlu0 %1936
        %1938 = vrot.lane.b32.xlu0 %v1882, 32
        %v1939 = vpop.permute.xlu0 %1938
        %1940 = vrot.lane.b32.xlu0 %v1884, 32
        %v1941 = vpop.permute.xlu0 %1940
        %1942 = vrot.lane.b32.xlu0 %v1887, 32
        %v1943 = vpop.permute.xlu0 %1942
        %1944 = vrot.lane.b32.xlu0 %v1889, 32
        %v1945 = vpop.permute.xlu0 %1944
        %v1974 = vrot.slane %v1736, 2
        %v1975 = vrot.slane %v1737, 2
        %v1976 = vsel %vm1069, %v1974, %v1975
        %v1977 = vrot.slane %v1738, 2
        %v1978 = vsel %vm1069, %v1975, %v1977
        %v1979 = vrot.slane %v1739, 2
        %v1980 = vrot.slane %v1740, 2
        %v1981 = vsel %vm1069, %v1979, %v1980
        %v1982 = vrot.slane %v1741, 2
        %v1983 = vsel %vm1069, %v1980, %v1982
        %v1984 = vrot.slane %v1742, 2
        %v1985 = vrot.slane %v1743, 2
        %v1986 = vsel %vm1069, %v1984, %v1985
        %v1987 = vrot.slane %v1744, 2
        %v1988 = vsel %vm1069, %v1985, %v1987
        %v1989 = vrot.slane %v1745, 2
        %v1990 = vrot.slane %v1746, 2
        %v1991 = vsel %vm1069, %v1989, %v1990
        %v1992 = vrot.slane %v1747, 2
        %v1993 = vsel %vm1069, %v1990, %v1992
        %v1994 = vrot.slane %v1748, 2
        %v1995 = vrot.slane %v1749, 2
        %v1996 = vsel %vm1069, %v1994, %v1995
        %v1997 = vrot.slane %v1750, 2
        %v1998 = vsel %vm1069, %v1995, %v1997
        %v1999 = vrot.slane %v1751, 2
        %v2000 = vrot.slane %v1752, 2
        %v2001 = vsel %vm1069, %v1999, %v2000
        %v2002 = vrot.slane %v1753, 2
        %v2003 = vsel %vm1069, %v2000, %v2002
        %v2004 = vrot.slane %v1754, 2
        %v2005 = vrot.slane %v1755, 2
        %v2006 = vsel %vm1069, %v2004, %v2005
        %v2007 = vrot.slane %v1756, 2
        %v2008 = vsel %vm1069, %v2005, %v2007
        %v2009 = vrot.slane %v1757, 2
        %v2010 = vrot.slane %v1758, 2
        %v2011 = vsel %vm1069, %v2009, %v2010
        %v2012 = vrot.slane %v1759, 2
        %v2013 = vsel %vm1069, %v2010, %v2012
        %v2014 = vrot.slane %v1760, 2
        %v2015 = vrot.slane %v1761, 2
        %v2016 = vsel %vm1069, %v2014, %v2015
        %v2017 = vrot.slane %v1762, 2
        %v2018 = vsel %vm1069, %v2015, %v2017
        %v2019 = vrot.slane %v1763, 2
        %v2020 = vrot.slane %v1764, 2
        %v2021 = vsel %vm1069, %v2019, %v2020
        %v2022 = vrot.slane %v1765, 2
        %v2023 = vsel %vm1069, %v2020, %v2022
        %v2024 = vrot.slane %v1766, 2
        %v2025 = vrot.slane %v1767, 2
        %v2026 = vsel %vm1069, %v2024, %v2025
        %v2027 = vrot.slane %v1768, 2
        %v2028 = vsel %vm1069, %v2025, %v2027
        %v2029 = vrot.slane %v1769, 2
        %v2030 = vrot.slane %v1770, 2
        %v2031 = vsel %vm1069, %v2029, %v2030
        %v2032 = vrot.slane %v1771, 2
        %v2033 = vsel %vm1069, %v2030, %v2032
        %v2034 = vrot.slane %v1772, 2
        %v2035 = vrot.slane %v1773, 2
        %v2036 = vsel %vm1069, %v2034, %v2035
        %v2037 = vrot.slane %v1774, 2
        %v2038 = vsel %vm1069, %v2035, %v2037
        %v2039 = vrot.slane %v1775, 2
        %v2040 = vrot.slane %v1776, 2
        %v2041 = vsel %vm1069, %v2039, %v2040
        %v2042 = vrot.slane %v1777, 2
        %v2043 = vsel %vm1069, %v2040, %v2042
        %2044 = vrot.lane.b32.xlu0 %v1976, 64
        %v2045 = vpop.permute.xlu0 %2044
        %2046 = vrot.lane.b32.xlu0 %v1978, 64
        %v2047 = vpop.permute.xlu0 %2046
        %2048 = vrot.lane.b32.xlu0 %v1981, 64
        %v2049 = vpop.permute.xlu0 %2048
        %2050 = vrot.lane.b32.xlu0 %v1983, 64
        %v2051 = vpop.permute.xlu0 %2050
        %2052 = vrot.lane.b32.xlu0 %v1986, 64
        %v2053 = vpop.permute.xlu0 %2052
        %2054 = vrot.lane.b32.xlu0 %v1988, 64
        %v2055 = vpop.permute.xlu0 %2054
        %2056 = vrot.lane.b32.xlu0 %v1991, 64
        %v2057 = vpop.permute.xlu0 %2056
        %2058 = vrot.lane.b32.xlu0 %v1993, 64
        %v2059 = vpop.permute.xlu0 %2058
        %2060 = vrot.lane.b32.xlu0 %v1996, 64
        %v2061 = vpop.permute.xlu0 %2060
        %2062 = vrot.lane.b32.xlu0 %v1998, 64
        %v2063 = vpop.permute.xlu0 %2062
        %2064 = vrot.lane.b32.xlu0 %v2001, 64
        %v2065 = vpop.permute.xlu0 %2064
        %2066 = vrot.lane.b32.xlu0 %v2003, 64
        %v2067 = vpop.permute.xlu0 %2066
        %2068 = vrot.lane.b32.xlu0 %v2006, 64
        %v2069 = vpop.permute.xlu0 %2068
        %2070 = vrot.lane.b32.xlu0 %v2008, 64
        %v2071 = vpop.permute.xlu0 %2070
        %2072 = vrot.lane.b32.xlu0 %v2011, 64
        %v2073 = vpop.permute.xlu0 %2072
        %2074 = vrot.lane.b32.xlu0 %v2013, 64
        %v2075 = vpop.permute.xlu0 %2074
        %2076 = vrot.lane.b32.xlu0 %v2016, 64
        %v2077 = vpop.permute.xlu0 %2076
        %2078 = vrot.lane.b32.xlu0 %v2018, 64
        %v2079 = vpop.permute.xlu0 %2078
        %2080 = vrot.lane.b32.xlu0 %v2021, 64
        %v2081 = vpop.permute.xlu0 %2080
        %2082 = vrot.lane.b32.xlu0 %v2023, 64
        %v2083 = vpop.permute.xlu0 %2082
        %2084 = vrot.lane.b32.xlu0 %v2026, 64
        %v2085 = vpop.permute.xlu0 %2084
        %2086 = vrot.lane.b32.xlu0 %v2028, 64
        %v2087 = vpop.permute.xlu0 %2086
        %2088 = vrot.lane.b32.xlu0 %v2031, 64
        %v2089 = vpop.permute.xlu0 %2088
        %2090 = vrot.lane.b32.xlu0 %v2033, 64
        %v2091 = vpop.permute.xlu0 %2090
        %2092 = vrot.lane.b32.xlu0 %v2036, 64
        %v2093 = vpop.permute.xlu0 %2092
        %2094 = vrot.lane.b32.xlu0 %v2038, 64
        %v2095 = vpop.permute.xlu0 %2094
        %2096 = vrot.lane.b32.xlu0 %v2041, 64
        %v2097 = vpop.permute.xlu0 %2096
        %2098 = vrot.lane.b32.xlu0 %v2043, 64
        %v2099 = vpop.permute.xlu0 %2098
        %v2128 = vsel %vm1224, %v1736, %v1891
        %v2129 = vsel %vm1224, %v1737, %v1893
        %v2130 = vsel %vm1224, %v1739, %v1895
        %v2131 = vsel %vm1224, %v1740, %v1897
        %v2132 = vsel %vm1224, %v1742, %v1899
        %v2133 = vsel %vm1224, %v1743, %v1901
        %v2134 = vsel %vm1224, %v1745, %v1903
        %v2135 = vsel %vm1224, %v1746, %v1905
        %v2136 = vsel %vm1224, %v1748, %v1907
        %v2137 = vsel %vm1224, %v1749, %v1909
        %v2138 = vsel %vm1224, %v1751, %v1911
        %v2139 = vsel %vm1224, %v1752, %v1913
        %v2140 = vsel %vm1224, %v1754, %v1915
        %v2141 = vsel %vm1224, %v1755, %v1917
        %v2142 = vsel %vm1224, %v1757, %v1919
        %v2143 = vsel %vm1224, %v1758, %v1921
        %v2144 = vsel %vm1224, %v1760, %v1923
        %v2145 = vsel %vm1224, %v1761, %v1925
        %v2146 = vsel %vm1224, %v1763, %v1927
        %v2147 = vsel %vm1224, %v1764, %v1929
        %v2148 = vsel %vm1224, %v1766, %v1931
        %v2149 = vsel %vm1224, %v1767, %v1933
        %v2150 = vsel %vm1224, %v1769, %v1935
        %v2151 = vsel %vm1224, %v1770, %v1937
        %v2152 = vsel %vm1224, %v1772, %v1939
        %v2153 = vsel %vm1224, %v1773, %v1941
        %v2154 = vsel %vm1224, %v1775, %v1943
        %v2155 = vsel %vm1224, %v1776, %v1945
        %v2156 = vsel %vm1253, %v2128, %v2045
        %v2157 = vsel %vm1253, %v2129, %v2047
        %v2158 = vsel %vm1253, %v2130, %v2049
        %v2159 = vsel %vm1253, %v2131, %v2051
        %v2160 = vsel %vm1253, %v2132, %v2053
        %v2161 = vsel %vm1253, %v2133, %v2055
        %v2162 = vsel %vm1253, %v2134, %v2057
        %v2163 = vsel %vm1253, %v2135, %v2059
        %v2164 = vsel %vm1253, %v2136, %v2061
        %v2165 = vsel %vm1253, %v2137, %v2063
        %v2166 = vsel %vm1253, %v2138, %v2065
        %v2167 = vsel %vm1253, %v2139, %v2067
        %v2168 = vsel %vm1253, %v2140, %v2069
        %v2169 = vsel %vm1253, %v2141, %v2071
        %v2170 = vsel %vm1253, %v2142, %v2073
        %v2171 = vsel %vm1253, %v2143, %v2075
        %v2172 = vsel %vm1253, %v2144, %v2077
        %v2173 = vsel %vm1253, %v2145, %v2079
        %v2174 = vsel %vm1253, %v2146, %v2081
        %v2175 = vsel %vm1253, %v2147, %v2083
        %v2176 = vsel %vm1253, %v2148, %v2085
        %v2177 = vsel %vm1253, %v2149, %v2087
        %v2178 = vsel %vm1253, %v2150, %v2089
        %v2179 = vsel %vm1253, %v2151, %v2091
        %v2180 = vsel %vm1253, %v2152, %v2093
        %v2181 = vsel %vm1253, %v2153, %v2095
        %v2182 = vsel %vm1253, %v2154, %v2097
        %v2183 = vsel %vm1253, %v2155, %v2099
        %v2184 = vld [vmem:[%s4] sm:$0xff]
        %v2185 = vld [vmem:[%s4 + $0x8] sm:$0xff]
        %v2186 = vld [vmem:[%s4 + $0x10] sm:$0xff]
        %v2187 = vld [vmem:[%s4 + $0x18] sm:$0xff]
        %v2188 = vld [vmem:[%s4 + $0x20] sm:$0xff]
        %v2189 = vld [vmem:[%s4 + $0x28] sm:$0xff]
        %v2190 = vld [vmem:[%s4 + $0x30] sm:$0xff]
        %v2191 = vld [vmem:[%s4 + $0x38] sm:$0xff]
        %v2192 = vld [vmem:[%s4 + $0x40] sm:$0xff]
        %v2193 = vld [vmem:[%s4 + $0x48] sm:$0xff]
        %v2194 = vld [vmem:[%s4 + $0x50] sm:$0xff]
        %v2195 = vld [vmem:[%s4 + $0x58] sm:$0xff]
        %s2196 = scalar_lea.vmem %s4, 96
        %v2197 = vld [vmem:[%s2196] sm:$0xff]
        %v2198 = vld [vmem:[%s2196 + $0x8] sm:$0xff]
        %v2199 = vld [vmem:[%s2196 + $0x10] sm:$0xff]
        %v2200 = vld [vmem:[%s2196 + $0x18] sm:$0xff]
        %v2201 = vld [vmem:[%s2196 + $0x20] sm:$0xff]
        %v2202 = vld [vmem:[%s2196 + $0x28] sm:$0xff]
        %v2203 = vld [vmem:[%s2196 + $0x30] sm:$0xff]
        %v2204 = vld [vmem:[%s2196 + $0x38] sm:$0xff]
        %v2205 = vld [vmem:[%s2196 + $0x40] sm:$0xff]
        %v2206 = vld [vmem:[%s2196 + $0x48] sm:$0xff]
        %v2207 = vld [vmem:[%s2196 + $0x50] sm:$0xff]
        %v2208 = vld [vmem:[%s2196 + $0x58] sm:$0xff]
        %vm2209 = vcmask 785408
        %v2211 = vsel %vm2209, %v1705, 0
        %v2214 = vsel %vm2209, %v1706, 0
        %v2217 = vsel %vm2209, %v1707, 0
        %v2220 = vsel %vm2209, %v1708, 0
        %v2223 = vsel %vm2209, %v1709, 0
        %v2226 = vsel %vm2209, %v1710, 0
        %v2229 = vsel %vm2209, %v1711, 0
        %v2232 = vsel %vm2209, %v1712, 0
        %v2235 = vsel %vm2209, %v1713, 0
        %v2238 = vsel %vm2209, %v1714, 0
        %v2241 = vsel %vm2209, %v1715, 0
        %v2244 = vsel %vm2209, %v1716, 0
        %v2247 = vsel %vm2209, %v1717, 0
        %v2250 = vsel %vm2209, %v1718, 0
        %v2253 = vsel %vm2209, %v1719, 0
        %v2256 = vsel %vm2209, %v1720, 0
        %v2259 = vsel %vm2209, %v1721, 0
        %v2262 = vsel %vm2209, %v1722, 0
        %v2265 = vsel %vm2209, %v1723, 0
        %v2268 = vsel %vm2209, %v1724, 0
        %v2271 = vsel %vm2209, %v1725, 0
        %v2274 = vsel %vm2209, %v1726, 0
        %v2277 = vsel %vm2209, %v1727, 0
        %v2280 = vsel %vm2209, %v1728, 0
        %v2283 = vsel %vm2209, %v1729, 0
        %v2286 = vsel %vm2209, %v1730, 0
        %v2289 = vsel %vm2209, %v1731, 0
        %v2292 = vsel %vm2209, %v1732, 0
        %2294 = vmatprep.subr.mxu0 0.0
        %2295 = vmatpush1.msra.mxu0 %v2197
        %2296 = vmatprep.subr.mxu0 0.0
        %2297 = vmatpush1.msra.mxu0 %v2198
        %2298 = vmatprep.subr.mxu0 0.0
        %2299 = vmatpush1.msra.mxu0 %v2199
        %2300 = vmatprep.subr.mxu0 0.0
        %2301 = vmatpush1.msra.mxu0 %v2200
        %2302 = vmatprep.subr.mxu0 0.0
        %2303 = vmatpush1.msra.mxu0 %v2201
        %2304 = vmatprep.subr.mxu0 0.0
        %2305 = vmatpush1.msra.mxu0 %v2202
        %2306 = vmatprep.subr.mxu0 0.0
        %2307 = vmatpush1.msra.mxu0 %v2203
        %2308 = vmatprep.subr.mxu0 0.0
        %2309 = vmatpush1.msra.mxu0 %v2204
        %2310 = vmatprep.subr.mxu0 0.0
        %2311 = vmatpush1.msra.mxu0 %v2205
        %2312 = vmatprep.subr.mxu0 0.0
        %2313 = vmatpush1.msra.mxu0 %v2206
        %2314 = vmatprep.subr.mxu0 0.0
        %2315 = vmatpush1.msra.mxu0 %v2207
        %2316 = vmatprep.subr.mxu0 0.0
        %2317 = vmatpush1.msra.mxu0 %v2208
        %2318 = vmatprep.subr.mxu0 0.0
        %2319 = vmatpush1.msra.mxu0 0.0
        %2320 = vmatprep.subr.mxu0 0.0
        %2321 = vmatpush1.msra.mxu0 0.0
        %2322 = vmatprep.subr.mxu0 0.0
        %2323 = vmatpush1.msra.mxu0 0.0
        %2324 = vmatprep.subr.mxu0 0.0
        %2325 = vmatpush1.msra.mxu0 0.0
        %2326 = vmatprep.subr.mxu0 0.0
        %2327 = vmatpush1.msra.mxu0 0.0
        %2328 = vmatprep.subr.mxu0 0.0
        %2329 = vmatpush1.msra.mxu0 0.0
        %2330 = vmatprep.subr.mxu0 0.0
        %2331 = vmatpush1.msra.mxu0 0.0
        %2332 = vmatprep.subr.mxu0 0.0
        %2333 = vmatpush1.msra.mxu0 0.0
        %2334 = vmatprep.subr.mxu0 0.0
        %2335 = vmatpush1.msra.mxu0 0.0
        %2336 = vmatprep.subr.mxu0 0.0
        %2337 = vmatpush1.msra.mxu0 0.0
        %2338 = vmatprep.subr.mxu0 0.0
        %2339 = vmatpush1.msra.mxu0 0.0
        %2340 = vmatprep.subr.mxu0 0.0
        %2341 = vmatpush1.msra.mxu0 0.0
        %2342 = vmatprep.subr.mxu0 0.0
        %2343 = vmatpush1.msra.mxu0 0.0
        %2344 = vmatprep.subr.mxu0 0.0
        %2345 = vmatpush1.msra.mxu0 0.0
        %2346 = vmatprep.subr.mxu0 0.0
        %2347 = vmatpush1.msra.mxu0 0.0
        %2348 = vmatprep.subr.mxu0 0.0
        %2349 = vmatpush1.msra.mxu0 0.0
        %2350 = vmatprep.subr.mxu0 0.0
        %2351 = vmatpush1.msra.mxu0 0.0
        %2352 = vmatprep.subr.mxu0 0.0
        %2353 = vmatpush1.msra.mxu0 0.0
        %2354 = vmatprep.subr.mxu0 0.0
        %2355 = vmatpush1.msra.mxu0 0.0
        %2356 = vmatprep.subr.mxu0 0.0
        %2357 = vmatpush1.msra.mxu0 0.0
        %2358 = vmatprep.mubr.f32.mxu0 0.0
        %2359 = vmatmul.mubr.f32.gmra.mrb[0].mxu0 %v2211
        %v2360 = vpop.f32.mrb[0].mxu0
        %v2361 = vadd.f32 0.0, %v2360
        %v2362 = vpop.f32.mrb[0].mxu0
        %2363 = vmatprep.mubr.f32.mxu0 0.0
        %2364 = vmatmul.mubr.f32.gmra.mrb[0].mxu0 %v2214
        %v2365 = vpop.f32.mrb[0].mxu0
        %v2366 = vadd.f32 0.0, %v2365
        %v2367 = vpop.f32.mrb[0].mxu0
        %2368 = vmatprep.mubr.f32.mxu0 0.0
        %2369 = vmatmul.mubr.f32.gmra.mrb[0].mxu0 %v2217
        %v2370 = vpop.f32.mrb[0].mxu0
        %v2371 = vadd.f32 0.0, %v2370
        %v2372 = vpop.f32.mrb[0].mxu0
        %2373 = vmatprep.mubr.f32.mxu0 0.0
        %2374 = vmatmul.mubr.f32.gmra.mrb[0].mxu0 %v2220
        %v2375 = vpop.f32.mrb[0].mxu0
        %v2376 = vadd.f32 0.0, %v2375
        %v2377 = vpop.f32.mrb[0].mxu0
        %2378 = vmatprep.mubr.f32.mxu0 0.0
        %2379 = vmatmul.mubr.f32.gmra.mrb[0].mxu0 %v2223
        %v2380 = vpop.f32.mrb[0].mxu0
        %v2381 = vadd.f32 0.0, %v2380
        %v2382 = vpop.f32.mrb[0].mxu0
        %2383 = vmatprep.mubr.f32.mxu0 0.0
        %2384 = vmatmul.mubr.f32.gmra.mrb[0].mxu0 %v2226
        %v2385 = vpop.f32.mrb[0].mxu0
        %v2386 = vadd.f32 0.0, %v2385
        %v2387 = vpop.f32.mrb[0].mxu0
        %2388 = vmatprep.mubr.f32.mxu0 0.0
        %2389 = vmatmul.mubr.f32.gmra.mrb[0].mxu0 %v2229
        %v2390 = vpop.f32.mrb[0].mxu0
        %v2391 = vadd.f32 0.0, %v2390
        %v2392 = vpop.f32.mrb[0].mxu0
        %2393 = vmatprep.mubr.f32.mxu0 0.0
        %2394 = vmatmul.mubr.f32.gmra.mrb[0].mxu0 %v2232
        %v2395 = vpop.f32.mrb[0].mxu0
        %v2396 = vadd.f32 0.0, %v2395
        %v2397 = vpop.f32.mrb[0].mxu0
        %2398 = vmatprep.mubr.f32.mxu0 0.0
        %2399 = vmatmul.mubr.f32.gmra.mrb[0].mxu0 %v2235
        %v2400 = vpop.f32.mrb[0].mxu0
        %v2401 = vadd.f32 0.0, %v2400
        %v2402 = vpop.f32.mrb[0].mxu0
        %2403 = vmatprep.mubr.f32.mxu0 0.0
        %2404 = vmatmul.mubr.f32.gmra.mrb[0].mxu0 %v2238
        %v2405 = vpop.f32.mrb[0].mxu0
        %v2406 = vadd.f32 0.0, %v2405
        %v2407 = vpop.f32.mrb[0].mxu0
        %2408 = vmatprep.mubr.f32.mxu0 0.0
        %2409 = vmatmul.mubr.f32.gmra.mrb[0].mxu0 %v2241
        %v2410 = vpop.f32.mrb[0].mxu0
        %v2411 = vadd.f32 0.0, %v2410
        %v2412 = vpop.f32.mrb[0].mxu0
        %2413 = vmatprep.mubr.f32.mxu0 0.0
        %2414 = vmatmul.mubr.f32.gmra.mrb[0].mxu0 %v2244
        %v2415 = vpop.f32.mrb[0].mxu0
        %v2416 = vadd.f32 0.0, %v2415
        %v2417 = vpop.f32.mrb[0].mxu0
        %2418 = vmatprep.mubr.f32.mxu0 0.0
        %2419 = vmatmul.mubr.f32.gmra.mrb[0].mxu0 %v2247
        %v2420 = vpop.f32.mrb[0].mxu0
        %v2421 = vadd.f32 0.0, %v2420
        %v2422 = vpop.f32.mrb[0].mxu0
        %2423 = vmatprep.mubr.f32.mxu0 0.0
        %2424 = vmatmul.mubr.f32.gmra.mrb[0].mxu0 %v2250
        %v2425 = vpop.f32.mrb[0].mxu0
        %v2426 = vadd.f32 0.0, %v2425
        %v2427 = vpop.f32.mrb[0].mxu0
        %2428 = vmatprep.mubr.f32.mxu0 0.0
        %2429 = vmatmul.mubr.f32.gmra.mrb[0].mxu0 %v2253
        %v2430 = vpop.f32.mrb[0].mxu0
        %v2431 = vadd.f32 0.0, %v2430
        %v2432 = vpop.f32.mrb[0].mxu0
        %2433 = vmatprep.mubr.f32.mxu0 0.0
        %2434 = vmatmul.mubr.f32.gmra.mrb[0].mxu0 %v2256
        %v2435 = vpop.f32.mrb[0].mxu0
        %v2436 = vadd.f32 0.0, %v2435
        %v2437 = vpop.f32.mrb[0].mxu0
        %2438 = vmatprep.mubr.f32.mxu0 0.0
        %2439 = vmatmul.mubr.f32.gmra.mrb[0].mxu0 %v2259
        %v2440 = vpop.f32.mrb[0].mxu0
        %v2441 = vadd.f32 0.0, %v2440
        %v2442 = vpop.f32.mrb[0].mxu0
        %2443 = vmatprep.mubr.f32.mxu0 0.0
        %2444 = vmatmul.mubr.f32.gmra.mrb[0].mxu0 %v2262
        %v2445 = vpop.f32.mrb[0].mxu0
        %v2446 = vadd.f32 0.0, %v2445
        %v2447 = vpop.f32.mrb[0].mxu0
        %2448 = vmatprep.mubr.f32.mxu0 0.0
        %2449 = vmatmul.mubr.f32.gmra.mrb[0].mxu0 %v2265
        %v2450 = vpop.f32.mrb[0].mxu0
        %v2451 = vadd.f32 0.0, %v2450
        %v2452 = vpop.f32.mrb[0].mxu0
        %2453 = vmatprep.mubr.f32.mxu0 0.0
        %2454 = vmatmul.mubr.f32.gmra.mrb[0].mxu0 %v2268
        %v2455 = vpop.f32.mrb[0].mxu0
        %v2456 = vadd.f32 0.0, %v2455
        %v2457 = vpop.f32.mrb[0].mxu0
        %2458 = vmatprep.mubr.f32.mxu0 0.0
        %2459 = vmatmul.mubr.f32.gmra.mrb[0].mxu0 %v2271
        %v2460 = vpop.f32.mrb[0].mxu0
        %v2461 = vadd.f32 0.0, %v2460
        %v2462 = vpop.f32.mrb[0].mxu0
        %2463 = vmatprep.mubr.f32.mxu0 0.0
        %2464 = vmatmul.mubr.f32.gmra.mrb[0].mxu0 %v2274
        %v2465 = vpop.f32.mrb[0].mxu0
        %v2466 = vadd.f32 0.0, %v2465
        %v2467 = vpop.f32.mrb[0].mxu0
        %2468 = vmatprep.mubr.f32.mxu0 0.0
        %2469 = vmatmul.mubr.f32.gmra.mrb[0].mxu0 %v2277
        %v2470 = vpop.f32.mrb[0].mxu0
        %v2471 = vadd.f32 0.0, %v2470
        %v2472 = vpop.f32.mrb[0].mxu0
        %2473 = vmatprep.mubr.f32.mxu0 0.0
        %2474 = vmatmul.mubr.f32.gmra.mrb[0].mxu0 %v2280
        %v2475 = vpop.f32.mrb[0].mxu0
        %v2476 = vadd.f32 0.0, %v2475
        %v2477 = vpop.f32.mrb[0].mxu0
        %2478 = vmatprep.mubr.f32.mxu0 0.0
        %2479 = vmatmul.mubr.f32.gmra.mrb[0].mxu0 %v2283
        %v2480 = vpop.f32.mrb[0].mxu0
        %v2481 = vadd.f32 0.0, %v2480
        %v2482 = vpop.f32.mrb[0].mxu0
        %2483 = vmatprep.mubr.f32.mxu0 0.0
        %2484 = vmatmul.mubr.f32.gmra.mrb[0].mxu0 %v2286
        %v2485 = vpop.f32.mrb[0].mxu0
        %v2486 = vadd.f32 0.0, %v2485
        %v2487 = vpop.f32.mrb[0].mxu0
        %2488 = vmatprep.mubr.f32.mxu0 0.0
        %2489 = vmatmul.mubr.f32.gmra.mrb[0].mxu0 %v2289
        %v2490 = vpop.f32.mrb[0].mxu0
        %v2491 = vadd.f32 0.0, %v2490
        %v2492 = vpop.f32.mrb[0].mxu0
        %2493 = vmatprep.mubr.f32.mxu0 0.0
        %2494 = vmatmul.mubr.f32.gmra.mrb[0].mxu0 %v2292
        %v2495 = vpop.f32.mrb[0].mxu0
        %v2496 = vadd.f32 0.0, %v2495
        %v2497 = vpop.f32.mrb[0].mxu0
        %2498 = vdwg.mxu0
        %v2500 = vsel %vm2209, %v1254, 0
        %v2503 = vsel %vm2209, %v1255, 0
        %v2506 = vsel %vm2209, %v1256, 0
        %v2509 = vsel %vm2209, %v1257, 0
        %v2512 = vsel %vm2209, %v1258, 0
        %v2515 = vsel %vm2209, %v1259, 0
        %v2518 = vsel %vm2209, %v1260, 0
        %v2521 = vsel %vm2209, %v1261, 0
        %v2524 = vsel %vm2209, %v1262, 0
        %v2527 = vsel %vm2209, %v1263, 0
        %v2530 = vsel %vm2209, %v1264, 0
        %v2533 = vsel %vm2209, %v1265, 0
        %v2536 = vsel %vm2209, %v1266, 0
        %v2539 = vsel %vm2209, %v1267, 0
        %v2542 = vsel %vm2209, %v1268, 0
        %v2545 = vsel %vm2209, %v1269, 0
        %v2548 = vsel %vm2209, %v1270, 0
        %v2551 = vsel %vm2209, %v1271, 0
        %v2554 = vsel %vm2209, %v1272, 0
        %v2557 = vsel %vm2209, %v1273, 0
        %v2560 = vsel %vm2209, %v1274, 0
        %v2563 = vsel %vm2209, %v1275, 0
        %v2566 = vsel %vm2209, %v1276, 0
        %v2569 = vsel %vm2209, %v1277, 0
        %v2572 = vsel %vm2209, %v1278, 0
        %v2575 = vsel %vm2209, %v1279, 0
        %v2578 = vsel %vm2209, %v1280, 0
        %v2581 = vsel %vm2209, %v1281, 0
        %2583 = vmatprep.subr.mxu0 0.0
        %2584 = vmatpush1.msra.mxu0 %v2184
        %2585 = vmatprep.subr.mxu0 0.0
        %2586 = vmatpush1.msra.mxu0 %v2185
        %2587 = vmatprep.subr.mxu0 0.0
        %2588 = vmatpush1.msra.mxu0 %v2186
        %2589 = vmatprep.subr.mxu0 0.0
        %2590 = vmatpush1.msra.mxu0 %v2187
        %2591 = vmatprep.subr.mxu0 0.0
        %2592 = vmatpush1.msra.mxu0 %v2188
        %2593 = vmatprep.subr.mxu0 0.0
        %2594 = vmatpush1.msra.mxu0 %v2189
        %2595 = vmatprep.subr.mxu0 0.0
        %2596 = vmatpush1.msra.mxu0 %v2190
        %2597 = vmatprep.subr.mxu0 0.0
        %2598 = vmatpush1.msra.mxu0 %v2191
        %2599 = vmatprep.subr.mxu0 0.0
        %2600 = vmatpush1.msra.mxu0 %v2192
        %2601 = vmatprep.subr.mxu0 0.0
        %2602 = vmatpush1.msra.mxu0 %v2193
        %2603 = vmatprep.subr.mxu0 0.0
        %2604 = vmatpush1.msra.mxu0 %v2194
        %2605 = vmatprep.subr.mxu0 0.0
        %2606 = vmatpush1.msra.mxu0 %v2195
        %2607 = vmatprep.subr.mxu0 0.0
        %2608 = vmatpush1.msra.mxu0 0.0
        %2609 = vmatprep.subr.mxu0 0.0
        %2610 = vmatpush1.msra.mxu0 0.0
        %2611 = vmatprep.subr.mxu0 0.0
        %2612 = vmatpush1.msra.mxu0 0.0
        %2613 = vmatprep.subr.mxu0 0.0
        %2614 = vmatpush1.msra.mxu0 0.0
        %2615 = vmatprep.subr.mxu0 0.0
        %2616 = vmatpush1.msra.mxu0 0.0
        %2617 = vmatprep.subr.mxu0 0.0
        %2618 = vmatpush1.msra.mxu0 0.0
        %2619 = vmatprep.subr.mxu0 0.0
        %2620 = vmatpush1.msra.mxu0 0.0
        %2621 = vmatprep.subr.mxu0 0.0
        %2622 = vmatpush1.msra.mxu0 0.0
        %2623 = vmatprep.subr.mxu0 0.0
        %2624 = vmatpush1.msra.mxu0 0.0
        %2625 = vmatprep.subr.mxu0 0.0
        %2626 = vmatpush1.msra.mxu0 0.0
        %2627 = vmatprep.subr.mxu0 0.0
        %2628 = vmatpush1.msra.mxu0 0.0
        %2629 = vmatprep.subr.mxu0 0.0
        %2630 = vmatpush1.msra.mxu0 0.0
        %2631 = vmatprep.subr.mxu0 0.0
        %2632 = vmatpush1.msra.mxu0 0.0
        %2633 = vmatprep.subr.mxu0 0.0
        %2634 = vmatpush1.msra.mxu0 0.0
        %2635 = vmatprep.subr.mxu0 0.0
        %2636 = vmatpush1.msra.mxu0 0.0
        %2637 = vmatprep.subr.mxu0 0.0
        %2638 = vmatpush1.msra.mxu0 0.0
        %2639 = vmatprep.subr.mxu0 0.0
        %2640 = vmatpush1.msra.mxu0 0.0
        %2641 = vmatprep.subr.mxu0 0.0
        %2642 = vmatpush1.msra.mxu0 0.0
        %2643 = vmatprep.subr.mxu0 0.0
        %2644 = vmatpush1.msra.mxu0 0.0
        %2645 = vmatprep.subr.mxu0 0.0
        %2646 = vmatpush1.msra.mxu0 0.0
        %2647 = vmatprep.mubr.f32.mxu0 0.0
        %2648 = vmatmul.mubr.f32.gmra.mrb[0].mxu0 %v2500
        %v2649 = vpop.f32.mrb[0].mxu0
        %v2650 = vadd.f32 %v2361, %v2649
        %v2651 = vpop.f32.mrb[0].mxu0
        %2652 = vmatprep.mubr.f32.mxu0 0.0
        %2653 = vmatmul.mubr.f32.gmra.mrb[0].mxu0 %v2503
        %v2654 = vpop.f32.mrb[0].mxu0
        %v2655 = vadd.f32 %v2366, %v2654
        %v2656 = vpop.f32.mrb[0].mxu0
        %2657 = vmatprep.mubr.f32.mxu0 0.0
        %2658 = vmatmul.mubr.f32.gmra.mrb[0].mxu0 %v2506
        %v2659 = vpop.f32.mrb[0].mxu0
        %v2660 = vadd.f32 %v2371, %v2659
        %v2661 = vpop.f32.mrb[0].mxu0
        %2662 = vmatprep.mubr.f32.mxu0 0.0
        %2663 = vmatmul.mubr.f32.gmra.mrb[0].mxu0 %v2509
        %v2664 = vpop.f32.mrb[0].mxu0
        %v2665 = vadd.f32 %v2376, %v2664
        %v2666 = vpop.f32.mrb[0].mxu0
        %2667 = vmatprep.mubr.f32.mxu0 0.0
        %2668 = vmatmul.mubr.f32.gmra.mrb[0].mxu0 %v2512
        %v2669 = vpop.f32.mrb[0].mxu0
        %v2670 = vadd.f32 %v2381, %v2669
        %v2671 = vpop.f32.mrb[0].mxu0
        %2672 = vmatprep.mubr.f32.mxu0 0.0
        %2673 = vmatmul.mubr.f32.gmra.mrb[0].mxu0 %v2515
        %v2674 = vpop.f32.mrb[0].mxu0
        %v2675 = vadd.f32 %v2386, %v2674
        %v2676 = vpop.f32.mrb[0].mxu0
        %2677 = vmatprep.mubr.f32.mxu0 0.0
        %2678 = vmatmul.mubr.f32.gmra.mrb[0].mxu0 %v2518
        %v2679 = vpop.f32.mrb[0].mxu0
        %v2680 = vadd.f32 %v2391, %v2679
        %v2681 = vpop.f32.mrb[0].mxu0
        %2682 = vmatprep.mubr.f32.mxu0 0.0
        %2683 = vmatmul.mubr.f32.gmra.mrb[0].mxu0 %v2521
        %v2684 = vpop.f32.mrb[0].mxu0
        %v2685 = vadd.f32 %v2396, %v2684
        %v2686 = vpop.f32.mrb[0].mxu0
        %2687 = vmatprep.mubr.f32.mxu0 0.0
        %2688 = vmatmul.mubr.f32.gmra.mrb[0].mxu0 %v2524
        %v2689 = vpop.f32.mrb[0].mxu0
        %v2690 = vadd.f32 %v2401, %v2689
        %v2691 = vpop.f32.mrb[0].mxu0
        %2692 = vmatprep.mubr.f32.mxu0 0.0
        %2693 = vmatmul.mubr.f32.gmra.mrb[0].mxu0 %v2527
        %v2694 = vpop.f32.mrb[0].mxu0
        %v2695 = vadd.f32 %v2406, %v2694
        %v2696 = vpop.f32.mrb[0].mxu0
        %2697 = vmatprep.mubr.f32.mxu0 0.0
        %2698 = vmatmul.mubr.f32.gmra.mrb[0].mxu0 %v2530
        %v2699 = vpop.f32.mrb[0].mxu0
        %v2700 = vadd.f32 %v2411, %v2699
        %v2701 = vpop.f32.mrb[0].mxu0
        %2702 = vmatprep.mubr.f32.mxu0 0.0
        %2703 = vmatmul.mubr.f32.gmra.mrb[0].mxu0 %v2533
        %v2704 = vpop.f32.mrb[0].mxu0
        %v2705 = vadd.f32 %v2416, %v2704
        %v2706 = vpop.f32.mrb[0].mxu0
        %2707 = vmatprep.mubr.f32.mxu0 0.0
        %2708 = vmatmul.mubr.f32.gmra.mrb[0].mxu0 %v2536
        %v2709 = vpop.f32.mrb[0].mxu0
        %v2710 = vadd.f32 %v2421, %v2709
        %v2711 = vpop.f32.mrb[0].mxu0
        %2712 = vmatprep.mubr.f32.mxu0 0.0
        %2713 = vmatmul.mubr.f32.gmra.mrb[0].mxu0 %v2539
        %v2714 = vpop.f32.mrb[0].mxu0
        %v2715 = vadd.f32 %v2426, %v2714
        %v2716 = vpop.f32.mrb[0].mxu0
        %2717 = vmatprep.mubr.f32.mxu0 0.0
        %2718 = vmatmul.mubr.f32.gmra.mrb[0].mxu0 %v2542
        %v2719 = vpop.f32.mrb[0].mxu0
        %v2720 = vadd.f32 %v2431, %v2719
        %v2721 = vpop.f32.mrb[0].mxu0
        %2722 = vmatprep.mubr.f32.mxu0 0.0
        %2723 = vmatmul.mubr.f32.gmra.mrb[0].mxu0 %v2545
        %v2724 = vpop.f32.mrb[0].mxu0
        %v2725 = vadd.f32 %v2436, %v2724
        %v2726 = vpop.f32.mrb[0].mxu0
        %2727 = vmatprep.mubr.f32.mxu0 0.0
        %2728 = vmatmul.mubr.f32.gmra.mrb[0].mxu0 %v2548
        %v2729 = vpop.f32.mrb[0].mxu0
        %v2730 = vadd.f32 %v2441, %v2729
        %v2731 = vpop.f32.mrb[0].mxu0
        %2732 = vmatprep.mubr.f32.mxu0 0.0
        %2733 = vmatmul.mubr.f32.gmra.mrb[0].mxu0 %v2551
        %v2734 = vpop.f32.mrb[0].mxu0
        %v2735 = vadd.f32 %v2446, %v2734
        %v2736 = vpop.f32.mrb[0].mxu0
        %2737 = vmatprep.mubr.f32.mxu0 0.0
        %2738 = vmatmul.mubr.f32.gmra.mrb[0].mxu0 %v2554
        %v2739 = vpop.f32.mrb[0].mxu0
        %v2740 = vadd.f32 %v2451, %v2739
        %v2741 = vpop.f32.mrb[0].mxu0
        %2742 = vmatprep.mubr.f32.mxu0 0.0
        %2743 = vmatmul.mubr.f32.gmra.mrb[0].mxu0 %v2557
        %v2744 = vpop.f32.mrb[0].mxu0
        %v2745 = vadd.f32 %v2456, %v2744
        %v2746 = vpop.f32.mrb[0].mxu0
        %2747 = vmatprep.mubr.f32.mxu0 0.0
        %2748 = vmatmul.mubr.f32.gmra.mrb[0].mxu0 %v2560
        %v2749 = vpop.f32.mrb[0].mxu0
        %v2750 = vadd.f32 %v2461, %v2749
        %v2751 = vpop.f32.mrb[0].mxu0
        %2752 = vmatprep.mubr.f32.mxu0 0.0
        %2753 = vmatmul.mubr.f32.gmra.mrb[0].mxu0 %v2563
        %v2754 = vpop.f32.mrb[0].mxu0
        %v2755 = vadd.f32 %v2466, %v2754
        %v2756 = vpop.f32.mrb[0].mxu0
        %2757 = vmatprep.mubr.f32.mxu0 0.0
        %2758 = vmatmul.mubr.f32.gmra.mrb[0].mxu0 %v2566
        %v2759 = vpop.f32.mrb[0].mxu0
        %v2760 = vadd.f32 %v2471, %v2759
        %v2761 = vpop.f32.mrb[0].mxu0
        %2762 = vmatprep.mubr.f32.mxu0 0.0
        %2763 = vmatmul.mubr.f32.gmra.mrb[0].mxu0 %v2569
        %v2764 = vpop.f32.mrb[0].mxu0
        %v2765 = vadd.f32 %v2476, %v2764
        %v2766 = vpop.f32.mrb[0].mxu0
        %2767 = vmatprep.mubr.f32.mxu0 0.0
        %2768 = vmatmul.mubr.f32.gmra.mrb[0].mxu0 %v2572
        %v2769 = vpop.f32.mrb[0].mxu0
        %v2770 = vadd.f32 %v2481, %v2769
        %v2771 = vpop.f32.mrb[0].mxu0
        %2772 = vmatprep.mubr.f32.mxu0 0.0
        %2773 = vmatmul.mubr.f32.gmra.mrb[0].mxu0 %v2575
        %v2774 = vpop.f32.mrb[0].mxu0
        %v2775 = vadd.f32 %v2486, %v2774
        %v2776 = vpop.f32.mrb[0].mxu0
        %2777 = vmatprep.mubr.f32.mxu0 0.0
        %2778 = vmatmul.mubr.f32.gmra.mrb[0].mxu0 %v2578
        %v2779 = vpop.f32.mrb[0].mxu0
        %v2780 = vadd.f32 %v2491, %v2779
        %v2781 = vpop.f32.mrb[0].mxu0
        %2782 = vmatprep.mubr.f32.mxu0 0.0
        %2783 = vmatmul.mubr.f32.gmra.mrb[0].mxu0 %v2581
        %v2784 = vpop.f32.mrb[0].mxu0
        %v2785 = vadd.f32 %v2496, %v2784
        %v2786 = vpop.f32.mrb[0].mxu0
        %2787 = vdwg.mxu0
        %s2788 = scalar_lea.vmem %s4, 192
        %v2789 = vld [vmem:[%s2788] sm:$0xff]
        %v2790 = vld [vmem:[%s2788 + $0x8] sm:$0xff]
        %v2791 = vld [vmem:[%s2788 + $0x10] sm:$0xff]
        %v2792 = vld [vmem:[%s2788 + $0x18] sm:$0xff]
        %v2793 = vld [vmem:[%s2788 + $0x20] sm:$0xff]
        %v2794 = vld [vmem:[%s2788 + $0x28] sm:$0xff]
        %v2795 = vld [vmem:[%s2788 + $0x30] sm:$0xff]
        %v2796 = vld [vmem:[%s2788 + $0x38] sm:$0xff]
        %v2797 = vld [vmem:[%s2788 + $0x40] sm:$0xff]
        %v2798 = vld [vmem:[%s2788 + $0x48] sm:$0xff]
        %v2799 = vld [vmem:[%s2788 + $0x50] sm:$0xff]
        %v2800 = vld [vmem:[%s2788 + $0x58] sm:$0xff]
        %v2802 = vsel %vm2209, %v2156, 0
        %v2805 = vsel %vm2209, %v2157, 0
        %v2808 = vsel %vm2209, %v2158, 0
        %v2811 = vsel %vm2209, %v2159, 0
        %v2814 = vsel %vm2209, %v2160, 0
        %v2817 = vsel %vm2209, %v2161, 0
        %v2820 = vsel %vm2209, %v2162, 0
        %v2823 = vsel %vm2209, %v2163, 0
        %v2826 = vsel %vm2209, %v2164, 0
        %v2829 = vsel %vm2209, %v2165, 0
        %v2832 = vsel %vm2209, %v2166, 0
        %v2835 = vsel %vm2209, %v2167, 0
        %v2838 = vsel %vm2209, %v2168, 0
        %v2841 = vsel %vm2209, %v2169, 0
        %v2844 = vsel %vm2209, %v2170, 0
        %v2847 = vsel %vm2209, %v2171, 0
        %v2850 = vsel %vm2209, %v2172, 0
        %v2853 = vsel %vm2209, %v2173, 0
        %v2856 = vsel %vm2209, %v2174, 0
        %v2859 = vsel %vm2209, %v2175, 0
        %v2862 = vsel %vm2209, %v2176, 0
        %v2865 = vsel %vm2209, %v2177, 0
        %v2868 = vsel %vm2209, %v2178, 0
        %v2871 = vsel %vm2209, %v2179, 0
        %v2874 = vsel %vm2209, %v2180, 0
        %v2877 = vsel %vm2209, %v2181, 0
        %v2880 = vsel %vm2209, %v2182, 0
        %v2883 = vsel %vm2209, %v2183, 0
        %2885 = vmatprep.subr.mxu0 0.0
        %2886 = vmatpush1.msra.mxu0 %v2789
        %2887 = vmatprep.subr.mxu0 0.0
        %2888 = vmatpush1.msra.mxu0 %v2790
        %2889 = vmatprep.subr.mxu0 0.0
        %2890 = vmatpush1.msra.mxu0 %v2791
        %2891 = vmatprep.subr.mxu0 0.0
        %2892 = vmatpush1.msra.mxu0 %v2792
        %2893 = vmatprep.subr.mxu0 0.0
        %2894 = vmatpush1.msra.mxu0 %v2793
        %2895 = vmatprep.subr.mxu0 0.0
        %2896 = vmatpush1.msra.mxu0 %v2794
        %2897 = vmatprep.subr.mxu0 0.0
        %2898 = vmatpush1.msra.mxu0 %v2795
        %2899 = vmatprep.subr.mxu0 0.0
        %2900 = vmatpush1.msra.mxu0 %v2796
        %2901 = vmatprep.subr.mxu0 0.0
        %2902 = vmatpush1.msra.mxu0 %v2797
        %2903 = vmatprep.subr.mxu0 0.0
        %2904 = vmatpush1.msra.mxu0 %v2798
        %2905 = vmatprep.subr.mxu0 0.0
        %2906 = vmatpush1.msra.mxu0 %v2799
        %2907 = vmatprep.subr.mxu0 0.0
        %2908 = vmatpush1.msra.mxu0 %v2800
        %2909 = vmatprep.subr.mxu0 0.0
        %2910 = vmatpush1.msra.mxu0 0.0
        %2911 = vmatprep.subr.mxu0 0.0
        %2912 = vmatpush1.msra.mxu0 0.0
        %2913 = vmatprep.subr.mxu0 0.0
        %2914 = vmatpush1.msra.mxu0 0.0
        %2915 = vmatprep.subr.mxu0 0.0
        %2916 = vmatpush1.msra.mxu0 0.0
        %2917 = vmatprep.subr.mxu0 0.0
        %2918 = vmatpush1.msra.mxu0 0.0
        %2919 = vmatprep.subr.mxu0 0.0
        %2920 = vmatpush1.msra.mxu0 0.0
        %2921 = vmatprep.subr.mxu0 0.0
        %2922 = vmatpush1.msra.mxu0 0.0
        %2923 = vmatprep.subr.mxu0 0.0
        %2924 = vmatpush1.msra.mxu0 0.0
        %2925 = vmatprep.subr.mxu0 0.0
        %2926 = vmatpush1.msra.mxu0 0.0
        %2927 = vmatprep.subr.mxu0 0.0
        %2928 = vmatpush1.msra.mxu0 0.0
        %2929 = vmatprep.subr.mxu0 0.0
        %2930 = vmatpush1.msra.mxu0 0.0
        %2931 = vmatprep.subr.mxu0 0.0
        %2932 = vmatpush1.msra.mxu0 0.0
        %2933 = vmatprep.subr.mxu0 0.0
        %2934 = vmatpush1.msra.mxu0 0.0
        %2935 = vmatprep.subr.mxu0 0.0
        %2936 = vmatpush1.msra.mxu0 0.0
        %2937 = vmatprep.subr.mxu0 0.0
        %2938 = vmatpush1.msra.mxu0 0.0
        %2939 = vmatprep.subr.mxu0 0.0
        %2940 = vmatpush1.msra.mxu0 0.0
        %2941 = vmatprep.subr.mxu0 0.0
        %2942 = vmatpush1.msra.mxu0 0.0
        %2943 = vmatprep.subr.mxu0 0.0
        %2944 = vmatpush1.msra.mxu0 0.0
        %2945 = vmatprep.subr.mxu0 0.0
        %2946 = vmatpush1.msra.mxu0 0.0
        %2947 = vmatprep.subr.mxu0 0.0
        %2948 = vmatpush1.msra.mxu0 0.0
        %2949 = vmatprep.mubr.f32.mxu0 0.0
        %2950 = vmatmul.mubr.f32.gmra.mrb[0].mxu0 %v2802
        %v2951 = vpop.f32.mrb[0].mxu0
        %v2952 = vadd.f32 0.0, %v2951
        %v2953 = vpop.f32.mrb[0].mxu0
        %2954 = vmatprep.mubr.f32.mxu0 0.0
        %2955 = vmatmul.mubr.f32.gmra.mrb[0].mxu0 %v2805
        %v2956 = vpop.f32.mrb[0].mxu0
        %v2957 = vadd.f32 0.0, %v2956
        %v2958 = vpop.f32.mrb[0].mxu0
        %2959 = vmatprep.mubr.f32.mxu0 0.0
        %2960 = vmatmul.mubr.f32.gmra.mrb[0].mxu0 %v2808
        %v2961 = vpop.f32.mrb[0].mxu0
        %v2962 = vadd.f32 0.0, %v2961
        %v2963 = vpop.f32.mrb[0].mxu0
        %2964 = vmatprep.mubr.f32.mxu0 0.0
        %2965 = vmatmul.mubr.f32.gmra.mrb[0].mxu0 %v2811
        %v2966 = vpop.f32.mrb[0].mxu0
        %v2967 = vadd.f32 0.0, %v2966
        %v2968 = vpop.f32.mrb[0].mxu0
        %2969 = vmatprep.mubr.f32.mxu0 0.0
        %2970 = vmatmul.mubr.f32.gmra.mrb[0].mxu0 %v2814
        %v2971 = vpop.f32.mrb[0].mxu0
        %v2972 = vadd.f32 0.0, %v2971
        %v2973 = vpop.f32.mrb[0].mxu0
        %2974 = vmatprep.mubr.f32.mxu0 0.0
        %2975 = vmatmul.mubr.f32.gmra.mrb[0].mxu0 %v2817
        %v2976 = vpop.f32.mrb[0].mxu0
        %v2977 = vadd.f32 0.0, %v2976
        %v2978 = vpop.f32.mrb[0].mxu0
        %2979 = vmatprep.mubr.f32.mxu0 0.0
        %2980 = vmatmul.mubr.f32.gmra.mrb[0].mxu0 %v2820
        %v2981 = vpop.f32.mrb[0].mxu0
        %v2982 = vadd.f32 0.0, %v2981
        %v2983 = vpop.f32.mrb[0].mxu0
        %2984 = vmatprep.mubr.f32.mxu0 0.0
        %2985 = vmatmul.mubr.f32.gmra.mrb[0].mxu0 %v2823
        %v2986 = vpop.f32.mrb[0].mxu0
        %v2987 = vadd.f32 0.0, %v2986
        %v2988 = vpop.f32.mrb[0].mxu0
        %2989 = vmatprep.mubr.f32.mxu0 0.0
        %2990 = vmatmul.mubr.f32.gmra.mrb[0].mxu0 %v2826
        %v2991 = vpop.f32.mrb[0].mxu0
        %v2992 = vadd.f32 0.0, %v2991
        %v2993 = vpop.f32.mrb[0].mxu0
        %2994 = vmatprep.mubr.f32.mxu0 0.0
        %2995 = vmatmul.mubr.f32.gmra.mrb[0].mxu0 %v2829
        %v2996 = vpop.f32.mrb[0].mxu0
        %v2997 = vadd.f32 0.0, %v2996
        %v2998 = vpop.f32.mrb[0].mxu0
        %2999 = vmatprep.mubr.f32.mxu0 0.0
        %3000 = vmatmul.mubr.f32.gmra.mrb[0].mxu0 %v2832
        %v3001 = vpop.f32.mrb[0].mxu0
        %v3002 = vadd.f32 0.0, %v3001
        %v3003 = vpop.f32.mrb[0].mxu0
        %3004 = vmatprep.mubr.f32.mxu0 0.0
        %3005 = vmatmul.mubr.f32.gmra.mrb[0].mxu0 %v2835
        %v3006 = vpop.f32.mrb[0].mxu0
        %v3007 = vadd.f32 0.0, %v3006
        %v3008 = vpop.f32.mrb[0].mxu0
        %3009 = vmatprep.mubr.f32.mxu0 0.0
        %3010 = vmatmul.mubr.f32.gmra.mrb[0].mxu0 %v2838
        %v3011 = vpop.f32.mrb[0].mxu0
        %v3012 = vadd.f32 0.0, %v3011
        %v3013 = vpop.f32.mrb[0].mxu0
        %3014 = vmatprep.mubr.f32.mxu0 0.0
        %3015 = vmatmul.mubr.f32.gmra.mrb[0].mxu0 %v2841
        %v3016 = vpop.f32.mrb[0].mxu0
        %v3017 = vadd.f32 0.0, %v3016
        %v3018 = vpop.f32.mrb[0].mxu0
        %3019 = vmatprep.mubr.f32.mxu0 0.0
        %3020 = vmatmul.mubr.f32.gmra.mrb[0].mxu0 %v2844
        %v3021 = vpop.f32.mrb[0].mxu0
        %v3022 = vadd.f32 0.0, %v3021
        %v3023 = vpop.f32.mrb[0].mxu0
        %3024 = vmatprep.mubr.f32.mxu0 0.0
        %3025 = vmatmul.mubr.f32.gmra.mrb[0].mxu0 %v2847
        %v3026 = vpop.f32.mrb[0].mxu0
        %v3027 = vadd.f32 0.0, %v3026
        %v3028 = vpop.f32.mrb[0].mxu0
        %3029 = vmatprep.mubr.f32.mxu0 0.0
        %3030 = vmatmul.mubr.f32.gmra.mrb[0].mxu0 %v2850
        %v3031 = vpop.f32.mrb[0].mxu0
        %v3032 = vadd.f32 0.0, %v3031
        %v3033 = vpop.f32.mrb[0].mxu0
        %3034 = vmatprep.mubr.f32.mxu0 0.0
        %3035 = vmatmul.mubr.f32.gmra.mrb[0].mxu0 %v2853
        %v3036 = vpop.f32.mrb[0].mxu0
        %v3037 = vadd.f32 0.0, %v3036
        %v3038 = vpop.f32.mrb[0].mxu0
        %3039 = vmatprep.mubr.f32.mxu0 0.0
        %3040 = vmatmul.mubr.f32.gmra.mrb[0].mxu0 %v2856
        %v3041 = vpop.f32.mrb[0].mxu0
        %v3042 = vadd.f32 0.0, %v3041
        %v3043 = vpop.f32.mrb[0].mxu0
        %3044 = vmatprep.mubr.f32.mxu0 0.0
        %3045 = vmatmul.mubr.f32.gmra.mrb[0].mxu0 %v2859
        %v3046 = vpop.f32.mrb[0].mxu0
        %v3047 = vadd.f32 0.0, %v3046
        %v3048 = vpop.f32.mrb[0].mxu0
        %3049 = vmatprep.mubr.f32.mxu0 0.0
        %3050 = vmatmul.mubr.f32.gmra.mrb[0].mxu0 %v2862
        %v3051 = vpop.f32.mrb[0].mxu0
        %v3052 = vadd.f32 0.0, %v3051
        %v3053 = vpop.f32.mrb[0].mxu0
        %3054 = vmatprep.mubr.f32.mxu0 0.0
        %3055 = vmatmul.mubr.f32.gmra.mrb[0].mxu0 %v2865
        %v3056 = vpop.f32.mrb[0].mxu0
        %v3057 = vadd.f32 0.0, %v3056
        %v3058 = vpop.f32.mrb[0].mxu0
        %3059 = vmatprep.mubr.f32.mxu0 0.0
        %3060 = vmatmul.mubr.f32.gmra.mrb[0].mxu0 %v2868
        %v3061 = vpop.f32.mrb[0].mxu0
        %v3062 = vadd.f32 0.0, %v3061
        %v3063 = vpop.f32.mrb[0].mxu0
        %3064 = vmatprep.mubr.f32.mxu0 0.0
        %3065 = vmatmul.mubr.f32.gmra.mrb[0].mxu0 %v2871
        %v3066 = vpop.f32.mrb[0].mxu0
        %v3067 = vadd.f32 0.0, %v3066
        %v3068 = vpop.f32.mrb[0].mxu0
        %3069 = vmatprep.mubr.f32.mxu0 0.0
        %3070 = vmatmul.mubr.f32.gmra.mrb[0].mxu0 %v2874
        %v3071 = vpop.f32.mrb[0].mxu0
        %v3072 = vadd.f32 0.0, %v3071
        %v3073 = vpop.f32.mrb[0].mxu0
        %3074 = vmatprep.mubr.f32.mxu0 0.0
        %3075 = vmatmul.mubr.f32.gmra.mrb[0].mxu0 %v2877
        %v3076 = vpop.f32.mrb[0].mxu0
        %v3077 = vadd.f32 0.0, %v3076
        %v3078 = vpop.f32.mrb[0].mxu0
        %3079 = vmatprep.mubr.f32.mxu0 0.0
        %3080 = vmatmul.mubr.f32.gmra.mrb[0].mxu0 %v2880
        %v3081 = vpop.f32.mrb[0].mxu0
        %v3082 = vadd.f32 0.0, %v3081
        %v3083 = vpop.f32.mrb[0].mxu0
        %3084 = vmatprep.mubr.f32.mxu0 0.0
        %3085 = vmatmul.mubr.f32.gmra.mrb[0].mxu0 %v2883
        %v3086 = vpop.f32.mrb[0].mxu0
        %v3087 = vadd.f32 0.0, %v3086
        %v3088 = vpop.f32.mrb[0].mxu0
        %3089 = vdwg.mxu0
        %v3090 = vadd.f32 %v2650, %v2952
        %v3091 = vadd.f32 %v2655, %v2957
        %v3092 = vadd.f32 %v2660, %v2962
        %v3093 = vadd.f32 %v2665, %v2967
        %v3094 = vadd.f32 %v2670, %v2972
        %v3095 = vadd.f32 %v2675, %v2977
        %v3096 = vadd.f32 %v2680, %v2982
        %v3097 = vadd.f32 %v2685, %v2987
        %v3098 = vadd.f32 %v2690, %v2992
        %v3099 = vadd.f32 %v2695, %v2997
        %v3100 = vadd.f32 %v2700, %v3002
        %v3101 = vadd.f32 %v2705, %v3007
        %v3102 = vadd.f32 %v2710, %v3012
        %v3103 = vadd.f32 %v2715, %v3017
        %v3104 = vadd.f32 %v2720, %v3022
        %v3105 = vadd.f32 %v2725, %v3027
        %v3106 = vadd.f32 %v2730, %v3032
        %v3107 = vadd.f32 %v2735, %v3037
        %v3108 = vadd.f32 %v2740, %v3042
        %v3109 = vadd.f32 %v2745, %v3047
        %v3110 = vadd.f32 %v2750, %v3052
        %v3111 = vadd.f32 %v2755, %v3057
        %v3112 = vadd.f32 %v2760, %v3062
        %v3113 = vadd.f32 %v2765, %v3067
        %v3114 = vadd.f32 %v2770, %v3072
        %v3115 = vadd.f32 %v2775, %v3077
        %v3116 = vadd.f32 %v2780, %v3082
        %v3117 = vadd.f32 %v2785, %v3087
        %v3118 = vld [vmem:[%s5] sm:$0x1]
        %v3120 = vlaneseq
        %v3121 = vshrl.u32 %v3120, 7
        %v3122 = vsub.s32 0, %v3121
        %v3123 = vrot.slane %v3118, %v3122
        %v3125 = vmul.f32 %v3090, %v3123
        %v3126 = vmul.f32 %v3091, %v3123
        %v3127 = vmul.f32 %v3092, %v3123
        %v3128 = vmul.f32 %v3093, %v3123
        %v3129 = vmul.f32 %v3094, %v3123
        %v3130 = vmul.f32 %v3095, %v3123
        %v3131 = vmul.f32 %v3096, %v3123
        %v3132 = vmul.f32 %v3097, %v3123
        %v3133 = vmul.f32 %v3098, %v3123
        %v3134 = vmul.f32 %v3099, %v3123
        %v3135 = vmul.f32 %v3100, %v3123
        %v3136 = vmul.f32 %v3101, %v3123
        %v3137 = vmul.f32 %v3102, %v3123
        %v3138 = vmul.f32 %v3103, %v3123
        %v3139 = vmul.f32 %v3104, %v3123
        %v3140 = vmul.f32 %v3105, %v3123
        %v3141 = vmul.f32 %v3106, %v3123
        %v3142 = vmul.f32 %v3107, %v3123
        %v3143 = vmul.f32 %v3108, %v3123
        %v3144 = vmul.f32 %v3109, %v3123
        %v3145 = vmul.f32 %v3110, %v3123
        %v3146 = vmul.f32 %v3111, %v3123
        %v3147 = vmul.f32 %v3112, %v3123
        %v3148 = vmul.f32 %v3113, %v3123
        %v3149 = vmul.f32 %v3114, %v3123
        %v3150 = vmul.f32 %v3115, %v3123
        %v3151 = vmul.f32 %v3116, %v3123
        %v3152 = vmul.f32 %v3117, %v3123
        %v3153 = vld [vmem:[%s6] sm:$0x1]
        %v3155 = vlaneseq
        %v3156 = vshrl.u32 %v3155, 7
        %v3157 = vsub.s32 0, %v3156
        %v3158 = vrot.slane %v3153, %v3157
        %v3160 = vadd.f32 %v3125, %v3158
        %v3161 = vadd.f32 %v3126, %v3158
        %v3162 = vadd.f32 %v3127, %v3158
        %v3163 = vadd.f32 %v3128, %v3158
        %v3164 = vadd.f32 %v3129, %v3158
        %v3165 = vadd.f32 %v3130, %v3158
        %v3166 = vadd.f32 %v3131, %v3158
        %v3167 = vadd.f32 %v3132, %v3158
        %v3168 = vadd.f32 %v3133, %v3158
        %v3169 = vadd.f32 %v3134, %v3158
        %v3170 = vadd.f32 %v3135, %v3158
        %v3171 = vadd.f32 %v3136, %v3158
        %v3172 = vadd.f32 %v3137, %v3158
        %v3173 = vadd.f32 %v3138, %v3158
        %v3174 = vadd.f32 %v3139, %v3158
        %v3175 = vadd.f32 %v3140, %v3158
        %v3176 = vadd.f32 %v3141, %v3158
        %v3177 = vadd.f32 %v3142, %v3158
        %v3178 = vadd.f32 %v3143, %v3158
        %v3179 = vadd.f32 %v3144, %v3158
        %v3180 = vadd.f32 %v3145, %v3158
        %v3181 = vadd.f32 %v3146, %v3158
        %v3182 = vadd.f32 %v3147, %v3158
        %v3183 = vadd.f32 %v3148, %v3158
        %v3184 = vadd.f32 %v3149, %v3158
        %v3185 = vadd.f32 %v3150, %v3158
        %v3186 = vadd.f32 %v3151, %v3158
        %v3187 = vadd.f32 %v3152, %v3158
        %v3188 = vmax.f32 %v3160, 0.0
        %v3189 = vmax.f32 %v3161, 0.0
        %v3190 = vmax.f32 %v3162, 0.0
        %v3191 = vmax.f32 %v3163, 0.0
        %v3192 = vmax.f32 %v3164, 0.0
        %v3193 = vmax.f32 %v3165, 0.0
        %v3194 = vmax.f32 %v3166, 0.0
        %v3195 = vmax.f32 %v3167, 0.0
        %v3196 = vmax.f32 %v3168, 0.0
        %v3197 = vmax.f32 %v3169, 0.0
        %v3198 = vmax.f32 %v3170, 0.0
        %v3199 = vmax.f32 %v3171, 0.0
        %v3200 = vmax.f32 %v3172, 0.0
        %v3201 = vmax.f32 %v3173, 0.0
        %v3202 = vmax.f32 %v3174, 0.0
        %v3203 = vmax.f32 %v3175, 0.0
        %v3204 = vmax.f32 %v3176, 0.0
        %v3205 = vmax.f32 %v3177, 0.0
        %v3206 = vmax.f32 %v3178, 0.0
        %v3207 = vmax.f32 %v3179, 0.0
        %v3208 = vmax.f32 %v3180, 0.0
        %v3209 = vmax.f32 %v3181, 0.0
        %v3210 = vmax.f32 %v3182, 0.0
        %v3211 = vmax.f32 %v3183, 0.0
        %v3212 = vmax.f32 %v3184, 0.0
        %v3213 = vmax.f32 %v3185, 0.0
        %v3214 = vmax.f32 %v3186, 0.0
        %v3215 = vmax.f32 %v3187, 0.0
        %3216 = vst.msk [vmem:[%s322] sm:$0xff] %vm1253, %v3188
        %vm3217 = vcmask 521216
        %3218 = vst.msk [vmem:[%s322 + $0x8] sm:$0x3f] %vm3217, %v3189
        %3219 = vst.msk [vmem:[%s322 + $0x10] sm:$0xff] %vm1253, %v3190
        %3220 = vst.msk [vmem:[%s322 + $0x18] sm:$0x3f] %vm3217, %v3191
        %3221 = vst.msk [vmem:[%s322 + $0x20] sm:$0xff] %vm1253, %v3192
        %3222 = vst.msk [vmem:[%s322 + $0x28] sm:$0x3f] %vm3217, %v3193
        %3223 = vst.msk [vmem:[%s322 + $0x30] sm:$0xff] %vm1253, %v3194
        %3224 = vst.msk [vmem:[%s322 + $0x38] sm:$0x3f] %vm3217, %v3195
        %3225 = vst.msk [vmem:[%s322 + $0x40] sm:$0xff] %vm1253, %v3196
        %3226 = vst.msk [vmem:[%s322 + $0x48] sm:$0x3f] %vm3217, %v3197
        %3227 = vst.msk [vmem:[%s322 + $0x50] sm:$0xff] %vm1253, %v3198
        %3228 = vst.msk [vmem:[%s322 + $0x58] sm:$0x3f] %vm3217, %v3199
        %3229 = vst.msk [vmem:[%s322 + $0x60] sm:$0xff] %vm1253, %v3200
        %3230 = vst.msk [vmem:[%s322 + $0x68] sm:$0x3f] %vm3217, %v3201
        %3231 = vst.msk [vmem:[%s322 + $0x70] sm:$0xff] %vm1253, %v3202
        %3232 = vst.msk [vmem:[%s322 + $0x78] sm:$0x3f] %vm3217, %v3203
        %3233 = vst.msk [vmem:[%s322 + $0x80] sm:$0xff] %vm1253, %v3204
        %3234 = vst.msk [vmem:[%s322 + $0x88] sm:$0x3f] %vm3217, %v3205
        %3235 = vst.msk [vmem:[%s322 + $0x90] sm:$0xff] %vm1253, %v3206
        %3236 = vst.msk [vmem:[%s322 + $0x98] sm:$0x3f] %vm3217, %v3207
        %3237 = vst.msk [vmem:[%s322 + $0xa0] sm:$0xff] %vm1253, %v3208
        %3238 = vst.msk [vmem:[%s322 + $0xa8] sm:$0x3f] %vm3217, %v3209
        %3239 = vst.msk [vmem:[%s322 + $0xb0] sm:$0xff] %vm1253, %v3210
        %3240 = vst.msk [vmem:[%s322 + $0xb8] sm:$0x3f] %vm3217, %v3211
        %3241 = vst.msk [vmem:[%s322 + $0xc0] sm:$0xff] %vm1253, %v3212
        %3242 = vst.msk [vmem:[%s322 + $0xc8] sm:$0x3f] %vm3217, %v3213
        %3243 = vst.msk [vmem:[%s322 + $0xd0] sm:$0xff] %vm1253, %v3214
        %3244 = vst.msk [vmem:[%s322 + $0xd8] sm:$0x3f] %vm3217, %v3215
        %s3245 = smul.u32 14, %s26
        %p3246 = scmp.lt.s32.totalorder %s25, 1
        %s3247 = scalar_select %p3246, %s25, 1
        %p3248 = scmp.lt.s32.totalorder %s3245, 13
        %s3249 = scalar_select %p3248, %s3245, 13
        %s3250 = smul.addr %s3249, 2
        %s3251 = smul.addr %s3247, 28
        %s3252 = sadd.s32 %s3250, %s3251
        %s3253 = smul.addr %s3252, 8
        %s3254 = scalar_lea.vmem %s7, %s3253
        // Predicated region
        $region57: #{tpu_custom_call.1} parent=47 // pred_check
          %p3255 = pneg %p205
        $region58: #{tpu_custom_call.1} parent=47 // pred_check_branch
          %3257 = sbr.rel (%p3255) target = $region60
        $region59: #{tpu_custom_call.1} parent=47 // pred_region
          %s3258 = smul.u32 14, %s26
        $region60: #{tpu_custom_call.1} parent=47 // pred_fallthru
          _
      $region48: #{tpu_custom_call.1} parent=5 // pred_fallthru
        _
      %p3259 = scmp.le.s32.totalorder 2, %s16
      // Predicated region
      $region61: #{tpu_custom_call.1} parent=5 // pred_check
        %p3260 = pneg %p3259
      $region62: #{tpu_custom_call.1} parent=5 // pred_check_branch
        %3262 = sbr.rel (%p3260) target = $region64
      $region63: #{tpu_custom_call.1} parent=5 // pred_region
        %s3263 = ssub.s32 %s16, 2
        // Predicated region
        $region65: #{tpu_custom_call.1} parent=63 // pred_check
          %p3264 = pneg %p211
        $region66: #{tpu_custom_call.1} parent=63 // pred_check_branch
          %3266 = sbr.rel (%p3264) target = $region68
        $region67: #{tpu_custom_call.1} parent=63 // pred_region
          %s3267 = smul.u32 14, %s28
          %p3268 = scmp.lt.s32.totalorder %s27, 1
          %s3269 = scalar_select %p3268, %s27, 1
          %p3270 = scmp.lt.s32.totalorder %s3267, 13
          %s3271 = scalar_select %p3270, %s3267, 13
          %s3272 = smul.addr %s3271, 2
          %s3273 = smul.addr %s3269, 28
          %s3274 = sadd.s32 %s3272, %s3273
          %s3275 = smul.addr %s3274, 8
          %s3276 = scalar_lea.vmem %s7, %s3275
        $region68: #{tpu_custom_call.1} parent=63 // pred_fallthru
          _
      $region64: #{tpu_custom_call.1} parent=5 // pred_fallthru
        _
    $region6: #{tpu_custom_call.1} parent=1 // loop_footer
      %s20 = sadd.s32 1, %s16
    $region7: #{tpu_custom_call.1} parent=1 // loop_footer_branch
      %15 = sbr.rel target = $region3
    $region8: #{tpu_custom_call.1} parent=1 // loop_exit
      _
    %3277 = vsyncpa [#allocation4], 1
    %s3278 = scalar_lea.sflag [#allocation4], 1
    %3279 = vsyncpa %s3278, 1

</llo_original>
